<compile_context>
chip_gen: v7x
topology: tpu7x:2x2x1
jax: 0.10.0
libtpu: 0.0.40
codegen_flags: <defaults>
</compile_context>

<pallas_src>
import functools

import jax
import jax.numpy as jnp
from jax import lax
from jax.experimental import pallas as pl
from jax.experimental.pallas import tpu as pltpu


# ----------------------------------------------------------------------------
# Pallas kernel: one grid step == T_CHUNK timesteps of the recurrence.
# ----------------------------------------------------------------------------
def fwm_rnn_kernel(
    # inputs
    x_ref,        # (T, B, I)       chunk of timesteps
    h0_ref,       # (B, H)
    c0_ref,       # (B, H)
    F0_ref,       # (B, V, K)
    wlstm_ref,    # (I+H, 4H)       stacked [wih_T ; whh_T]
    blstm_ref,    # (1, 4H)         b_ih + b_hh
    wfwm_ref,     # (H, 2K+V+2)     [wk_T | wv_T | wb_T | wq_T | wm_T]
    bfwm_ref,     # (1, 2K+V+2)
    wlin_ref,     # (V, H)
    blin_ref,     # (1, H)
    # outputs
    out_ref,      # (T, B, 2H)
    h_ref,        # (B, H)     -- doubles as recurrent state (constant block index)
    c_ref,        # (B, H)
    F_ref,        # (B, V, K)
):
    step = pl.program_id(0)
    T = x_ref.shape[0]
    B, H = h0_ref.shape
    V, K = F0_ref.shape[1], F0_ref.shape[2]

    @pl.when(step == 0)
    def _init():
        h_ref[...] = h0_ref[...]
        c_ref[...] = c0_ref[...]
        F_ref[...] = F0_ref[...]

    # Load weights once per grid step (VMEM -> vregs).
    w_lstm = wlstm_ref[...]
    b_lstm = blstm_ref[...]
    w_fwm = wfwm_ref[...]
    b_fwm = bfwm_ref[...]
    w_lin = wlin_ref[...]
    b_lin = blin_ref[...]

    def elu_plus_one(v):
        # F.elu(v, 1.0) + 1  ==  v+1 if v>0 else exp(v)
        return jnp.where(v > 0, v + 1.0, jnp.exp(v))

    def body(i, carry):
        h_prev, c_prev, F = carry
        x_t = x_ref[i]                                             # (B, I)

        # ---- LSTM cell (PyTorch gate order i, f, g, o), single fused matmul ----
        xh = jnp.concatenate([x_t, h_prev], axis=-1)               # (B, I+H)
        gates = (
            jnp.dot(xh, w_lstm, preferred_element_type=jnp.float32) + b_lstm
        )                                                          # (B, 4H)
        i_g = jax.nn.sigmoid(gates[:, 0 * H:1 * H])
        f_g = jax.nn.sigmoid(gates[:, 1 * H:2 * H])
        g_g = jnp.tanh(gates[:, 2 * H:3 * H])
        o_g = jax.nn.sigmoid(gates[:, 3 * H:4 * H])
        c_t = f_g * c_prev + i_g * g_g
        h_t = o_g * jnp.tanh(c_t)

        # ---- fused FWM projections: one matmul, then static lane slices ----
        proj = (
            jnp.dot(h_t, w_fwm, preferred_element_type=jnp.float32) + b_fwm
        )                                                          # (B, 2K+V+2)
        ks = elu_plus_one(proj[:, 0:K])                            # (B, K)
        vs = proj[:, K:K + V]                                      # (B, V)
        bs = jax.nn.sigmoid(proj[:, K + V:K + V + 1])              # (B, 1)
        qs = elu_plus_one(proj[:, K + V + 1:K + V + 1 + K])        # (B, K)
        ms = jax.nn.sigmoid(proj[:, 2 * K + V + 1:2 * K + V + 2])  # (B, 1)

        ks = ks * pl.reciprocal(jnp.sum(ks, axis=-1, keepdims=True), approx=False)
        qs = qs * pl.reciprocal(jnp.sum(qs, axis=-1, keepdims=True), approx=False)

        # ---- FWM write ----
        vs_old = jnp.sum(F * ks[:, None, :], axis=-1)              # einsum('bij,bj->bi')
        new_v = bs * (vs - vs_old)                                 # (B, V)
        F = F + new_v[:, :, None] * ks[:, None, :]                 # einsum('bi,bj->bij')

        # ---- FWM read ----
        o_t = jnp.sum(F * (ms * qs)[:, None, :], axis=-1)          # (B, V)

        # ---- output projection + concat ----
        lin = jnp.dot(o_t, w_lin, preferred_element_type=jnp.float32) + b_lin  # (B, H)
        out_ref[i] = jnp.concatenate([h_t, lin], axis=-1).astype(out_ref.dtype)

        return h_t, c_t, F

    h_in, c_in, F_in = h_ref[...], c_ref[...], F_ref[...]
    h_out, c_out, F_out = lax.fori_loop(0, T, body, (h_in, c_in, F_in), unroll=True)

    # Write the carried state back once per chunk (the same refs are the final outputs).
    h_ref[...] = h_out
    c_ref[...] = c_out
    F_ref[...] = F_out


# ----------------------------------------------------------------------------
# Wrapper
# ----------------------------------------------------------------------------
def _const_spec(shape):
    nd = len(shape)
    return pl.BlockSpec(shape, lambda s, _nd=nd: (0,) * _nd)


@functools.partial(jax.jit, static_argnames=("t_chunk",))
def fwm_rnn_forward(x, h0, c0, F0, params, *, t_chunk=4):
    seq, B, I = x.shape
    H = h0.shape[-1]
    V, K = F0.shape[1], F0.shape[2]
    assert seq % t_chunk == 0, "seq must be divisible by t_chunk"
    n_chunks = seq // t_chunk

    w_lstm = params["w_lstm"]   # (I+H, 4H)
    b_lstm = params["b_lstm"]   # (1, 4H)
    w_fwm = params["w_fwm"]     # (H, 2K+V+2)
    b_fwm = params["b_fwm"]     # (1, 2K+V+2)
    w_lin = params["wlin_T"]    # (V, H)
    b_lin = params["blin"]      # (1, H)

    in_specs = [
        pl.BlockSpec((t_chunk, B, I), lambda s: (s, 0, 0)),  # x: one time-chunk per step
        _const_spec((B, H)),                                 # h0
        _const_spec((B, H)),                                 # c0
        _const_spec((B, V, K)),                              # F0
        _const_spec(w_lstm.shape),
        _const_spec(b_lstm.shape),
        _const_spec(w_fwm.shape),
        _const_spec(b_fwm.shape),
        _const_spec(w_lin.shape),
        _const_spec(b_lin.shape),
    ]

    out_shape = (
        jax.ShapeDtypeStruct((seq, B, 2 * H), jnp.float32),  # output
        jax.ShapeDtypeStruct((B, H), jnp.float32),           # h_N (also running state)
        jax.ShapeDtypeStruct((B, H), jnp.float32),           # c_N
        jax.ShapeDtypeStruct((B, V, K), jnp.float32),        # F_N
    )
    out_specs = (
        pl.BlockSpec((t_chunk, B, 2 * H), lambda s: (s, 0, 0)),
        _const_spec((B, H)),
        _const_spec((B, H)),
        _const_spec((B, V, K)),
    )

    grid_spec = pltpu.PrefetchScalarGridSpec(
        num_scalar_prefetch=0,
        grid=(n_chunks,),
        in_specs=in_specs,
        out_specs=out_specs,
        scratch_shapes=[],
    )

    return pl.pallas_call(
        fwm_rnn_kernel,
        out_shape=out_shape,
        grid_spec=grid_spec,
        compiler_params=pltpu.CompilerParams(
            dimension_semantics=("arbitrary",),   # sequential recurrence over time-chunks
        ),
    )(x, h0, c0, F0, w_lstm, b_lstm, w_fwm, b_fwm, w_lin, b_lin)


# ----------------------------------------------------------------------------
# Parameter packing: fuse LSTM gate weights and the 5 FWM projections.
# ----------------------------------------------------------------------------
def pack_params(p):
    return {
        "w_lstm": jnp.concatenate([p["wih_T"], p["whh_T"]], axis=0),   # (I+H, 4H)
        "b_lstm": p["b_lstm"],                                         # (1, 4H)
        "w_fwm": jnp.concatenate(
            [p["wk_T"], p["wv_T"], p["wb_T"], p["wq_T"], p["wm_T"]], axis=1
        ),                                                             # (H, 2K+V+2)
        "b_fwm": jnp.concatenate(
            [p["bk"], p["bv"], p["bb"], p["bq"], p["bm"]], axis=1
        ),                                                             # (1, 2K+V+2)
        "wlin_T": p["wlin_T"],
        "blin": p["blin"],
    }


# ----------------------------------------------------------------------------
# Pure-JAX reference (mirrors the PyTorch forward) for correctness check.
# ----------------------------------------------------------------------------
def fwm_rnn_reference(x, h0, c0, F0, p):
    H = h0.shape[-1]

    def elu_plus_one(v):
        return jnp.where(v > 0, v + 1.0, jnp.exp(v))

    def step(carry, x_t):
        h, c, F = carry
        gates = x_t @ p["wih_T"] + h @ p["whh_T"] + p["b_lstm"][0]
        i_g = jax.nn.sigmoid(gates[:, 0 * H:1 * H])
        f_g = jax.nn.sigmoid(gates[:, 1 * H:2 * H])
        g_g = jnp.tanh(gates[:, 2 * H:3 * H])
        o_g = jax.nn.sigmoid(gates[:, 3 * H:4 * H])
        c_t = f_g * c + i_g * g_g
        h_t = o_g * jnp.tanh(c_t)

        ks = elu_plus_one(h_t @ p["wk_T"] + p["bk"][0])
        ks = ks / jnp.sum(ks, -1, keepdims=True)
        vs = h_t @ p["wv_T"] + p["bv"][0]
        bs = jax.nn.sigmoid(h_t @ p["wb_T"] + p["bb"][0])
        vs_old = jnp.einsum("bij,bj->bi", F, ks)
        new_v = bs * (vs - vs_old)
        F = F + jnp.einsum("bi,bj->bij", new_v, ks)

        qs = elu_plus_one(h_t @ p["wq_T"] + p["bq"][0])
        qs = qs / jnp.sum(qs, -1, keepdims=True)
        ms = jax.nn.sigmoid(h_t @ p["wm_T"] + p["bm"][0])
        o_t = jnp.einsum("bij,bj->bi", F, ms * qs)

        lin = o_t @ p["wlin_T"] + p["blin"][0]
        out_t = jnp.concatenate([h_t, lin], axis=-1)
        return (h_t, c_t, F), out_t

    (hN, cN, FN), outs = lax.scan(step, (h0, c0, F0), x)
    return outs, hN, cN, FN


# ----------------------------------------------------------------------------
# Deterministic parameter init (synthetic; shapes follow the PyTorch module).
# ----------------------------------------------------------------------------
def init_params(key, isize, hsize, k_size, v_size):
    q_size = k_size

    def xavier(key, out_f, in_f):
        std = (2.0 / (in_f + out_f)) ** 0.5
        return std * jax.random.normal(key, (out_f, in_f), jnp.float32)

    def uniform(key, shape, bound):
        return jax.random.uniform(key, shape, jnp.float32, -bound, bound)

    keys = jax.random.split(key, 16)
    bound = 1.0 / (hsize ** 0.5)

    # LSTM (PyTorch default uniform init), stored pre-transposed for the kernel.
    w_ih = uniform(keys[0], (4 * hsize, isize), bound)
    w_hh = uniform(keys[1], (4 * hsize, hsize), bound)
    b_ih = uniform(keys[2], (4 * hsize,), bound)
    b_hh = uniform(keys[3], (4 * hsize,), bound)

    # FWM linears (xavier_normal_ weights, default uniform biases).
    W_k = xavier(keys[4], k_size, hsize)
    W_v = xavier(keys[5], v_size, hsize)
    W_b = xavier(keys[6], 1, hsize)
    W_q = xavier(keys[7], q_size, hsize)
    W_m = xavier(keys[8], 1, hsize)
    b_k = uniform(keys[9], (k_size,), bound)
    b_v = uniform(keys[10], (v_size,), bound)
    b_b = uniform(keys[11], (1,), bound)
    b_q = uniform(keys[12], (q_size,), bound)
    b_m = uniform(keys[13], (1,), bound)

    # output linear: v_size -> hsize
    W_lin = uniform(keys[14], (hsize, v_size), 1.0 / (v_size ** 0.5))
    b_lin = uniform(keys[15], (hsize,), 1.0 / (v_size ** 0.5))

    return {
        "wih_T": w_ih.T,                         # (I, 4H)
        "whh_T": w_hh.T,                         # (H, 4H)
        "b_lstm": (b_ih + b_hh)[None, :],        # (1, 4H)
        "wk_T": W_k.T, "bk": b_k[None, :],
        "wv_T": W_v.T, "bv": b_v[None, :],
        "wb_T": W_b.T, "bb": b_b[None, :],
        "wq_T": W_q.T, "bq": b_q[None, :],
        "wm_T": W_m.T, "bm": b_m[None, :],
        "wlin_T": W_lin.T, "blin": b_lin[None, :],
    }


if __name__ == "__main__":
    # Small shapes consistent with the module's forward.
    SEQ, B, ISIZE, HSIZE, KSIZE, VSIZE = 8, 2, 8, 32, 16, 16
    T_CHUNK = 4   # 2 grid steps -> exercises cross-chunk state carry

    key = jax.random.PRNGKey(0)
    k_x, k_h, k_c, k_p = jax.random.split(key, 4)

    x = jax.random.normal(k_x, (SEQ, B, ISIZE), jnp.float32)
    h0 = jax.random.normal(k_h, (B, HSIZE), jnp.float32) * 0.1
    c0 = jax.random.normal(k_c, (B, HSIZE), jnp.float32) * 0.1
    F0 = jnp.zeros((B, VSIZE, KSIZE), jnp.float32)

    raw_params = init_params(k_p, ISIZE, HSIZE, KSIZE, VSIZE)
    packed_params = pack_params(raw_params)

    out, hN, cN, FN = fwm_rnn_forward(x, h0, c0, F0, packed_params, t_chunk=T_CHUNK)
    jax.block_until_ready((out, hN, cN, FN))

    # Correctness check against a pure-JAX reference of the PyTorch semantics.
    out_r, hN_r, cN_r, FN_r = fwm_rnn_reference(x, h0, c0, F0, raw_params)
    assert jnp.allclose(out, out_r, rtol=1e-4, atol=1e-4), "output mismatch"
    assert jnp.allclose(hN, hN_r, rtol=1e-4, atol=1e-4), "h_N mismatch"
    assert jnp.allclose(cN, cN_r, rtol=1e-4, atol=1e-4), "c_N mismatch"
    assert jnp.allclose(FN, FN_r, rtol=1e-4, atol=1e-4), "F_N mismatch"

    print("KERNEL_OK")
</pallas_src>

<mosaic_0001>
module attributes {stable_mosaic.version = 11 : i64} {
  func.func @fwm_rnn_kernel(%arg0: i32, %arg1: memref<4x2x8xf32, #tpu.memory_space<vmem>>, %arg2: memref<2x32xf32, #tpu.memory_space<vmem>>, %arg3: memref<2x32xf32, #tpu.memory_space<vmem>>, %arg4: memref<2x16x16xf32, #tpu.memory_space<vmem>>, %arg5: memref<40x128xf32, #tpu.memory_space<vmem>>, %arg6: memref<1x128xf32, #tpu.memory_space<vmem>>, %arg7: memref<32x50xf32, #tpu.memory_space<vmem>>, %arg8: memref<1x50xf32, #tpu.memory_space<vmem>>, %arg9: memref<16x32xf32, #tpu.memory_space<vmem>>, %arg10: memref<1x32xf32, #tpu.memory_space<vmem>>, %arg11: memref<4x2x64xf32, #tpu.memory_space<vmem>>, %arg12: memref<2x32xf32, #tpu.memory_space<vmem>>, %arg13: memref<2x32xf32, #tpu.memory_space<vmem>>, %arg14: memref<2x16x16xf32, #tpu.memory_space<vmem>>) attributes {dimension_semantics = [#tpu.dimension_semantics<arbitrary>], iteration_bounds = array<i64: 2>, scalar_prefetch = 0 : i64, scratch_operands = 0 : i64, tpu.core_type = #tpu.core_type<tc>, window_params = [{transform_indices = @transform_0, window_bounds = array<i64: 4, 2, 8>}, {pipeline_mode = #tpu.pipeline_mode<synchronous>, transform_indices = @transform_1, window_bounds = array<i64: 2, 32>}, {pipeline_mode = #tpu.pipeline_mode<synchronous>, transform_indices = @transform_2, window_bounds = array<i64: 2, 32>}, {pipeline_mode = #tpu.pipeline_mode<synchronous>, transform_indices = @transform_3, window_bounds = array<i64: 2, 16, 16>}, {pipeline_mode = #tpu.pipeline_mode<synchronous>, transform_indices = @transform_4, window_bounds = array<i64: 40, 128>}, {pipeline_mode = #tpu.pipeline_mode<synchronous>, transform_indices = @transform_5, window_bounds = array<i64: 1, 128>}, {pipeline_mode = #tpu.pipeline_mode<synchronous>, transform_indices = @transform_6, window_bounds = array<i64: 32, 50>}, {pipeline_mode = #tpu.pipeline_mode<synchronous>, transform_indices = @transform_7, window_bounds = array<i64: 1, 50>}, {pipeline_mode = #tpu.pipeline_mode<synchronous>, transform_indices = @transform_8, window_bounds = array<i64: 16, 32>}, {pipeline_mode = #tpu.pipeline_mode<synchronous>, transform_indices = @transform_9, window_bounds = array<i64: 1, 32>}, {transform_indices = @transform_10, window_bounds = array<i64: 4, 2, 64>}, {pipeline_mode = #tpu.pipeline_mode<synchronous>, transform_indices = @transform_11, window_bounds = array<i64: 2, 32>}, {pipeline_mode = #tpu.pipeline_mode<synchronous>, transform_indices = @transform_12, window_bounds = array<i64: 2, 32>}, {pipeline_mode = #tpu.pipeline_mode<synchronous>, transform_indices = @transform_13, window_bounds = array<i64: 2, 16, 16>}]} {
    %c0_i32 = arith.constant 0 : i32
    %0 = arith.cmpi eq, %arg0, %c0_i32 : i32
    %1 = arith.extui %0 : i1 to i32
    %c0_i32_0 = arith.constant 0 : i32
    %2 = arith.cmpi ne, %1, %c0_i32_0 : i32
    scf.if %2 {
      %c0_106 = arith.constant 0 : index
      %c0_107 = arith.constant 0 : index
      %411 = vector.load %arg2[%c0_106, %c0_107] : memref<2x32xf32, #tpu.memory_space<vmem>>, vector<2x32xf32>
      %c0_108 = arith.constant 0 : index
      %c0_109 = arith.constant 0 : index
      %412 = vector.load %arg12[%c0_108, %c0_109] : memref<2x32xf32, #tpu.memory_space<vmem>>, vector<2x32xf32>
      tpu.vector_store %arg12[%c0_108, %c0_109], %411 {strides = array<i32>} : memref<2x32xf32, #tpu.memory_space<vmem>>, vector<2x32xf32>,
      %c0_110 = arith.constant 0 : index
      %c0_111 = arith.constant 0 : index
      %413 = vector.load %arg3[%c0_110, %c0_111] : memref<2x32xf32, #tpu.memory_space<vmem>>, vector<2x32xf32>
      %c0_112 = arith.constant 0 : index
      %c0_113 = arith.constant 0 : index
      %414 = vector.load %arg13[%c0_112, %c0_113] : memref<2x32xf32, #tpu.memory_space<vmem>>, vector<2x32xf32>
      tpu.vector_store %arg13[%c0_112, %c0_113], %413 {strides = array<i32>} : memref<2x32xf32, #tpu.memory_space<vmem>>, vector<2x32xf32>,
      %c0_114 = arith.constant 0 : index
      %c0_115 = arith.constant 0 : index
      %c0_116 = arith.constant 0 : index
      %415 = vector.load %arg4[%c0_114, %c0_115, %c0_116] : memref<2x16x16xf32, #tpu.memory_space<vmem>>, vector<2x16x16xf32>
      %c0_117 = arith.constant 0 : index
      %c0_118 = arith.constant 0 : index
      %c0_119 = arith.constant 0 : index
      %416 = vector.load %arg14[%c0_117, %c0_118, %c0_119] : memref<2x16x16xf32, #tpu.memory_space<vmem>>, vector<2x16x16xf32>
      tpu.vector_store %arg14[%c0_117, %c0_118, %c0_119], %415 {strides = array<i32>} : memref<2x16x16xf32, #tpu.memory_space<vmem>>, vector<2x16x16xf32>,
    } else {
    }
    %c0 = arith.constant 0 : index
    %c0_1 = arith.constant 0 : index
    %3 = vector.load %arg5[%c0, %c0_1] : memref<40x128xf32, #tpu.memory_space<vmem>>, vector<40x128xf32>
    %c0_2 = arith.constant 0 : index
    %c0_3 = arith.constant 0 : index
    %4 = vector.load %arg6[%c0_2, %c0_3] : memref<1x128xf32, #tpu.memory_space<vmem>>, vector<1x128xf32>
    %c0_4 = arith.constant 0 : index
    %c0_5 = arith.constant 0 : index
    %5 = vector.load %arg7[%c0_4, %c0_5] : memref<32x50xf32, #tpu.memory_space<vmem>>, vector<32x50xf32>
    %c0_6 = arith.constant 0 : index
    %c0_7 = arith.constant 0 : index
    %6 = vector.load %arg8[%c0_6, %c0_7] : memref<1x50xf32, #tpu.memory_space<vmem>>, vector<1x50xf32>
    %c0_8 = arith.constant 0 : index
    %c0_9 = arith.constant 0 : index
    %7 = vector.load %arg9[%c0_8, %c0_9] : memref<16x32xf32, #tpu.memory_space<vmem>>, vector<16x32xf32>
    %c0_10 = arith.constant 0 : index
    %c0_11 = arith.constant 0 : index
    %8 = vector.load %arg10[%c0_10, %c0_11] : memref<1x32xf32, #tpu.memory_space<vmem>>, vector<1x32xf32>
    %c0_12 = arith.constant 0 : index
    %c0_13 = arith.constant 0 : index
    %9 = vector.load %arg12[%c0_12, %c0_13] : memref<2x32xf32, #tpu.memory_space<vmem>>, vector<2x32xf32>
    %c0_14 = arith.constant 0 : index
    %c0_15 = arith.constant 0 : index
    %10 = vector.load %arg13[%c0_14, %c0_15] : memref<2x32xf32, #tpu.memory_space<vmem>>, vector<2x32xf32>
    %c0_16 = arith.constant 0 : index
    %c0_17 = arith.constant 0 : index
    %c0_18 = arith.constant 0 : index
    %11 = vector.load %arg14[%c0_16, %c0_17, %c0_18] : memref<2x16x16xf32, #tpu.memory_space<vmem>>, vector<2x16x16xf32>
    %c0_i32_19 = arith.constant 0 : i32
    %12 = arith.index_cast %c0_i32_19 : i32 to index
    %c0_20 = arith.constant 0 : index
    %c0_21 = arith.constant 0 : index
    %13 = vector.load %arg1[%12, %c0_20, %c0_21] : memref<4x2x8xf32, #tpu.memory_space<vmem>>, vector<1x2x8xf32>
    %14 = vector.shape_cast %13 : vector<1x2x8xf32> to vector<2x8xf32>
    %15 = tpu.concatenate %14, %9 in 1 : vector<2x8xf32>, vector<2x32xf32> -> vector<2x40xf32>
    %cst = arith.constant dense<0.000000e+00> : vector<2x128xf32>
    %16 = tpu.matmul %15, %3, %cst {dimension_numbers = #tpu.dot_dimension_numbers<[1], [0], [0], [1], [0, 0, 1, 1], [], []>} : vector<2x40xf32>, vector<40x128xf32>, vector<2x128xf32> -> vector<2x128xf32>
    %17 = vector.broadcast %4 : vector<1x128xf32> to vector<2x128xf32>
    %18 = arith.addf %16, %17 : vector<2x128xf32>
    %19 = vector.extract_strided_slice %18 {offsets = [0, 0], sizes = [2, 32], strides = [1, 1]} : vector<2x128xf32> to vector<2x32xf32>
    %20 = arith.negf %19 : vector<2x32xf32>
    %21 = math.exp %20 : vector<2x32xf32>
    %cst_22 = arith.constant 1.000000e+00 : f32
    %22 = vector.broadcast %cst_22 : f32 to vector<2x32xf32>
    %23 = arith.addf %22, %21 : vector<2x32xf32>
    %24 = arith.divf %22, %23 : vector<2x32xf32>
    %25 = vector.extract_strided_slice %18 {offsets = [0, 32], sizes = [2, 32], strides = [1, 1]} : vector<2x128xf32> to vector<2x32xf32>
    %26 = arith.negf %25 : vector<2x32xf32>
    %27 = math.exp %26 : vector<2x32xf32>
    %cst_23 = arith.constant 1.000000e+00 : f32
    %28 = vector.broadcast %cst_23 : f32 to vector<2x32xf32>
    %29 = arith.addf %28, %27 : vector<2x32xf32>
    %30 = arith.divf %28, %29 : vector<2x32xf32>
    %31 = vector.extract_strided_slice %18 {offsets = [0, 64], sizes = [2, 32], strides = [1, 1]} : vector<2x128xf32> to vector<2x32xf32>
    %32 = math.tanh %31 : vector<2x32xf32>
    %33 = vector.extract_strided_slice %18 {offsets = [0, 96], sizes = [2, 32], strides = [1, 1]} : vector<2x128xf32> to vector<2x32xf32>
    %34 = arith.negf %33 : vector<2x32xf32>
    %35 = math.exp %34 : vector<2x32xf32>
    %cst_24 = arith.constant 1.000000e+00 : f32
    %36 = vector.broadcast %cst_24 : f32 to vector<2x32xf32>
    %37 = arith.addf %36, %35 : vector<2x32xf32>
    %38 = arith.divf %36, %37 : vector<2x32xf32>
    %39 = arith.mulf %30, %10 : vector<2x32xf32>
    %40 = arith.mulf %24, %32 : vector<2x32xf32>
    %41 = arith.addf %39, %40 : vector<2x32xf32>
    %42 = math.tanh %41 : vector<2x32xf32>
    %43 = arith.mulf %38, %42 : vector<2x32xf32>
    %cst_25 = arith.constant dense<0.000000e+00> : vector<2x50xf32>
    %44 = tpu.matmul %43, %5, %cst_25 {dimension_numbers = #tpu.dot_dimension_numbers<[1], [0], [0], [1], [0, 0, 1, 1], [], []>} : vector<2x32xf32>, vector<32x50xf32>, vector<2x50xf32> -> vector<2x50xf32>
    %45 = vector.broadcast %6 : vector<1x50xf32> to vector<2x50xf32>
    %46 = arith.addf %44, %45 : vector<2x50xf32>
    %47 = vector.extract_strided_slice %46 {offsets = [0, 0], sizes = [2, 16], strides = [1, 1]} : vector<2x50xf32> to vector<2x16xf32>
    %cst_26 = arith.constant 0.000000e+00 : f32
    %48 = vector.broadcast %cst_26 : f32 to vector<2x16xf32>
    %49 = arith.cmpf ogt, %47, %48 : vector<2x16xf32>
    %cst_27 = arith.constant 1.000000e+00 : f32
    %50 = vector.broadcast %cst_27 : f32 to vector<2x16xf32>
    %51 = arith.addf %47, %50 : vector<2x16xf32>
    %52 = math.exp %47 : vector<2x16xf32>
    %53 = arith.select %49, %51, %52 : vector<2x16xi1>, vector<2x16xf32>
    %54 = vector.extract_strided_slice %46 {offsets = [0, 16], sizes = [2, 16], strides = [1, 1]} : vector<2x50xf32> to vector<2x16xf32>
    %55 = vector.extract_strided_slice %46 {offsets = [0, 32], sizes = [2, 1], strides = [1, 1]} : vector<2x50xf32> to vector<2x1xf32>
    %56 = arith.negf %55 : vector<2x1xf32>
    %57 = math.exp %56 : vector<2x1xf32>
    %cst_28 = arith.constant 1.000000e+00 : f32
    %58 = vector.broadcast %cst_28 : f32 to vector<2x1xf32>
    %59 = arith.addf %58, %57 : vector<2x1xf32>
    %60 = arith.divf %58, %59 : vector<2x1xf32>
    %61 = vector.extract_strided_slice %46 {offsets = [0, 33], sizes = [2, 16], strides = [1, 1]} : vector<2x50xf32> to vector<2x16xf32>
    %cst_29 = arith.constant 0.000000e+00 : f32
    %62 = vector.broadcast %cst_29 : f32 to vector<2x16xf32>
    %63 = arith.cmpf ogt, %61, %62 : vector<2x16xf32>
    %cst_30 = arith.constant 1.000000e+00 : f32
    %64 = vector.broadcast %cst_30 : f32 to vector<2x16xf32>
    %65 = arith.addf %61, %64 : vector<2x16xf32>
    %66 = math.exp %61 : vector<2x16xf32>
    %67 = arith.select %63, %65, %66 : vector<2x16xi1>, vector<2x16xf32>
    %68 = vector.extract_strided_slice %46 {offsets = [0, 49], sizes = [2, 1], strides = [1, 1]} : vector<2x50xf32> to vector<2x1xf32>
    %69 = arith.negf %68 : vector<2x1xf32>
    %70 = math.exp %69 : vector<2x1xf32>
    %cst_31 = arith.constant 1.000000e+00 : f32
    %71 = vector.broadcast %cst_31 : f32 to vector<2x1xf32>
    %72 = arith.addf %71, %70 : vector<2x1xf32>
    %73 = arith.divf %71, %72 : vector<2x1xf32>
    %cst_32 = arith.constant dense<0.000000e+00> : vector<2xf32>
    %74 = vector.multi_reduction <add>, %53, %cst_32 [1] : vector<2x16xf32> to vector<2xf32>
    %75 = vector.shape_cast %74 : vector<2xf32> to vector<2x1xf32>
    %76 = tpu.reciprocal %75 : vector<2x1xf32> -> vector<2x1xf32>
    %77 = vector.broadcast %76 : vector<2x1xf32> to vector<2x16xf32>
    %78 = arith.mulf %53, %77 : vector<2x16xf32>
    %cst_33 = arith.constant dense<0.000000e+00> : vector<2xf32>
    %79 = vector.multi_reduction <add>, %67, %cst_33 [1] : vector<2x16xf32> to vector<2xf32>
    %80 = vector.shape_cast %79 : vector<2xf32> to vector<2x1xf32>
    %81 = tpu.reciprocal %80 : vector<2x1xf32> -> vector<2x1xf32>
    %82 = vector.broadcast %81 : vector<2x1xf32> to vector<2x16xf32>
    %83 = arith.mulf %67, %82 : vector<2x16xf32>
    %84 = vector.shape_cast %78 : vector<2x16xf32> to vector<2x1x16xf32>
    %85 = vector.broadcast %84 : vector<2x1x16xf32> to vector<2x16x16xf32>
    %86 = arith.mulf %11, %85 : vector<2x16x16xf32>
    %cst_34 = arith.constant dense<0.000000e+00> : vector<2x16xf32>
    %87 = vector.multi_reduction <add>, %86, %cst_34 [2] : vector<2x16x16xf32> to vector<2x16xf32>
    %88 = arith.subf %54, %87 : vector<2x16xf32>
    %89 = vector.broadcast %60 : vector<2x1xf32> to vector<2x16xf32>
    %90 = arith.mulf %89, %88 : vector<2x16xf32>
    %91 = vector.shape_cast %90 : vector<2x16xf32> to vector<2x16x1xf32>
    %92 = vector.shape_cast %78 : vector<2x16xf32> to vector<2x1x16xf32>
    %93 = vector.broadcast %91 : vector<2x16x1xf32> to vector<2x16x16xf32>
    %94 = vector.broadcast %92 : vector<2x1x16xf32> to vector<2x16x16xf32>
    %95 = arith.mulf %93, %94 : vector<2x16x16xf32>
    %96 = arith.addf %11, %95 : vector<2x16x16xf32>
    %97 = vector.broadcast %73 : vector<2x1xf32> to vector<2x16xf32>
    %98 = arith.mulf %97, %83 : vector<2x16xf32>
    %99 = vector.shape_cast %98 : vector<2x16xf32> to vector<2x1x16xf32>
    %100 = vector.broadcast %99 : vector<2x1x16xf32> to vector<2x16x16xf32>
    %101 = arith.mulf %96, %100 : vector<2x16x16xf32>
    %cst_35 = arith.constant dense<0.000000e+00> : vector<2x16xf32>
    %102 = vector.multi_reduction <add>, %101, %cst_35 [2] : vector<2x16x16xf32> to vector<2x16xf32>
    %cst_36 = arith.constant dense<0.000000e+00> : vector<2x32xf32>
    %103 = tpu.matmul %102, %7, %cst_36 {dimension_numbers = #tpu.dot_dimension_numbers<[1], [0], [0], [1], [0, 0, 1, 1], [], []>} : vector<2x16xf32>, vector<16x32xf32>, vector<2x32xf32> -> vector<2x32xf32>
    %104 = vector.broadcast %8 : vector<1x32xf32> to vector<2x32xf32>
    %105 = arith.addf %103, %104 : vector<2x32xf32>
    %106 = tpu.concatenate %43, %105 in 1 : vector<2x32xf32>, vector<2x32xf32> -> vector<2x64xf32>
    %107 = arith.index_cast %c0_i32_19 : i32 to index
    %c0_37 = arith.constant 0 : index
    %c0_38 = arith.constant 0 : index
    %108 = vector.load %arg11[%107, %c0_37, %c0_38] : memref<4x2x64xf32, #tpu.memory_space<vmem>>, vector<1x2x64xf32>
    %109 = vector.shape_cast %108 : vector<1x2x64xf32> to vector<2x64xf32>
    %110 = vector.shape_cast %106 : vector<2x64xf32> to vector<1x2x64xf32>
    tpu.vector_store %arg11[%107, %c0_37, %c0_38], %110 {strides = array<i32>} : memref<4x2x64xf32, #tpu.memory_space<vmem>>, vector<1x2x64xf32>,
    %c1_i32 = arith.constant 1 : i32
    %111 = arith.index_cast %c1_i32 : i32 to index
    %c0_39 = arith.constant 0 : index
    %c0_40 = arith.constant 0 : index
    %112 = vector.load %arg1[%111, %c0_39, %c0_40] : memref<4x2x8xf32, #tpu.memory_space<vmem>>, vector<1x2x8xf32>
    %113 = vector.shape_cast %112 : vector<1x2x8xf32> to vector<2x8xf32>
    %114 = tpu.concatenate %113, %43 in 1 : vector<2x8xf32>, vector<2x32xf32> -> vector<2x40xf32>
    %cst_41 = arith.constant dense<0.000000e+00> : vector<2x128xf32>
    %115 = tpu.matmul %114, %3, %cst_41 {dimension_numbers = #tpu.dot_dimension_numbers<[1], [0], [0], [1], [0, 0, 1, 1], [], []>} : vector<2x40xf32>, vector<40x128xf32>, vector<2x128xf32> -> vector<2x128xf32>
    %116 = vector.broadcast %4 : vector<1x128xf32> to vector<2x128xf32>
    %117 = arith.addf %115, %116 : vector<2x128xf32>
    %118 = vector.extract_strided_slice %117 {offsets = [0, 0], sizes = [2, 32], strides = [1, 1]} : vector<2x128xf32> to vector<2x32xf32>
    %119 = arith.negf %118 : vector<2x32xf32>
    %120 = math.exp %119 : vector<2x32xf32>
    %cst_42 = arith.constant 1.000000e+00 : f32
    %121 = vector.broadcast %cst_42 : f32 to vector<2x32xf32>
    %122 = arith.addf %121, %120 : vector<2x32xf32>
    %123 = arith.divf %121, %122 : vector<2x32xf32>
    %124 = vector.extract_strided_slice %117 {offsets = [0, 32], sizes = [2, 32], strides = [1, 1]} : vector<2x128xf32> to vector<2x32xf32>
    %125 = arith.negf %124 : vector<2x32xf32>
    %126 = math.exp %125 : vector<2x32xf32>
    %cst_43 = arith.constant 1.000000e+00 : f32
    %127 = vector.broadcast %cst_43 : f32 to vector<2x32xf32>
    %128 = arith.addf %127, %126 : vector<2x32xf32>
    %129 = arith.divf %127, %128 : vector<2x32xf32>
    %130 = vector.extract_strided_slice %117 {offsets = [0, 64], sizes = [2, 32], strides = [1, 1]} : vector<2x128xf32> to vector<2x32xf32>
    %131 = math.tanh %130 : vector<2x32xf32>
    %132 = vector.extract_strided_slice %117 {offsets = [0, 96], sizes = [2, 32], strides = [1, 1]} : vector<2x128xf32> to vector<2x32xf32>
    %133 = arith.negf %132 : vector<2x32xf32>
    %134 = math.exp %133 : vector<2x32xf32>
    %cst_44 = arith.constant 1.000000e+00 : f32
    %135 = vector.broadcast %cst_44 : f32 to vector<2x32xf32>
    %136 = arith.addf %135, %134 : vector<2x32xf32>
    %137 = arith.divf %135, %136 : vector<2x32xf32>
    %138 = arith.mulf %129, %41 : vector<2x32xf32>
    %139 = arith.mulf %123, %131 : vector<2x32xf32>
    %140 = arith.addf %138, %139 : vector<2x32xf32>
    %141 = math.tanh %140 : vector<2x32xf32>
    %142 = arith.mulf %137, %141 : vector<2x32xf32>
    %cst_45 = arith.constant dense<0.000000e+00> : vector<2x50xf32>
    %143 = tpu.matmul %142, %5, %cst_45 {dimension_numbers = #tpu.dot_dimension_numbers<[1], [0], [0], [1], [0, 0, 1, 1], [], []>} : vector<2x32xf32>, vector<32x50xf32>, vector<2x50xf32> -> vector<2x50xf32>
    %144 = vector.broadcast %6 : vector<1x50xf32> to vector<2x50xf32>
    %145 = arith.addf %143, %144 : vector<2x50xf32>
    %146 = vector.extract_strided_slice %145 {offsets = [0, 0], sizes = [2, 16], strides = [1, 1]} : vector<2x50xf32> to vector<2x16xf32>
    %cst_46 = arith.constant 0.000000e+00 : f32
    %147 = vector.broadcast %cst_46 : f32 to vector<2x16xf32>
    %148 = arith.cmpf ogt, %146, %147 : vector<2x16xf32>
    %cst_47 = arith.constant 1.000000e+00 : f32
    %149 = vector.broadcast %cst_47 : f32 to vector<2x16xf32>
    %150 = arith.addf %146, %149 : vector<2x16xf32>
    %151 = math.exp %146 : vector<2x16xf32>
    %152 = arith.select %148, %150, %151 : vector<2x16xi1>, vector<2x16xf32>
    %153 = vector.extract_strided_slice %145 {offsets = [0, 16], sizes = [2, 16], strides = [1, 1]} : vector<2x50xf32> to vector<2x16xf32>
    %154 = vector.extract_strided_slice %145 {offsets = [0, 32], sizes = [2, 1], strides = [1, 1]} : vector<2x50xf32> to vector<2x1xf32>
    %155 = arith.negf %154 : vector<2x1xf32>
    %156 = math.exp %155 : vector<2x1xf32>
    %cst_48 = arith.constant 1.000000e+00 : f32
    %157 = vector.broadcast %cst_48 : f32 to vector<2x1xf32>
    %158 = arith.addf %157, %156 : vector<2x1xf32>
    %159 = arith.divf %157, %158 : vector<2x1xf32>
    %160 = vector.extract_strided_slice %145 {offsets = [0, 33], sizes = [2, 16], strides = [1, 1]} : vector<2x50xf32> to vector<2x16xf32>
    %cst_49 = arith.constant 0.000000e+00 : f32
    %161 = vector.broadcast %cst_49 : f32 to vector<2x16xf32>
    %162 = arith.cmpf ogt, %160, %161 : vector<2x16xf32>
    %cst_50 = arith.constant 1.000000e+00 : f32
    %163 = vector.broadcast %cst_50 : f32 to vector<2x16xf32>
    %164 = arith.addf %160, %163 : vector<2x16xf32>
    %165 = math.exp %160 : vector<2x16xf32>
    %166 = arith.select %162, %164, %165 : vector<2x16xi1>, vector<2x16xf32>
    %167 = vector.extract_strided_slice %145 {offsets = [0, 49], sizes = [2, 1], strides = [1, 1]} : vector<2x50xf32> to vector<2x1xf32>
    %168 = arith.negf %167 : vector<2x1xf32>
    %169 = math.exp %168 : vector<2x1xf32>
    %cst_51 = arith.constant 1.000000e+00 : f32
    %170 = vector.broadcast %cst_51 : f32 to vector<2x1xf32>
    %171 = arith.addf %170, %169 : vector<2x1xf32>
    %172 = arith.divf %170, %171 : vector<2x1xf32>
    %cst_52 = arith.constant dense<0.000000e+00> : vector<2xf32>
    %173 = vector.multi_reduction <add>, %152, %cst_52 [1] : vector<2x16xf32> to vector<2xf32>
    %174 = vector.shape_cast %173 : vector<2xf32> to vector<2x1xf32>
    %175 = tpu.reciprocal %174 : vector<2x1xf32> -> vector<2x1xf32>
    %176 = vector.broadcast %175 : vector<2x1xf32> to vector<2x16xf32>
    %177 = arith.mulf %152, %176 : vector<2x16xf32>
    %cst_53 = arith.constant dense<0.000000e+00> : vector<2xf32>
    %178 = vector.multi_reduction <add>, %166, %cst_53 [1] : vector<2x16xf32> to vector<2xf32>
    %179 = vector.shape_cast %178 : vector<2xf32> to vector<2x1xf32>
    %180 = tpu.reciprocal %179 : vector<2x1xf32> -> vector<2x1xf32>
    %181 = vector.broadcast %180 : vector<2x1xf32> to vector<2x16xf32>
    %182 = arith.mulf %166, %181 : vector<2x16xf32>
    %183 = vector.shape_cast %177 : vector<2x16xf32> to vector<2x1x16xf32>
    %184 = vector.broadcast %183 : vector<2x1x16xf32> to vector<2x16x16xf32>
    %185 = arith.mulf %96, %184 : vector<2x16x16xf32>
    %cst_54 = arith.constant dense<0.000000e+00> : vector<2x16xf32>
    %186 = vector.multi_reduction <add>, %185, %cst_54 [2] : vector<2x16x16xf32> to vector<2x16xf32>
    %187 = arith.subf %153, %186 : vector<2x16xf32>
    %188 = vector.broadcast %159 : vector<2x1xf32> to vector<2x16xf32>
    %189 = arith.mulf %188, %187 : vector<2x16xf32>
    %190 = vector.shape_cast %189 : vector<2x16xf32> to vector<2x16x1xf32>
    %191 = vector.shape_cast %177 : vector<2x16xf32> to vector<2x1x16xf32>
    %192 = vector.broadcast %190 : vector<2x16x1xf32> to vector<2x16x16xf32>
    %193 = vector.broadcast %191 : vector<2x1x16xf32> to vector<2x16x16xf32>
    %194 = arith.mulf %192, %193 : vector<2x16x16xf32>
    %195 = arith.addf %96, %194 : vector<2x16x16xf32>
    %196 = vector.broadcast %172 : vector<2x1xf32> to vector<2x16xf32>
    %197 = arith.mulf %196, %182 : vector<2x16xf32>
    %198 = vector.shape_cast %197 : vector<2x16xf32> to vector<2x1x16xf32>
    %199 = vector.broadcast %198 : vector<2x1x16xf32> to vector<2x16x16xf32>
    %200 = arith.mulf %195, %199 : vector<2x16x16xf32>
    %cst_55 = arith.constant dense<0.000000e+00> : vector<2x16xf32>
    %201 = vector.multi_reduction <add>, %200, %cst_55 [2] : vector<2x16x16xf32> to vector<2x16xf32>
    %cst_56 = arith.constant dense<0.000000e+00> : vector<2x32xf32>
    %202 = tpu.matmul %201, %7, %cst_56 {dimension_numbers = #tpu.dot_dimension_numbers<[1], [0], [0], [1], [0, 0, 1, 1], [], []>} : vector<2x16xf32>, vector<16x32xf32>, vector<2x32xf32> -> vector<2x32xf32>
    %203 = vector.broadcast %8 : vector<1x32xf32> to vector<2x32xf32>
    %204 = arith.addf %202, %203 : vector<2x32xf32>
    %205 = tpu.concatenate %142, %204 in 1 : vector<2x32xf32>, vector<2x32xf32> -> vector<2x64xf32>
    %206 = arith.index_cast %c1_i32 : i32 to index
    %c0_57 = arith.constant 0 : index
    %c0_58 = arith.constant 0 : index
    %207 = vector.load %arg11[%206, %c0_57, %c0_58] : memref<4x2x64xf32, #tpu.memory_space<vmem>>, vector<1x2x64xf32>
    %208 = vector.shape_cast %207 : vector<1x2x64xf32> to vector<2x64xf32>
    %209 = vector.shape_cast %205 : vector<2x64xf32> to vector<1x2x64xf32>
    tpu.vector_store %arg11[%206, %c0_57, %c0_58], %209 {strides = array<i32>} : memref<4x2x64xf32, #tpu.memory_space<vmem>>, vector<1x2x64xf32>,
    %c2_i32 = arith.constant 2 : i32
    %210 = arith.index_cast %c2_i32 : i32 to index
    %c0_59 = arith.constant 0 : index
    %c0_60 = arith.constant 0 : index
    %211 = vector.load %arg1[%210, %c0_59, %c0_60] : memref<4x2x8xf32, #tpu.memory_space<vmem>>, vector<1x2x8xf32>
    %212 = vector.shape_cast %211 : vector<1x2x8xf32> to vector<2x8xf32>
    %213 = tpu.concatenate %212, %142 in 1 : vector<2x8xf32>, vector<2x32xf32> -> vector<2x40xf32>
    %cst_61 = arith.constant dense<0.000000e+00> : vector<2x128xf32>
    %214 = tpu.matmul %213, %3, %cst_61 {dimension_numbers = #tpu.dot_dimension_numbers<[1], [0], [0], [1], [0, 0, 1, 1], [], []>} : vector<2x40xf32>, vector<40x128xf32>, vector<2x128xf32> -> vector<2x128xf32>
    %215 = vector.broadcast %4 : vector<1x128xf32> to vector<2x128xf32>
    %216 = arith.addf %214, %215 : vector<2x128xf32>
    %217 = vector.extract_strided_slice %216 {offsets = [0, 0], sizes = [2, 32], strides = [1, 1]} : vector<2x128xf32> to vector<2x32xf32>
    %218 = arith.negf %217 : vector<2x32xf32>
    %219 = math.exp %218 : vector<2x32xf32>
    %cst_62 = arith.constant 1.000000e+00 : f32
    %220 = vector.broadcast %cst_62 : f32 to vector<2x32xf32>
    %221 = arith.addf %220, %219 : vector<2x32xf32>
    %222 = arith.divf %220, %221 : vector<2x32xf32>
    %223 = vector.extract_strided_slice %216 {offsets = [0, 32], sizes = [2, 32], strides = [1, 1]} : vector<2x128xf32> to vector<2x32xf32>
    %224 = arith.negf %223 : vector<2x32xf32>
    %225 = math.exp %224 : vector<2x32xf32>
    %cst_63 = arith.constant 1.000000e+00 : f32
    %226 = vector.broadcast %cst_63 : f32 to vector<2x32xf32>
    %227 = arith.addf %226, %225 : vector<2x32xf32>
    %228 = arith.divf %226, %227 : vector<2x32xf32>
    %229 = vector.extract_strided_slice %216 {offsets = [0, 64], sizes = [2, 32], strides = [1, 1]} : vector<2x128xf32> to vector<2x32xf32>
    %230 = math.tanh %229 : vector<2x32xf32>
    %231 = vector.extract_strided_slice %216 {offsets = [0, 96], sizes = [2, 32], strides = [1, 1]} : vector<2x128xf32> to vector<2x32xf32>
    %232 = arith.negf %231 : vector<2x32xf32>
    %233 = math.exp %232 : vector<2x32xf32>
    %cst_64 = arith.constant 1.000000e+00 : f32
    %234 = vector.broadcast %cst_64 : f32 to vector<2x32xf32>
    %235 = arith.addf %234, %233 : vector<2x32xf32>
    %236 = arith.divf %234, %235 : vector<2x32xf32>
    %237 = arith.mulf %228, %140 : vector<2x32xf32>
    %238 = arith.mulf %222, %230 : vector<2x32xf32>
    %239 = arith.addf %237, %238 : vector<2x32xf32>
    %240 = math.tanh %239 : vector<2x32xf32>
    %241 = arith.mulf %236, %240 : vector<2x32xf32>
    %cst_65 = arith.constant dense<0.000000e+00> : vector<2x50xf32>
    %242 = tpu.matmul %241, %5, %cst_65 {dimension_numbers = #tpu.dot_dimension_numbers<[1], [0], [0], [1], [0, 0, 1, 1], [], []>} : vector<2x32xf32>, vector<32x50xf32>, vector<2x50xf32> -> vector<2x50xf32>
    %243 = vector.broadcast %6 : vector<1x50xf32> to vector<2x50xf32>
    %244 = arith.addf %242, %243 : vector<2x50xf32>
    %245 = vector.extract_strided_slice %244 {offsets = [0, 0], sizes = [2, 16], strides = [1, 1]} : vector<2x50xf32> to vector<2x16xf32>
    %cst_66 = arith.constant 0.000000e+00 : f32
    %246 = vector.broadcast %cst_66 : f32 to vector<2x16xf32>
    %247 = arith.cmpf ogt, %245, %246 : vector<2x16xf32>
    %cst_67 = arith.constant 1.000000e+00 : f32
    %248 = vector.broadcast %cst_67 : f32 to vector<2x16xf32>
    %249 = arith.addf %245, %248 : vector<2x16xf32>
    %250 = math.exp %245 : vector<2x16xf32>
    %251 = arith.select %247, %249, %250 : vector<2x16xi1>, vector<2x16xf32>
    %252 = vector.extract_strided_slice %244 {offsets = [0, 16], sizes = [2, 16], strides = [1, 1]} : vector<2x50xf32> to vector<2x16xf32>
    %253 = vector.extract_strided_slice %244 {offsets = [0, 32], sizes = [2, 1], strides = [1, 1]} : vector<2x50xf32> to vector<2x1xf32>
    %254 = arith.negf %253 : vector<2x1xf32>
    %255 = math.exp %254 : vector<2x1xf32>
    %cst_68 = arith.constant 1.000000e+00 : f32
    %256 = vector.broadcast %cst_68 : f32 to vector<2x1xf32>
    %257 = arith.addf %256, %255 : vector<2x1xf32>
    %258 = arith.divf %256, %257 : vector<2x1xf32>
    %259 = vector.extract_strided_slice %244 {offsets = [0, 33], sizes = [2, 16], strides = [1, 1]} : vector<2x50xf32> to vector<2x16xf32>
    %cst_69 = arith.constant 0.000000e+00 : f32
    %260 = vector.broadcast %cst_69 : f32 to vector<2x16xf32>
    %261 = arith.cmpf ogt, %259, %260 : vector<2x16xf32>
    %cst_70 = arith.constant 1.000000e+00 : f32
    %262 = vector.broadcast %cst_70 : f32 to vector<2x16xf32>
    %263 = arith.addf %259, %262 : vector<2x16xf32>
    %264 = math.exp %259 : vector<2x16xf32>
    %265 = arith.select %261, %263, %264 : vector<2x16xi1>, vector<2x16xf32>
    %266 = vector.extract_strided_slice %244 {offsets = [0, 49], sizes = [2, 1], strides = [1, 1]} : vector<2x50xf32> to vector<2x1xf32>
    %267 = arith.negf %266 : vector<2x1xf32>
    %268 = math.exp %267 : vector<2x1xf32>
    %cst_71 = arith.constant 1.000000e+00 : f32
    %269 = vector.broadcast %cst_71 : f32 to vector<2x1xf32>
    %270 = arith.addf %269, %268 : vector<2x1xf32>
    %271 = arith.divf %269, %270 : vector<2x1xf32>
    %cst_72 = arith.constant dense<0.000000e+00> : vector<2xf32>
    %272 = vector.multi_reduction <add>, %251, %cst_72 [1] : vector<2x16xf32> to vector<2xf32>
    %273 = vector.shape_cast %272 : vector<2xf32> to vector<2x1xf32>
    %274 = tpu.reciprocal %273 : vector<2x1xf32> -> vector<2x1xf32>
    %275 = vector.broadcast %274 : vector<2x1xf32> to vector<2x16xf32>
    %276 = arith.mulf %251, %275 : vector<2x16xf32>
    %cst_73 = arith.constant dense<0.000000e+00> : vector<2xf32>
    %277 = vector.multi_reduction <add>, %265, %cst_73 [1] : vector<2x16xf32> to vector<2xf32>
    %278 = vector.shape_cast %277 : vector<2xf32> to vector<2x1xf32>
    %279 = tpu.reciprocal %278 : vector<2x1xf32> -> vector<2x1xf32>
    %280 = vector.broadcast %279 : vector<2x1xf32> to vector<2x16xf32>
    %281 = arith.mulf %265, %280 : vector<2x16xf32>
    %282 = vector.shape_cast %276 : vector<2x16xf32> to vector<2x1x16xf32>
    %283 = vector.broadcast %282 : vector<2x1x16xf32> to vector<2x16x16xf32>
    %284 = arith.mulf %195, %283 : vector<2x16x16xf32>
    %cst_74 = arith.constant dense<0.000000e+00> : vector<2x16xf32>
    %285 = vector.multi_reduction <add>, %284, %cst_74 [2] : vector<2x16x16xf32> to vector<2x16xf32>
    %286 = arith.subf %252, %285 : vector<2x16xf32>
    %287 = vector.broadcast %258 : vector<2x1xf32> to vector<2x16xf32>
    %288 = arith.mulf %287, %286 : vector<2x16xf32>
    %289 = vector.shape_cast %288 : vector<2x16xf32> to vector<2x16x1xf32>
    %290 = vector.shape_cast %276 : vector<2x16xf32> to vector<2x1x16xf32>
    %291 = vector.broadcast %289 : vector<2x16x1xf32> to vector<2x16x16xf32>
    %292 = vector.broadcast %290 : vector<2x1x16xf32> to vector<2x16x16xf32>
    %293 = arith.mulf %291, %292 : vector<2x16x16xf32>
    %294 = arith.addf %195, %293 : vector<2x16x16xf32>
    %295 = vector.broadcast %271 : vector<2x1xf32> to vector<2x16xf32>
    %296 = arith.mulf %295, %281 : vector<2x16xf32>
    %297 = vector.shape_cast %296 : vector<2x16xf32> to vector<2x1x16xf32>
    %298 = vector.broadcast %297 : vector<2x1x16xf32> to vector<2x16x16xf32>
    %299 = arith.mulf %294, %298 : vector<2x16x16xf32>
    %cst_75 = arith.constant dense<0.000000e+00> : vector<2x16xf32>
    %300 = vector.multi_reduction <add>, %299, %cst_75 [2] : vector<2x16x16xf32> to vector<2x16xf32>
    %cst_76 = arith.constant dense<0.000000e+00> : vector<2x32xf32>
    %301 = tpu.matmul %300, %7, %cst_76 {dimension_numbers = #tpu.dot_dimension_numbers<[1], [0], [0], [1], [0, 0, 1, 1], [], []>} : vector<2x16xf32>, vector<16x32xf32>, vector<2x32xf32> -> vector<2x32xf32>
    %302 = vector.broadcast %8 : vector<1x32xf32> to vector<2x32xf32>
    %303 = arith.addf %301, %302 : vector<2x32xf32>
    %304 = tpu.concatenate %241, %303 in 1 : vector<2x32xf32>, vector<2x32xf32> -> vector<2x64xf32>
    %305 = arith.index_cast %c2_i32 : i32 to index
    %c0_77 = arith.constant 0 : index
    %c0_78 = arith.constant 0 : index
    %306 = vector.load %arg11[%305, %c0_77, %c0_78] : memref<4x2x64xf32, #tpu.memory_space<vmem>>, vector<1x2x64xf32>
    %307 = vector.shape_cast %306 : vector<1x2x64xf32> to vector<2x64xf32>
    %308 = vector.shape_cast %304 : vector<2x64xf32> to vector<1x2x64xf32>
    tpu.vector_store %arg11[%305, %c0_77, %c0_78], %308 {strides = array<i32>} : memref<4x2x64xf32, #tpu.memory_space<vmem>>, vector<1x2x64xf32>,
    %c3_i32 = arith.constant 3 : i32
    %309 = arith.index_cast %c3_i32 : i32 to index
    %c0_79 = arith.constant 0 : index
    %c0_80 = arith.constant 0 : index
    %310 = vector.load %arg1[%309, %c0_79, %c0_80] : memref<4x2x8xf32, #tpu.memory_space<vmem>>, vector<1x2x8xf32>
    %311 = vector.shape_cast %310 : vector<1x2x8xf32> to vector<2x8xf32>
    %312 = tpu.concatenate %311, %241 in 1 : vector<2x8xf32>, vector<2x32xf32> -> vector<2x40xf32>
    %cst_81 = arith.constant dense<0.000000e+00> : vector<2x128xf32>
    %313 = tpu.matmul %312, %3, %cst_81 {dimension_numbers = #tpu.dot_dimension_numbers<[1], [0], [0], [1], [0, 0, 1, 1], [], []>} : vector<2x40xf32>, vector<40x128xf32>, vector<2x128xf32> -> vector<2x128xf32>
    %314 = vector.broadcast %4 : vector<1x128xf32> to vector<2x128xf32>
    %315 = arith.addf %313, %314 : vector<2x128xf32>
    %316 = vector.extract_strided_slice %315 {offsets = [0, 0], sizes = [2, 32], strides = [1, 1]} : vector<2x128xf32> to vector<2x32xf32>
    %317 = arith.negf %316 : vector<2x32xf32>
    %318 = math.exp %317 : vector<2x32xf32>
    %cst_82 = arith.constant 1.000000e+00 : f32
    %319 = vector.broadcast %cst_82 : f32 to vector<2x32xf32>
    %320 = arith.addf %319, %318 : vector<2x32xf32>
    %321 = arith.divf %319, %320 : vector<2x32xf32>
    %322 = vector.extract_strided_slice %315 {offsets = [0, 32], sizes = [2, 32], strides = [1, 1]} : vector<2x128xf32> to vector<2x32xf32>
    %323 = arith.negf %322 : vector<2x32xf32>
    %324 = math.exp %323 : vector<2x32xf32>
    %cst_83 = arith.constant 1.000000e+00 : f32
    %325 = vector.broadcast %cst_83 : f32 to vector<2x32xf32>
    %326 = arith.addf %325, %324 : vector<2x32xf32>
    %327 = arith.divf %325, %326 : vector<2x32xf32>
    %328 = vector.extract_strided_slice %315 {offsets = [0, 64], sizes = [2, 32], strides = [1, 1]} : vector<2x128xf32> to vector<2x32xf32>
    %329 = math.tanh %328 : vector<2x32xf32>
    %330 = vector.extract_strided_slice %315 {offsets = [0, 96], sizes = [2, 32], strides = [1, 1]} : vector<2x128xf32> to vector<2x32xf32>
    %331 = arith.negf %330 : vector<2x32xf32>
    %332 = math.exp %331 : vector<2x32xf32>
    %cst_84 = arith.constant 1.000000e+00 : f32
    %333 = vector.broadcast %cst_84 : f32 to vector<2x32xf32>
    %334 = arith.addf %333, %332 : vector<2x32xf32>
    %335 = arith.divf %333, %334 : vector<2x32xf32>
    %336 = arith.mulf %327, %239 : vector<2x32xf32>
    %337 = arith.mulf %321, %329 : vector<2x32xf32>
    %338 = arith.addf %336, %337 : vector<2x32xf32>
    %339 = math.tanh %338 : vector<2x32xf32>
    %340 = arith.mulf %335, %339 : vector<2x32xf32>
    %cst_85 = arith.constant dense<0.000000e+00> : vector<2x50xf32>
    %341 = tpu.matmul %340, %5, %cst_85 {dimension_numbers = #tpu.dot_dimension_numbers<[1], [0], [0], [1], [0, 0, 1, 1], [], []>} : vector<2x32xf32>, vector<32x50xf32>, vector<2x50xf32> -> vector<2x50xf32>
    %342 = vector.broadcast %6 : vector<1x50xf32> to vector<2x50xf32>
    %343 = arith.addf %341, %342 : vector<2x50xf32>
    %344 = vector.extract_strided_slice %343 {offsets = [0, 0], sizes = [2, 16], strides = [1, 1]} : vector<2x50xf32> to vector<2x16xf32>
    %cst_86 = arith.constant 0.000000e+00 : f32
    %345 = vector.broadcast %cst_86 : f32 to vector<2x16xf32>
    %346 = arith.cmpf ogt, %344, %345 : vector<2x16xf32>
    %cst_87 = arith.constant 1.000000e+00 : f32
    %347 = vector.broadcast %cst_87 : f32 to vector<2x16xf32>
    %348 = arith.addf %344, %347 : vector<2x16xf32>
    %349 = math.exp %344 : vector<2x16xf32>
    %350 = arith.select %346, %348, %349 : vector<2x16xi1>, vector<2x16xf32>
    %351 = vector.extract_strided_slice %343 {offsets = [0, 16], sizes = [2, 16], strides = [1, 1]} : vector<2x50xf32> to vector<2x16xf32>
    %352 = vector.extract_strided_slice %343 {offsets = [0, 32], sizes = [2, 1], strides = [1, 1]} : vector<2x50xf32> to vector<2x1xf32>
    %353 = arith.negf %352 : vector<2x1xf32>
    %354 = math.exp %353 : vector<2x1xf32>
    %cst_88 = arith.constant 1.000000e+00 : f32
    %355 = vector.broadcast %cst_88 : f32 to vector<2x1xf32>
    %356 = arith.addf %355, %354 : vector<2x1xf32>
    %357 = arith.divf %355, %356 : vector<2x1xf32>
    %358 = vector.extract_strided_slice %343 {offsets = [0, 33], sizes = [2, 16], strides = [1, 1]} : vector<2x50xf32> to vector<2x16xf32>
    %cst_89 = arith.constant 0.000000e+00 : f32
    %359 = vector.broadcast %cst_89 : f32 to vector<2x16xf32>
    %360 = arith.cmpf ogt, %358, %359 : vector<2x16xf32>
    %cst_90 = arith.constant 1.000000e+00 : f32
    %361 = vector.broadcast %cst_90 : f32 to vector<2x16xf32>
    %362 = arith.addf %358, %361 : vector<2x16xf32>
    %363 = math.exp %358 : vector<2x16xf32>
    %364 = arith.select %360, %362, %363 : vector<2x16xi1>, vector<2x16xf32>
    %365 = vector.extract_strided_slice %343 {offsets = [0, 49], sizes = [2, 1], strides = [1, 1]} : vector<2x50xf32> to vector<2x1xf32>
    %366 = arith.negf %365 : vector<2x1xf32>
    %367 = math.exp %366 : vector<2x1xf32>
    %cst_91 = arith.constant 1.000000e+00 : f32
    %368 = vector.broadcast %cst_91 : f32 to vector<2x1xf32>
    %369 = arith.addf %368, %367 : vector<2x1xf32>
    %370 = arith.divf %368, %369 : vector<2x1xf32>
    %cst_92 = arith.constant dense<0.000000e+00> : vector<2xf32>
    %371 = vector.multi_reduction <add>, %350, %cst_92 [1] : vector<2x16xf32> to vector<2xf32>
    %372 = vector.shape_cast %371 : vector<2xf32> to vector<2x1xf32>
    %373 = tpu.reciprocal %372 : vector<2x1xf32> -> vector<2x1xf32>
    %374 = vector.broadcast %373 : vector<2x1xf32> to vector<2x16xf32>
    %375 = arith.mulf %350, %374 : vector<2x16xf32>
    %cst_93 = arith.constant dense<0.000000e+00> : vector<2xf32>
    %376 = vector.multi_reduction <add>, %364, %cst_93 [1] : vector<2x16xf32> to vector<2xf32>
    %377 = vector.shape_cast %376 : vector<2xf32> to vector<2x1xf32>
    %378 = tpu.reciprocal %377 : vector<2x1xf32> -> vector<2x1xf32>
    %379 = vector.broadcast %378 : vector<2x1xf32> to vector<2x16xf32>
    %380 = arith.mulf %364, %379 : vector<2x16xf32>
    %381 = vector.shape_cast %375 : vector<2x16xf32> to vector<2x1x16xf32>
    %382 = vector.broadcast %381 : vector<2x1x16xf32> to vector<2x16x16xf32>
    %383 = arith.mulf %294, %382 : vector<2x16x16xf32>
    %cst_94 = arith.constant dense<0.000000e+00> : vector<2x16xf32>
    %384 = vector.multi_reduction <add>, %383, %cst_94 [2] : vector<2x16x16xf32> to vector<2x16xf32>
    %385 = arith.subf %351, %384 : vector<2x16xf32>
    %386 = vector.broadcast %357 : vector<2x1xf32> to vector<2x16xf32>
    %387 = arith.mulf %386, %385 : vector<2x16xf32>
    %388 = vector.shape_cast %387 : vector<2x16xf32> to vector<2x16x1xf32>
    %389 = vector.shape_cast %375 : vector<2x16xf32> to vector<2x1x16xf32>
    %390 = vector.broadcast %388 : vector<2x16x1xf32> to vector<2x16x16xf32>
    %391 = vector.broadcast %389 : vector<2x1x16xf32> to vector<2x16x16xf32>
    %392 = arith.mulf %390, %391 : vector<2x16x16xf32>
    %393 = arith.addf %294, %392 : vector<2x16x16xf32>
    %394 = vector.broadcast %370 : vector<2x1xf32> to vector<2x16xf32>
    %395 = arith.mulf %394, %380 : vector<2x16xf32>
    %396 = vector.shape_cast %395 : vector<2x16xf32> to vector<2x1x16xf32>
    %397 = vector.broadcast %396 : vector<2x1x16xf32> to vector<2x16x16xf32>
    %398 = arith.mulf %393, %397 : vector<2x16x16xf32>
    %cst_95 = arith.constant dense<0.000000e+00> : vector<2x16xf32>
    %399 = vector.multi_reduction <add>, %398, %cst_95 [2] : vector<2x16x16xf32> to vector<2x16xf32>
    %cst_96 = arith.constant dense<0.000000e+00> : vector<2x32xf32>
    %400 = tpu.matmul %399, %7, %cst_96 {dimension_numbers = #tpu.dot_dimension_numbers<[1], [0], [0], [1], [0, 0, 1, 1], [], []>} : vector<2x16xf32>, vector<16x32xf32>, vector<2x32xf32> -> vector<2x32xf32>
    %401 = vector.broadcast %8 : vector<1x32xf32> to vector<2x32xf32>
    %402 = arith.addf %400, %401 : vector<2x32xf32>
    %403 = tpu.concatenate %340, %402 in 1 : vector<2x32xf32>, vector<2x32xf32> -> vector<2x64xf32>
    %404 = arith.index_cast %c3_i32 : i32 to index
    %c0_97 = arith.constant 0 : index
    %c0_98 = arith.constant 0 : index
    %405 = vector.load %arg11[%404, %c0_97, %c0_98] : memref<4x2x64xf32, #tpu.memory_space<vmem>>, vector<1x2x64xf32>
    %406 = vector.shape_cast %405 : vector<1x2x64xf32> to vector<2x64xf32>
    %407 = vector.shape_cast %403 : vector<2x64xf32> to vector<1x2x64xf32>
    tpu.vector_store %arg11[%404, %c0_97, %c0_98], %407 {strides = array<i32>} : memref<4x2x64xf32, #tpu.memory_space<vmem>>, vector<1x2x64xf32>,
    %c4_i32 = arith.constant 4 : i32
    %c0_99 = arith.constant 0 : index
    %c0_100 = arith.constant 0 : index
    %408 = vector.load %arg12[%c0_99, %c0_100] : memref<2x32xf32, #tpu.memory_space<vmem>>, vector<2x32xf32>
    tpu.vector_store %arg12[%c0_99, %c0_100], %340 {strides = array<i32>} : memref<2x32xf32, #tpu.memory_space<vmem>>, vector<2x32xf32>,
    %c0_101 = arith.constant 0 : index
    %c0_102 = arith.constant 0 : index
    %409 = vector.load %arg13[%c0_101, %c0_102] : memref<2x32xf32, #tpu.memory_space<vmem>>, vector<2x32xf32>
    tpu.vector_store %arg13[%c0_101, %c0_102], %338 {strides = array<i32>} : memref<2x32xf32, #tpu.memory_space<vmem>>, vector<2x32xf32>,
    %c0_103 = arith.constant 0 : index
    %c0_104 = arith.constant 0 : index
    %c0_105 = arith.constant 0 : index
    %410 = vector.load %arg14[%c0_103, %c0_104, %c0_105] : memref<2x16x16xf32, #tpu.memory_space<vmem>>, vector<2x16x16xf32>
    tpu.vector_store %arg14[%c0_103, %c0_104, %c0_105], %393 {strides = array<i32>} : memref<2x16x16xf32, #tpu.memory_space<vmem>>, vector<2x16x16xf32>,
    return
  }
  func.func @transform_0(%arg0: i32) -> (i32, i32, i32) {
    %c0_i32 = arith.constant 0 : i32
    %c0_i32_0 = arith.constant 0 : i32
    %c0_i32_1 = arith.constant 0 : i32
    return %arg0, %c0_i32, %c0_i32_0 : i32, i32, i32
  }
  func.func @transform_1(%arg0: i32) -> (i32, i32) {
    %c0_i32 = arith.constant 0 : i32
    %c0_i32_0 = arith.constant 0 : i32
    %c0_i32_1 = arith.constant 0 : i32
    return %c0_i32, %c0_i32_0 : i32, i32
  }
  func.func @transform_2(%arg0: i32) -> (i32, i32) {
    %c0_i32 = arith.constant 0 : i32
    %c0_i32_0 = arith.constant 0 : i32
    %c0_i32_1 = arith.constant 0 : i32
    return %c0_i32, %c0_i32_0 : i32, i32
  }
  func.func @transform_3(%arg0: i32) -> (i32, i32, i32) {
    %c0_i32 = arith.constant 0 : i32
    %c0_i32_0 = arith.constant 0 : i32
    %c0_i32_1 = arith.constant 0 : i32
    %c0_i32_2 = arith.constant 0 : i32
    return %c0_i32, %c0_i32_0, %c0_i32_1 : i32, i32, i32
  }
  func.func @transform_4(%arg0: i32) -> (i32, i32) {
    %c0_i32 = arith.constant 0 : i32
    %c0_i32_0 = arith.constant 0 : i32
    %c0_i32_1 = arith.constant 0 : i32
    return %c0_i32, %c0_i32_0 : i32, i32
  }
  func.func @transform_5(%arg0: i32) -> (i32, i32) {
    %c0_i32 = arith.constant 0 : i32
    %c0_i32_0 = arith.constant 0 : i32
    %c0_i32_1 = arith.constant 0 : i32
    return %c0_i32, %c0_i32_0 : i32, i32
  }
  func.func @transform_6(%arg0: i32) -> (i32, i32) {
    %c0_i32 = arith.constant 0 : i32
    %c0_i32_0 = arith.constant 0 : i32
    %c0_i32_1 = arith.constant 0 : i32
    return %c0_i32, %c0_i32_0 : i32, i32
  }
  func.func @transform_7(%arg0: i32) -> (i32, i32) {
    %c0_i32 = arith.constant 0 : i32
    %c0_i32_0 = arith.constant 0 : i32
    %c0_i32_1 = arith.constant 0 : i32
    return %c0_i32, %c0_i32_0 : i32, i32
  }
  func.func @transform_8(%arg0: i32) -> (i32, i32) {
    %c0_i32 = arith.constant 0 : i32
    %c0_i32_0 = arith.constant 0 : i32
    %c0_i32_1 = arith.constant 0 : i32
    return %c0_i32, %c0_i32_0 : i32, i32
  }
  func.func @transform_9(%arg0: i32) -> (i32, i32) {
    %c0_i32 = arith.constant 0 : i32
    %c0_i32_0 = arith.constant 0 : i32
    %c0_i32_1 = arith.constant 0 : i32
    return %c0_i32, %c0_i32_0 : i32, i32
  }
  func.func @transform_10(%arg0: i32) -> (i32, i32, i32) {
    %c0_i32 = arith.constant 0 : i32
    %c0_i32_0 = arith.constant 0 : i32
    %c0_i32_1 = arith.constant 0 : i32
    return %arg0, %c0_i32, %c0_i32_0 : i32, i32, i32
  }
  func.func @transform_11(%arg0: i32) -> (i32, i32) {
    %c0_i32 = arith.constant 0 : i32
    %c0_i32_0 = arith.constant 0 : i32
    %c0_i32_1 = arith.constant 0 : i32
    return %c0_i32, %c0_i32_0 : i32, i32
  }
  func.func @transform_12(%arg0: i32) -> (i32, i32) {
    %c0_i32 = arith.constant 0 : i32
    %c0_i32_0 = arith.constant 0 : i32
    %c0_i32_1 = arith.constant 0 : i32
    return %c0_i32, %c0_i32_0 : i32, i32
  }
  func.func @transform_13(%arg0: i32) -> (i32, i32, i32) {
    %c0_i32 = arith.constant 0 : i32
    %c0_i32_0 = arith.constant 0 : i32
    %c0_i32_1 = arith.constant 0 : i32
    %c0_i32_2 = arith.constant 0 : i32
    return %c0_i32, %c0_i32_0, %c0_i32_1 : i32, i32, i32
  }
}

</mosaic_0001>

<llo_original>
// kernel: fwm_rnn_forward.1
$region0: #{fwm_rnn_forward.1}
  #allocation0 [shape = 'u32[]', space=smem, size = 0x4, offset = 0x4, fixed_abs, tag = 'smem constant byte address 0x4 - core index']
  #allocation1 [shape = 'u32[144,128]{1,0:T(1,128)}', space=vmem, size = 0x12000, scoped, tag = 'internal scratch']
  %s0 = inlined_call_operand.hbm [shape: f32[8,2,8], index: 0, kind: input, shape index: {}]
  %s1 = inlined_call_operand.vmem [shape: f32[2,32], index: 1, kind: input, shape index: {}]
  %s2 = inlined_call_operand.vmem [shape: f32[2,32], index: 2, kind: input, shape index: {}]
  %s3 = inlined_call_operand.hbm [shape: f32[2,16,16], index: 3, kind: input, shape index: {}]
  %s4 = inlined_call_operand.hbm [shape: f32[40,128], index: 4, kind: input, shape index: {}]
  %s5 = inlined_call_operand.vmem [shape: f32[1,128], index: 5, kind: input, shape index: {}]
  %s6 = inlined_call_operand.hbm [shape: f32[32,50], index: 6, kind: input, shape index: {}]
  %s7 = inlined_call_operand.vmem [shape: f32[1,50], index: 7, kind: input, shape index: {}]
  %s8 = inlined_call_operand.vmem [shape: f32[16,32], index: 8, kind: input, shape index: {}]
  %s9 = inlined_call_operand.vmem [shape: f32[1,32], index: 9, kind: input, shape index: {}]
  %s10 = inlined_call_operand.hbm [shape: f32[8,2,64], index: 10, kind: output, shape index: {0}]
  %s11 = inlined_call_operand.hbm [shape: f32[2,32], index: 11, kind: output, shape index: {1}]
  %s12 = inlined_call_operand.hbm [shape: f32[2,32], index: 12, kind: output, shape index: {2}]
  %s13 = inlined_call_operand.hbm [shape: f32[2,16,16], index: 13, kind: output, shape index: {3}]
  %14 = xla_tuple %s10, %s11, %s12, %s13
  %s15 = sld [smem:[#allocation0]]
  $region117: #{fwm_rnn_forward.1} parent=0
    _
  %s17 = ssub.s32 1, %s15
  %s18 = scalar_select 0, %s17, %s15
  $region1: #{fwm_rnn_forward.1} parent=0
    #allocation2 [shape = 'u8[8192]{0}', space=vmem, size = 0x2000, scoped, tag = 'input window, operand 0']
    #allocation3 [shape = 's32[2]{0}', space=sflag, size = 0x8, scoped, tag = 'scoped memory for fwm_rnn_forward.1']
    #allocation4 [shape = 's32[2]{0}', space=sflag, size = 0x8, scoped, tag = 'scoped memory for fwm_rnn_forward.1']
    #allocation5 [shape = 'u8[16384]{0}', space=vmem, size = 0x4000, scoped, tag = 'input window, operand 3, single buffered']
    #allocation6 [shape = 's32[1]{0}', space=sflag, size = 0x4, scoped, tag = 'scoped memory for fwm_rnn_forward.1']
    #allocation7 [shape = 'u8[20480]{0}', space=vmem, size = 0x5000, scoped, tag = 'input window, operand 4, single buffered']
    #allocation8 [shape = 'u8[16384]{0}', space=vmem, size = 0x4000, scoped, tag = 'input window, operand 6, single buffered']
    #allocation9 [shape = 's32[1]{0}', space=sflag, size = 0x4, scoped, tag = 'scoped memory for fwm_rnn_forward.1']
    #allocation10 [shape = 'u8[8192]{0}', space=vmem, size = 0x2000, scoped, tag = 'output window, operand 0']
    #allocation11 [shape = 'u8[1024]{0}', space=vmem, size = 0x400, scoped, tag = 'output window, operand 1, single buffered']
    #allocation12 [shape = 's32[1]{0}', space=sflag, size = 0x4, scoped, tag = 'scoped memory for fwm_rnn_forward.1']
    #allocation13 [shape = 'u8[1024]{0}', space=vmem, size = 0x400, scoped, tag = 'output window, operand 2, single buffered']
    #allocation14 [shape = 'u8[16384]{0}', space=vmem, size = 0x4000, scoped, tag = 'output window, operand 3, single buffered']
    #allocation15 [shape = 's32[1]{0}', space=sflag, size = 0x4, scoped, tag = 'scoped memory for fwm_rnn_forward.1']
    %19 = vsyncpa [#allocation3], 0
    %s20 = scalar_lea.sflag [#allocation3], 1
    %21 = vsyncpa %s20, 0
    %22 = vsyncpa [#allocation6], 0
    %23 = vsyncpa [#allocation9], 0
    %24 = vsyncpa [#allocation4], 0
    %s25 = scalar_lea.sflag [#allocation4], 1
    %26 = vsyncpa %s25, 0
    %27 = vsyncpa [#allocation12], 0
    %28 = vsyncpa [#allocation15], 0
    loop: start=0, step=1, limit=4
    $region2: #{fwm_rnn_forward.1} parent=1 // loop_pre_header
      _
    $region3: #{fwm_rnn_forward.1} parent=1 // loop_header
      %s30 = sphi 0, %s34
      %p31 = scmp.ge.s32.totalorder %s30, 4
      %s40 = sphi 0, %s42
      %s43 = sphi 0, %s40
      %s44 = sphi 0, %s43
      %s60 = sphi 0, %s44
      %s64 = sphi 0, %s64
      %s66 = sphi 0, %s64
      %s67 = sphi 0, %s66
      %s81 = sphi 0, %s67
      %s85 = sphi 0, %s85
      %s87 = sphi 0, %s85
      %s88 = sphi 0, %s87
      %s102 = sphi 0, %s88
      %s106 = sphi 0, %s106
      %s108 = sphi 0, %s106
      %s109 = sphi 0, %s108
      %s123 = sphi 0, %s109
      %s127 = sphi 0, %s127
      %s129 = sphi 0, %s127
      %s130 = sphi 0, %s129
      %s144 = sphi 0, %s130
      %s148 = sphi 0, %s148
      %s150 = sphi 0, %s148
      %s151 = sphi 0, %s150
      %s165 = sphi 0, %s151
      %s169 = sphi 0, %s169
      %s171 = sphi 0, %s169
      %s172 = sphi 0, %s171
      %s186 = sphi 0, %s172
      %s190 = sphi 0, %s190
      %s192 = sphi 0, %s190
      %s193 = sphi 0, %s192
      %s207 = sphi 0, %s193
      %s211 = sphi 0, %s211
      %s213 = sphi 0, %s211
      %s214 = sphi 0, %s213
      %s228 = sphi 0, %s214
      %s232 = sphi 0, %s232
      %s234 = sphi 0, %s232
      %s235 = sphi 0, %s234
      %s249 = sphi 0, %s235
      %s255 = sphi 0, %s257
      %s258 = sphi 0, %s255
      %s259 = sphi 0, %s258
      %s275 = sphi 0, %s259
      %s279 = sphi 0, %s279
      %s281 = sphi 0, %s279
      %s282 = sphi 0, %s281
      %s296 = sphi 0, %s282
      %s300 = sphi 0, %s300
      %s302 = sphi 0, %s300
      %s303 = sphi 0, %s302
      %s317 = sphi 0, %s303
      %s321 = sphi 0, %s321
      %s323 = sphi 0, %s321
      %s324 = sphi 0, %s323
      %s338 = sphi 0, %s324
    $region4: #{fwm_rnn_forward.1} parent=1 // loop_header_branch
      %33 = sbr.rel (%p31) target = $region8
    $region5: #{fwm_rnn_forward.1} parent=1 // loop_body
      %s35 = ssub.s32 %s30, 1
      %s36 = ssub.s32 %s30, 2
      %s37 = sadd.s32 %s30, 1
      %s38 = ssub.s32 %s30, %s37
      %p39 = scmp.eq.s32.totalorder %s38, 0
      %s41 = sadd.s32 %s40, 1
      %s42 = scalar_select %p39, %s40, %s41
      %p45 = pneg %p39
      %p46 = scmp.eq.s32.totalorder %s30, 1
      %p47 = por %p45, %p46
      %p48 = scmp.ne.s32.totalorder %s40, %s43
      %p49 = scmp.eq.s32.totalorder %s30, 0
      %p50 = por %p48, %p49
      %p51 = scmp.ne.s32.totalorder %s40, %s43
      %p52 = scmp.eq.s32.totalorder %s35, 1
      %p53 = por %p51, %p52
      %p54 = scmp.ne.s32.totalorder %s43, %s44
      %p55 = scmp.eq.s32.totalorder %s35, 0
      %p56 = por %p54, %p55
      %p57 = scmp.ne.s32.totalorder %s43, %s44
      %p58 = scmp.eq.s32.totalorder %s36, 1
      %p59 = por %p57, %p58
      %p61 = scmp.ne.s32.totalorder %s44, %s60
      %p62 = scmp.eq.s32.totalorder %s36, 0
      %p63 = por %p61, %p62
      %s65 = sadd.s32 %s64, 1
      %p68 = scmp.eq.s32.totalorder %s30, 1
      %p69 = scmp.ne.s32.totalorder %s64, %s66
      %p70 = scmp.eq.s32.totalorder %s30, 0
      %p71 = por %p69, %p70
      %p72 = scmp.ne.s32.totalorder %s64, %s66
      %p73 = scmp.eq.s32.totalorder %s35, 1
      %p74 = por %p72, %p73
      %p75 = scmp.ne.s32.totalorder %s66, %s67
      %p76 = scmp.eq.s32.totalorder %s35, 0
      %p77 = por %p75, %p76
      %p78 = scmp.ne.s32.totalorder %s66, %s67
      %p79 = scmp.eq.s32.totalorder %s36, 1
      %p80 = por %p78, %p79
      %p82 = scmp.ne.s32.totalorder %s67, %s81
      %p83 = scmp.eq.s32.totalorder %s36, 0
      %p84 = por %p82, %p83
      %s86 = sadd.s32 %s85, 1
      %p89 = scmp.eq.s32.totalorder %s30, 1
      %p90 = scmp.ne.s32.totalorder %s85, %s87
      %p91 = scmp.eq.s32.totalorder %s30, 0
      %p92 = por %p90, %p91
      %p93 = scmp.ne.s32.totalorder %s85, %s87
      %p94 = scmp.eq.s32.totalorder %s35, 1
      %p95 = por %p93, %p94
      %p96 = scmp.ne.s32.totalorder %s87, %s88
      %p97 = scmp.eq.s32.totalorder %s35, 0
      %p98 = por %p96, %p97
      %p99 = scmp.ne.s32.totalorder %s87, %s88
      %p100 = scmp.eq.s32.totalorder %s36, 1
      %p101 = por %p99, %p100
      %p103 = scmp.ne.s32.totalorder %s88, %s102
      %p104 = scmp.eq.s32.totalorder %s36, 0
      %p105 = por %p103, %p104
      %s107 = sadd.s32 %s106, 1
      %p110 = scmp.eq.s32.totalorder %s30, 1
      %p111 = scmp.ne.s32.totalorder %s106, %s108
      %p112 = scmp.eq.s32.totalorder %s30, 0
      %p113 = por %p111, %p112
      %p114 = scmp.ne.s32.totalorder %s106, %s108
      %p115 = scmp.eq.s32.totalorder %s35, 1
      %p116 = por %p114, %p115
      %p117 = scmp.ne.s32.totalorder %s108, %s109
      %p118 = scmp.eq.s32.totalorder %s35, 0
      %p119 = por %p117, %p118
      %p120 = scmp.ne.s32.totalorder %s108, %s109
      %p121 = scmp.eq.s32.totalorder %s36, 1
      %p122 = por %p120, %p121
      %p124 = scmp.ne.s32.totalorder %s109, %s123
      %p125 = scmp.eq.s32.totalorder %s36, 0
      %p126 = por %p124, %p125
      %s128 = sadd.s32 %s127, 1
      %p131 = scmp.eq.s32.totalorder %s30, 1
      %p132 = scmp.ne.s32.totalorder %s127, %s129
      %p133 = scmp.eq.s32.totalorder %s30, 0
      %p134 = por %p132, %p133
      %p135 = scmp.ne.s32.totalorder %s127, %s129
      %p136 = scmp.eq.s32.totalorder %s35, 1
      %p137 = por %p135, %p136
      %p138 = scmp.ne.s32.totalorder %s129, %s130
      %p139 = scmp.eq.s32.totalorder %s35, 0
      %p140 = por %p138, %p139
      %p141 = scmp.ne.s32.totalorder %s129, %s130
      %p142 = scmp.eq.s32.totalorder %s36, 1
      %p143 = por %p141, %p142
      %p145 = scmp.ne.s32.totalorder %s130, %s144
      %p146 = scmp.eq.s32.totalorder %s36, 0
      %p147 = por %p145, %p146
      %s149 = sadd.s32 %s148, 1
      %p152 = scmp.eq.s32.totalorder %s30, 1
      %p153 = scmp.ne.s32.totalorder %s148, %s150
      %p154 = scmp.eq.s32.totalorder %s30, 0
      %p155 = por %p153, %p154
      %p156 = scmp.ne.s32.totalorder %s148, %s150
      %p157 = scmp.eq.s32.totalorder %s35, 1
      %p158 = por %p156, %p157
      %p159 = scmp.ne.s32.totalorder %s150, %s151
      %p160 = scmp.eq.s32.totalorder %s35, 0
      %p161 = por %p159, %p160
      %p162 = scmp.ne.s32.totalorder %s150, %s151
      %p163 = scmp.eq.s32.totalorder %s36, 1
      %p164 = por %p162, %p163
      %p166 = scmp.ne.s32.totalorder %s151, %s165
      %p167 = scmp.eq.s32.totalorder %s36, 0
      %p168 = por %p166, %p167
      %s170 = sadd.s32 %s169, 1
      %p173 = scmp.eq.s32.totalorder %s30, 1
      %p174 = scmp.ne.s32.totalorder %s169, %s171
      %p175 = scmp.eq.s32.totalorder %s30, 0
      %p176 = por %p174, %p175
      %p177 = scmp.ne.s32.totalorder %s169, %s171
      %p178 = scmp.eq.s32.totalorder %s35, 1
      %p179 = por %p177, %p178
      %p180 = scmp.ne.s32.totalorder %s171, %s172
      %p181 = scmp.eq.s32.totalorder %s35, 0
      %p182 = por %p180, %p181
      %p183 = scmp.ne.s32.totalorder %s171, %s172
      %p184 = scmp.eq.s32.totalorder %s36, 1
      %p185 = por %p183, %p184
      %p187 = scmp.ne.s32.totalorder %s172, %s186
      %p188 = scmp.eq.s32.totalorder %s36, 0
      %p189 = por %p187, %p188
      %s191 = sadd.s32 %s190, 1
      %p194 = scmp.eq.s32.totalorder %s30, 1
      %p195 = scmp.ne.s32.totalorder %s190, %s192
      %p196 = scmp.eq.s32.totalorder %s30, 0
      %p197 = por %p195, %p196
      %p198 = scmp.ne.s32.totalorder %s190, %s192
      %p199 = scmp.eq.s32.totalorder %s35, 1
      %p200 = por %p198, %p199
      %p201 = scmp.ne.s32.totalorder %s192, %s193
      %p202 = scmp.eq.s32.totalorder %s35, 0
      %p203 = por %p201, %p202
      %p204 = scmp.ne.s32.totalorder %s192, %s193
      %p205 = scmp.eq.s32.totalorder %s36, 1
      %p206 = por %p204, %p205
      %p208 = scmp.ne.s32.totalorder %s193, %s207
      %p209 = scmp.eq.s32.totalorder %s36, 0
      %p210 = por %p208, %p209
      %s212 = sadd.s32 %s211, 1
      %p215 = scmp.eq.s32.totalorder %s30, 1
      %p216 = scmp.ne.s32.totalorder %s211, %s213
      %p217 = scmp.eq.s32.totalorder %s30, 0
      %p218 = por %p216, %p217
      %p219 = scmp.ne.s32.totalorder %s211, %s213
      %p220 = scmp.eq.s32.totalorder %s35, 1
      %p221 = por %p219, %p220
      %p222 = scmp.ne.s32.totalorder %s213, %s214
      %p223 = scmp.eq.s32.totalorder %s35, 0
      %p224 = por %p222, %p223
      %p225 = scmp.ne.s32.totalorder %s213, %s214
      %p226 = scmp.eq.s32.totalorder %s36, 1
      %p227 = por %p225, %p226
      %p229 = scmp.ne.s32.totalorder %s214, %s228
      %p230 = scmp.eq.s32.totalorder %s36, 0
      %p231 = por %p229, %p230
      %s233 = sadd.s32 %s232, 1
      %p236 = scmp.eq.s32.totalorder %s30, 1
      %p237 = scmp.ne.s32.totalorder %s232, %s234
      %p238 = scmp.eq.s32.totalorder %s30, 0
      %p239 = por %p237, %p238
      %p240 = scmp.ne.s32.totalorder %s232, %s234
      %p241 = scmp.eq.s32.totalorder %s35, 1
      %p242 = por %p240, %p241
      %p243 = scmp.ne.s32.totalorder %s234, %s235
      %p244 = scmp.eq.s32.totalorder %s35, 0
      %p245 = por %p243, %p244
      %p246 = scmp.ne.s32.totalorder %s234, %s235
      %p247 = scmp.eq.s32.totalorder %s36, 1
      %p248 = por %p246, %p247
      %p250 = scmp.ne.s32.totalorder %s235, %s249
      %p251 = scmp.eq.s32.totalorder %s36, 0
      %p252 = por %p250, %p251
      %s253 = ssub.s32 %s30, %s37
      %p254 = scmp.eq.s32.totalorder %s253, 0
      %s256 = sadd.s32 %s255, 1
      %s257 = scalar_select %p254, %s255, %s256
      %p260 = pneg %p254
      %p261 = scmp.eq.s32.totalorder %s30, 1
      %p262 = por %p260, %p261
      %p263 = scmp.ne.s32.totalorder %s255, %s258
      %p264 = scmp.eq.s32.totalorder %s30, 0
      %p265 = por %p263, %p264
      %p266 = scmp.ne.s32.totalorder %s255, %s258
      %p267 = scmp.eq.s32.totalorder %s35, 1
      %p268 = por %p266, %p267
      %p269 = scmp.ne.s32.totalorder %s258, %s259
      %p270 = scmp.eq.s32.totalorder %s35, 0
      %p271 = por %p269, %p270
      %p272 = scmp.ne.s32.totalorder %s258, %s259
      %p273 = scmp.eq.s32.totalorder %s36, 1
      %p274 = por %p272, %p273
      %p276 = scmp.ne.s32.totalorder %s259, %s275
      %p277 = scmp.eq.s32.totalorder %s36, 0
      %p278 = por %p276, %p277
      %s280 = sadd.s32 %s279, 1
      %p283 = scmp.eq.s32.totalorder %s30, 1
      %p284 = scmp.ne.s32.totalorder %s279, %s281
      %p285 = scmp.eq.s32.totalorder %s30, 0
      %p286 = por %p284, %p285
      %p287 = scmp.ne.s32.totalorder %s279, %s281
      %p288 = scmp.eq.s32.totalorder %s35, 1
      %p289 = por %p287, %p288
      %p290 = scmp.ne.s32.totalorder %s281, %s282
      %p291 = scmp.eq.s32.totalorder %s35, 0
      %p292 = por %p290, %p291
      %p293 = scmp.ne.s32.totalorder %s281, %s282
      %p294 = scmp.eq.s32.totalorder %s36, 1
      %p295 = por %p293, %p294
      %p297 = scmp.ne.s32.totalorder %s282, %s296
      %p298 = scmp.eq.s32.totalorder %s36, 0
      %p299 = por %p297, %p298
      %s301 = sadd.s32 %s300, 1
      %p304 = scmp.eq.s32.totalorder %s30, 1
      %p305 = scmp.ne.s32.totalorder %s300, %s302
      %p306 = scmp.eq.s32.totalorder %s30, 0
      %p307 = por %p305, %p306
      %p308 = scmp.ne.s32.totalorder %s300, %s302
      %p309 = scmp.eq.s32.totalorder %s35, 1
      %p310 = por %p308, %p309
      %p311 = scmp.ne.s32.totalorder %s302, %s303
      %p312 = scmp.eq.s32.totalorder %s35, 0
      %p313 = por %p311, %p312
      %p314 = scmp.ne.s32.totalorder %s302, %s303
      %p315 = scmp.eq.s32.totalorder %s36, 1
      %p316 = por %p314, %p315
      %p318 = scmp.ne.s32.totalorder %s303, %s317
      %p319 = scmp.eq.s32.totalorder %s36, 0
      %p320 = por %p318, %p319
      %s322 = sadd.s32 %s321, 1
      %p325 = scmp.eq.s32.totalorder %s30, 1
      %p326 = scmp.ne.s32.totalorder %s321, %s323
      %p327 = scmp.eq.s32.totalorder %s30, 0
      %p328 = por %p326, %p327
      %p329 = scmp.ne.s32.totalorder %s321, %s323
      %p330 = scmp.eq.s32.totalorder %s35, 1
      %p331 = por %p329, %p330
      %p332 = scmp.ne.s32.totalorder %s323, %s324
      %p333 = scmp.eq.s32.totalorder %s35, 0
      %p334 = por %p332, %p333
      %p335 = scmp.ne.s32.totalorder %s323, %s324
      %p336 = scmp.eq.s32.totalorder %s36, 1
      %p337 = por %p335, %p336
      %p339 = scmp.ne.s32.totalorder %s324, %s338
      %p340 = scmp.eq.s32.totalorder %s36, 0
      %p341 = por %p339, %p340
      %p342 = scmp.le.s32.totalorder 1, %s30
      %p343 = scmp.lt.s32.totalorder %s30, 3
      %p344 = pnand %p342, %p343
      %p345 = pneg %p344
      // Predicated region
      $region9: #{fwm_rnn_forward.1} parent=5 // pred_check
        _
      $region10: #{fwm_rnn_forward.1} parent=5 // pred_check_branch
        %347 = sbr.rel (%p344) target = $region12
      $region11: #{fwm_rnn_forward.1} parent=5 // pred_region
        %s348 = ssub.s32 %s30, 1
        // Predicated region
        $region13: #{fwm_rnn_forward.1} parent=11 // pred_check
          %p349 = pneg %p77
        $region14: #{fwm_rnn_forward.1} parent=11 // pred_check_branch
          %351 = sbr.rel (%p349) target = $region16
        $region15: #{fwm_rnn_forward.1} parent=11 // pred_region
          _
        $region16: #{fwm_rnn_forward.1} parent=11 // pred_fallthru
          _
        // Predicated region
        $region17: #{fwm_rnn_forward.1} parent=11 // pred_check
          %p352 = pneg %p98
        $region18: #{fwm_rnn_forward.1} parent=11 // pred_check_branch
          %354 = sbr.rel (%p352) target = $region20
        $region19: #{fwm_rnn_forward.1} parent=11 // pred_region
          _
        $region20: #{fwm_rnn_forward.1} parent=11 // pred_fallthru
          _
        // Predicated region
        $region21: #{fwm_rnn_forward.1} parent=11 // pred_check
          %p355 = pneg %p119
        $region22: #{fwm_rnn_forward.1} parent=11 // pred_check_branch
          %357 = sbr.rel (%p355) target = $region24
        $region23: #{fwm_rnn_forward.1} parent=11 // pred_region
          %s359 = ssub.s32 512, 512
          %360 = vsyncadd [#allocation6], %s359
          %s361 = sshll.u32 [#allocation5], 4
          %s362 = int_to_ptr.vmem [resolvable:$true] %s361
          %367 = dma.hbm_to_vmem [thread:$0]  %s3, 512, %s362, [#allocation6], 128, 128, 8
        $region24: #{fwm_rnn_forward.1} parent=11 // pred_fallthru
          _
        // Predicated region
        $region25: #{fwm_rnn_forward.1} parent=11 // pred_check
          %p368 = pneg %p140
        $region26: #{fwm_rnn_forward.1} parent=11 // pred_check_branch
          %370 = sbr.rel (%p368) target = $region28
        $region27: #{fwm_rnn_forward.1} parent=11 // pred_region
          %s372 = ssub.s32 640, 640
          %373 = vsyncadd [#allocation6], %s372
          %s374 = sshll.u32 [#allocation7], 4
          %s375 = int_to_ptr.vmem [resolvable:$true] %s374
          %380 = dma.hbm_to_vmem [thread:$0]  %s4, 640, %s375, [#allocation6], 128, 128, 8
        $region28: #{fwm_rnn_forward.1} parent=11 // pred_fallthru
          _
        // Predicated region
        $region29: #{fwm_rnn_forward.1} parent=11 // pred_check
          %p381 = pneg %p161
        $region30: #{fwm_rnn_forward.1} parent=11 // pred_check_branch
          %383 = sbr.rel (%p381) target = $region32
        $region31: #{fwm_rnn_forward.1} parent=11 // pred_region
          _
        $region32: #{fwm_rnn_forward.1} parent=11 // pred_fallthru
          _
        // Predicated region
        $region33: #{fwm_rnn_forward.1} parent=11 // pred_check
          %p384 = pneg %p182
        $region34: #{fwm_rnn_forward.1} parent=11 // pred_check_branch
          %386 = sbr.rel (%p384) target = $region36
        $region35: #{fwm_rnn_forward.1} parent=11 // pred_region
          %s388 = ssub.s32 512, 512
          %389 = vsyncadd [#allocation9], %s388
          %s390 = sshll.u32 [#allocation8], 4
          %s391 = int_to_ptr.vmem [resolvable:$true] %s390
          %396 = dma.hbm_to_vmem [thread:$0]  %s6, 512, %s391, [#allocation9], 128, 128, 8
        $region36: #{fwm_rnn_forward.1} parent=11 // pred_fallthru
          _
        // Predicated region
        $region37: #{fwm_rnn_forward.1} parent=11 // pred_check
          %p397 = pneg %p203
        $region38: #{fwm_rnn_forward.1} parent=11 // pred_check_branch
          %399 = sbr.rel (%p397) target = $region40
        $region39: #{fwm_rnn_forward.1} parent=11 // pred_region
          _
        $region40: #{fwm_rnn_forward.1} parent=11 // pred_fallthru
          _
        // Predicated region
        $region41: #{fwm_rnn_forward.1} parent=11 // pred_check
          %p400 = pneg %p224
        $region42: #{fwm_rnn_forward.1} parent=11 // pred_check_branch
          %402 = sbr.rel (%p400) target = $region44
        $region43: #{fwm_rnn_forward.1} parent=11 // pred_region
          _
        $region44: #{fwm_rnn_forward.1} parent=11 // pred_fallthru
          _
        // Predicated region
        $region45: #{fwm_rnn_forward.1} parent=11 // pred_check
          %p403 = pneg %p245
        $region46: #{fwm_rnn_forward.1} parent=11 // pred_check_branch
          %405 = sbr.rel (%p403) target = $region48
        $region47: #{fwm_rnn_forward.1} parent=11 // pred_region
          _
        $region48: #{fwm_rnn_forward.1} parent=11 // pred_fallthru
          _
      $region12: #{fwm_rnn_forward.1} parent=5 // pred_fallthru
        _
      %p406 = scmp.lt.s32.totalorder %s30, 2
      // Predicated region
      $region49: #{fwm_rnn_forward.1} parent=5 // pred_check
        %p407 = pneg %p406
      $region50: #{fwm_rnn_forward.1} parent=5 // pred_check_branch
        %409 = sbr.rel (%p407) target = $region52
      $region51: #{fwm_rnn_forward.1} parent=5 // pred_region
        // Predicated region
        $region53: #{fwm_rnn_forward.1} parent=51 // pred_check
          %p410 = pneg %p50
        $region54: #{fwm_rnn_forward.1} parent=51 // pred_check_branch
          %412 = sbr.rel (%p410) target = $region56
        $region55: #{fwm_rnn_forward.1} parent=51 // pred_region
          %s413 = sand.u32 %s40, 1
          %s414 = scalar_lea.sflag [#allocation3], %s413
          %s415 = sand.u32 %s40, 1
          %s416 = smul.addr %s415, 8
          %s417 = scalar_lea.vmem [#allocation2], %s416
          %s418 = smul.u32 4, %s30
          %s420 = ssub.s32 128, 128
          %421 = vsyncadd %s414, %s420
          %s422 = smul.addr %s418, 32
          %s423 = scalar_lea.hbm %s0, %s422
          %s424 = sshll.u32 %s417, 4
          %s425 = int_to_ptr.vmem [resolvable:$true] %s424
          %430 = dma.hbm_to_vmem [thread:$0]  %s423, 128, %s425, %s414, 32, 32, 2
        $region56: #{fwm_rnn_forward.1} parent=51 // pred_fallthru
          _
      $region52: #{fwm_rnn_forward.1} parent=5 // pred_fallthru
        _
      %p431 = scmp.le.s32.totalorder 1, %s30
      %p432 = scmp.lt.s32.totalorder %s30, 3
      %p433 = pnand %p431, %p432
      %p434 = pneg %p433
      // Predicated region
      $region57: #{fwm_rnn_forward.1} parent=5 // pred_check
        _
      $region58: #{fwm_rnn_forward.1} parent=5 // pred_check_branch
        %436 = sbr.rel (%p433) target = $region60
      $region59: #{fwm_rnn_forward.1} parent=5 // pred_region
        %s437 = ssub.s32 %s30, 1
        %s438 = sand.u32 %s43, 1
        %s439 = scalar_lea.sflag [#allocation3], %s438
        %s440 = sand.u32 %s43, 1
        %s441 = smul.addr %s440, 8
        %s442 = scalar_lea.vmem [#allocation2], %s441
        // Predicated region
        $region61: #{fwm_rnn_forward.1} parent=59 // pred_check
          %p443 = pneg %p56
        $region62: #{fwm_rnn_forward.1} parent=59 // pred_check_branch
          %445 = sbr.rel (%p443) target = $region64
        $region63: #{fwm_rnn_forward.1} parent=59 // pred_region
          %446 = dma.done %s439, 128
        $region64: #{fwm_rnn_forward.1} parent=59 // pred_fallthru
          _
        // Predicated region
        $region65: #{fwm_rnn_forward.1} parent=59 // pred_check
          %p447 = pneg %p119
        $region66: #{fwm_rnn_forward.1} parent=59 // pred_check_branch
          %449 = sbr.rel (%p447) target = $region68
        $region67: #{fwm_rnn_forward.1} parent=59 // pred_region
          %450 = dma.done [#allocation6], 512
        $region68: #{fwm_rnn_forward.1} parent=59 // pred_fallthru
          _
        // Predicated region
        $region69: #{fwm_rnn_forward.1} parent=59 // pred_check
          %p451 = pneg %p140
        $region70: #{fwm_rnn_forward.1} parent=59 // pred_check_branch
          %453 = sbr.rel (%p451) target = $region72
        $region71: #{fwm_rnn_forward.1} parent=59 // pred_region
          %454 = dma.done [#allocation6], 640
        $region72: #{fwm_rnn_forward.1} parent=59 // pred_fallthru
          _
        // Predicated region
        $region73: #{fwm_rnn_forward.1} parent=59 // pred_check
          %p455 = pneg %p182
        $region74: #{fwm_rnn_forward.1} parent=59 // pred_check_branch
          %457 = sbr.rel (%p455) target = $region76
        $region75: #{fwm_rnn_forward.1} parent=59 // pred_region
          %458 = dma.done [#allocation9], 512
        $region76: #{fwm_rnn_forward.1} parent=59 // pred_fallthru
          _
        %s459 = sand.u32 %s43, 1
        %s460 = scalar_lea.sflag [#allocation3], %s459
        %s461 = sand.u32 %s43, 1
        %s462 = smul.addr %s461, 8
        %s463 = scalar_lea.vmem [#allocation2], %s462
        %p464 = pneg %p56
        %p465 = pneg %p53
        %p466 = pneg %p77
        %p467 = pneg %p74
        %p468 = pneg %p98
        %p469 = pneg %p95
        %p470 = pneg %p119
        %p471 = pneg %p116
        %p472 = pneg %p140
        %p473 = pneg %p137
        %p474 = pneg %p161
        %p475 = pneg %p158
        %p476 = pneg %p182
        %p477 = pneg %p179
        %p478 = pneg %p203
        %p479 = pneg %p200
        %p480 = pneg %p224
        %p481 = pneg %p221
        %p482 = pneg %p245
        %p483 = pneg %p242
        %p484 = pneg %p271
        %p485 = pneg %p268
        %s486 = sand.u32 %s258, 1
        %s487 = scalar_lea.sflag [#allocation4], %s486
        %s488 = sand.u32 %s258, 1
        %s489 = smul.addr %s488, 8
        %s490 = scalar_lea.vmem [#allocation10], %s489
        %p491 = pneg %p292
        %p492 = pneg %p289
        %p493 = pneg %p313
        %p494 = pneg %p310
        %p495 = pneg %p334
        %p496 = pneg %p331
        %s497 = smul.u32 4, %s35
        %s498 = smul.u32 4, %s35
        %p499 = scmp.eq.s32.totalorder %s35, 0
        // Predicated region
        $region77: #{fwm_rnn_forward.1} parent=59 // pred_check
          %p500 = pneg %p499
        $region78: #{fwm_rnn_forward.1} parent=59 // pred_check_branch
          %502 = sbr.rel (%p500) target = $region80
        $region79: #{fwm_rnn_forward.1} parent=59 // pred_region
          %v503 = vld [vmem:[%s1] sm:$0x3]
          %vm504 = vcmask 254976
          %505 = vst.msk [vmem:[#allocation11] sm:$0x3] %vm504, %v503
          %v506 = vld [vmem:[%s2] sm:$0x3]
          %507 = vst.msk [vmem:[#allocation13] sm:$0x3] %vm504, %v506
          %v508 = vld [vmem:[#allocation5] sm:$0xff]
          %v509 = vld [vmem:[#allocation5 + $0x8] sm:$0xff]
          %v510 = vld [vmem:[#allocation5 + $0x10] sm:$0xff]
          %v511 = vld [vmem:[#allocation5 + $0x18] sm:$0xff]
          %vm512 = vcmask 130048
          %513 = vst.msk [vmem:[#allocation14] sm:$0xff] %vm512, %v508
          %514 = vst.msk [vmem:[#allocation14 + $0x8] sm:$0xff] %vm512, %v509
          %515 = vst.msk [vmem:[#allocation14 + $0x10] sm:$0xff] %vm512, %v510
          %516 = vst.msk [vmem:[#allocation14 + $0x18] sm:$0xff] %vm512, %v511
        $region80: #{fwm_rnn_forward.1} parent=59 // pred_fallthru
          _
        %v517 = vld [vmem:[#allocation7] sm:$0xff]
        %v518 = vld [vmem:[#allocation7 + $0x8] sm:$0xff]
        %v519 = vld [vmem:[#allocation7 + $0x10] sm:$0xff]
        %v520 = vld [vmem:[#allocation7 + $0x18] sm:$0xff]
        %v521 = vld [vmem:[#allocation7 + $0x20] sm:$0xff]
        %v522 = vld [vmem:[%s5] sm:$0x1]
        %v523 = vld [vmem:[#allocation8] sm:$0xff]
        %v524 = vld [vmem:[#allocation8 + $0x8] sm:$0xff]
        %v525 = vld [vmem:[#allocation8 + $0x10] sm:$0xff]
        %v526 = vld [vmem:[#allocation8 + $0x18] sm:$0xff]
        %v527 = vld [vmem:[%s7] sm:$0x1]
        %v528 = vld [vmem:[%s8] sm:$0xff]
        %v529 = vld [vmem:[%s8 + $0x8] sm:$0xff]
        %v530 = vld [vmem:[%s9] sm:$0x1]
        %v531 = vld [vmem:[#allocation11] sm:$0x3]
        %v532 = vld [vmem:[#allocation13] sm:$0x3]
        %v533 = vld [vmem:[#allocation14] sm:$0xff]
        %v534 = vld [vmem:[#allocation14 + $0x8] sm:$0xff]
        %v535 = vld [vmem:[#allocation14 + $0x10] sm:$0xff]
        %v536 = vld [vmem:[#allocation14 + $0x18] sm:$0xff]
        %v537 = vld [vmem:[%s442] sm:$0x3]
        %539 = vrot.lane.b32.xlu0 %v531, 8
        %v540 = vpop.permute.xlu0 %539
        %vm542 = vcmask 64512
        %v543 = vsel %vm542, %v537, %v540
        %v545 = vlaneseq
        %v546 = vshrl.u32 %v545, 7
        %v547 = vsub.s32 0, %v546
        %v548 = vrot.slane %v522, %v547
        %vm550 = vcmask 326656
        %v552 = vsel %vm550, %v543, 0
        %554 = vmatprep.subr.mxu0 0.0
        %555 = vmatpush1.msra.mxu0 %v517
        %556 = vmatprep.subr.mxu0 0.0
        %557 = vmatpush1.msra.mxu0 %v518
        %558 = vmatprep.subr.mxu0 0.0
        %559 = vmatpush1.msra.mxu0 %v519
        %560 = vmatprep.subr.mxu0 0.0
        %561 = vmatpush1.msra.mxu0 %v520
        %562 = vmatprep.subr.mxu0 0.0
        %563 = vmatpush1.msra.mxu0 %v521
        %564 = vmatprep.subr.mxu0 0.0
        %565 = vmatpush1.msra.mxu0 0.0
        %566 = vmatprep.subr.mxu0 0.0
        %567 = vmatpush1.msra.mxu0 0.0
        %568 = vmatprep.subr.mxu0 0.0
        %569 = vmatpush1.msra.mxu0 0.0
        %570 = vmatprep.subr.mxu0 0.0
        %571 = vmatpush1.msra.mxu0 0.0
        %572 = vmatprep.subr.mxu0 0.0
        %573 = vmatpush1.msra.mxu0 0.0
        %574 = vmatprep.subr.mxu0 0.0
        %575 = vmatpush1.msra.mxu0 0.0
        %576 = vmatprep.subr.mxu0 0.0
        %577 = vmatpush1.msra.mxu0 0.0
        %578 = vmatprep.subr.mxu0 0.0
        %579 = vmatpush1.msra.mxu0 0.0
        %580 = vmatprep.subr.mxu0 0.0
        %581 = vmatpush1.msra.mxu0 0.0
        %582 = vmatprep.subr.mxu0 0.0
        %583 = vmatpush1.msra.mxu0 0.0
        %584 = vmatprep.subr.mxu0 0.0
        %585 = vmatpush1.msra.mxu0 0.0
        %586 = vmatprep.subr.mxu0 0.0
        %587 = vmatpush1.msra.mxu0 0.0
        %588 = vmatprep.subr.mxu0 0.0
        %589 = vmatpush1.msra.mxu0 0.0
        %590 = vmatprep.subr.mxu0 0.0
        %591 = vmatpush1.msra.mxu0 0.0
        %592 = vmatprep.subr.mxu0 0.0
        %593 = vmatpush1.msra.mxu0 0.0
        %594 = vmatprep.subr.mxu0 0.0
        %595 = vmatpush1.msra.mxu0 0.0
        %596 = vmatprep.subr.mxu0 0.0
        %597 = vmatpush1.msra.mxu0 0.0
        %598 = vmatprep.subr.mxu0 0.0
        %599 = vmatpush1.msra.mxu0 0.0
        %600 = vmatprep.subr.mxu0 0.0
        %601 = vmatpush1.msra.mxu0 0.0
        %602 = vmatprep.subr.mxu0 0.0
        %603 = vmatpush1.msra.mxu0 0.0
        %604 = vmatprep.subr.mxu0 0.0
        %605 = vmatpush1.msra.mxu0 0.0
        %606 = vmatprep.subr.mxu0 0.0
        %607 = vmatpush1.msra.mxu0 0.0
        %608 = vmatprep.subr.mxu0 0.0
        %609 = vmatpush1.msra.mxu0 0.0
        %610 = vmatprep.subr.mxu0 0.0
        %611 = vmatpush1.msra.mxu0 0.0
        %612 = vmatprep.subr.mxu0 0.0
        %613 = vmatpush1.msra.mxu0 0.0
        %614 = vmatprep.subr.mxu0 0.0
        %615 = vmatpush1.msra.mxu0 0.0
        %616 = vmatprep.subr.mxu0 0.0
        %617 = vmatpush1.msra.mxu0 0.0
        %618 = vmatprep.mubr.f32.mxu0 0.0
        %619 = vmatmul.mubr.f32.gmra.mrb[0].mxu0 %v552
        %v620 = vpop.f32.mrb[0].mxu0
        %v621 = vadd.f32 %v548, %v620
        %v622 = vpop.f32.mrb[0].mxu0
        %623 = vdwg.mxu0
        %v624 = vxor.u32 %v621, 2147483648
        %v625 = vmul.f32 %v624, 1.442695
        %v626 = vpow.pop %v625
        %v627 = vadd.f32 %v626, 1.0
        %v628 = vrcp.pop %v627
        %v629 = vmul.f32 1.0, %v628
        %v630 = vtanh.pop %v621
        %632 = vrot.lane.b32.xlu0 %v532, 32
        %v633 = vpop.permute.xlu0 %632
        %v635 = vmul.f32 %v629, %v633
        %637 = vrot.lane.b32.xlu0 %v630, 64
        %v638 = vpop.permute.xlu0 %637
        %v640 = vmul.f32 %v629, %v638
        %642 = vrot.lane.b32.xlu0 %v640, 32
        %v643 = vpop.permute.xlu0 %642
        %v645 = vadd.f32 %v635, %v643
        %v646 = vtanh.pop %v645
        %648 = vrot.lane.b32.xlu0 %v646, 64
        %v649 = vpop.permute.xlu0 %648
        %v651 = vmul.f32 %v629, %v649
        %v653 = vlaneseq
        %v654 = vshrl.u32 %v653, 7
        %v655 = vsub.s32 0, %v654
        %v656 = vrot.slane %v527, %v655
        %659 = vrot.lane.b32.xlu0 %v651, 32
        %v660 = vpop.permute.xlu0 %659
        %vm661 = vcmask 261120
        %v662 = vsel %vm661, %v660, 0
        %664 = vmatprep.subr.mxu0 0.0
        %665 = vmatpush1.msra.mxu0 %v523
        %666 = vmatprep.subr.mxu0 0.0
        %667 = vmatpush1.msra.mxu0 %v524
        %668 = vmatprep.subr.mxu0 0.0
        %669 = vmatpush1.msra.mxu0 %v525
        %670 = vmatprep.subr.mxu0 0.0
        %671 = vmatpush1.msra.mxu0 %v526
        %672 = vmatprep.subr.mxu0 0.0
        %673 = vmatpush1.msra.mxu0 0.0
        %674 = vmatprep.subr.mxu0 0.0
        %675 = vmatpush1.msra.mxu0 0.0
        %676 = vmatprep.subr.mxu0 0.0
        %677 = vmatpush1.msra.mxu0 0.0
        %678 = vmatprep.subr.mxu0 0.0
        %679 = vmatpush1.msra.mxu0 0.0
        %680 = vmatprep.subr.mxu0 0.0
        %681 = vmatpush1.msra.mxu0 0.0
        %682 = vmatprep.subr.mxu0 0.0
        %683 = vmatpush1.msra.mxu0 0.0
        %684 = vmatprep.subr.mxu0 0.0
        %685 = vmatpush1.msra.mxu0 0.0
        %686 = vmatprep.subr.mxu0 0.0
        %687 = vmatpush1.msra.mxu0 0.0
        %688 = vmatprep.subr.mxu0 0.0
        %689 = vmatpush1.msra.mxu0 0.0
        %690 = vmatprep.subr.mxu0 0.0
        %691 = vmatpush1.msra.mxu0 0.0
        %692 = vmatprep.subr.mxu0 0.0
        %693 = vmatpush1.msra.mxu0 0.0
        %694 = vmatprep.subr.mxu0 0.0
        %695 = vmatpush1.msra.mxu0 0.0
        %696 = vmatprep.subr.mxu0 0.0
        %697 = vmatpush1.msra.mxu0 0.0
        %698 = vmatprep.subr.mxu0 0.0
        %699 = vmatpush1.msra.mxu0 0.0
        %700 = vmatprep.subr.mxu0 0.0
        %701 = vmatpush1.msra.mxu0 0.0
        %702 = vmatprep.subr.mxu0 0.0
        %703 = vmatpush1.msra.mxu0 0.0
        %704 = vmatprep.subr.mxu0 0.0
        %705 = vmatpush1.msra.mxu0 0.0
        %706 = vmatprep.subr.mxu0 0.0
        %707 = vmatpush1.msra.mxu0 0.0
        %708 = vmatprep.subr.mxu0 0.0
        %709 = vmatpush1.msra.mxu0 0.0
        %710 = vmatprep.subr.mxu0 0.0
        %711 = vmatpush1.msra.mxu0 0.0
        %712 = vmatprep.subr.mxu0 0.0
        %713 = vmatpush1.msra.mxu0 0.0
        %714 = vmatprep.subr.mxu0 0.0
        %715 = vmatpush1.msra.mxu0 0.0
        %716 = vmatprep.subr.mxu0 0.0
        %717 = vmatpush1.msra.mxu0 0.0
        %718 = vmatprep.subr.mxu0 0.0
        %719 = vmatpush1.msra.mxu0 0.0
        %720 = vmatprep.subr.mxu0 0.0
        %721 = vmatpush1.msra.mxu0 0.0
        %722 = vmatprep.subr.mxu0 0.0
        %723 = vmatpush1.msra.mxu0 0.0
        %724 = vmatprep.subr.mxu0 0.0
        %725 = vmatpush1.msra.mxu0 0.0
        %726 = vmatprep.subr.mxu0 0.0
        %727 = vmatpush1.msra.mxu0 0.0
        %728 = vmatprep.mubr.f32.mxu0 0.0
        %729 = vmatmul.mubr.f32.gmra.mrb[0].mxu0 %v662
        %v730 = vpop.f32.mrb[0].mxu0
        %v731 = vadd.f32 %v656, %v730
        %v732 = vpop.f32.mrb[0].mxu0
        %733 = vdwg.mxu0
        %vm734 = vcmp.gt.f32.partialorder %v731, 0.0
        %v735 = vadd.f32 %v731, 1.0
        %v736 = vmul.f32 %v731, 1.442695
        %v737 = vpow.pop %v736
        %v738 = vsel %vm734, %v735, %v737
        %v739 = vxor.u32 %v731, 2147483648
        %v740 = vmul.f32 %v739, 1.442695
        %v741 = vpow.pop %v740
        %v742 = vadd.f32 %v741, 1.0
        %v743 = vrcp.pop %v742
        %v744 = vmul.f32 1.0, %v743
        %vm745 = vcmask 123904
        %v746 = vsel %vm745, %v738, 0.0
        %747 = vadd.xlane.f32.xlu0 %v746
        %v748 = vpop.xlane.xlu0 %747
        %v749 = vrcp.pop %v748
        %v750 = vmul.f32 %v738, %v749
        %752 = vrot.lane.b32.xlu0 %v738, 95
        %v753 = vpop.permute.xlu0 %752
        %v755 = vsel %vm745, %v753, 0.0
        %756 = vadd.xlane.f32.xlu0 %v755
        %v757 = vpop.xlane.xlu0 %756
        %v758 = vrcp.pop %v757
        %v759 = vmul.f32 %v738, %v758
        %v762 = vunpack.c.l.s4 1966171168
        %v763 = vunpack.c.0.s8 %v762
        %v764 = vlaneseq
        %v765 = vshrl.u32 %v764, 7
        %v766 = vsub.s32 %v763, %v765
        %v767 = vrot.slane %v750, %v766
        %v768 = vcombine.high %v767, %v767
        %v770 = vunpack.c.l.s4 1966171168
        %v771 = vunpack.c.0.s8 %v770
        %v772 = vlaneseq
        %v773 = vshrl.u32 %v772, 7
        %v774 = vsub.s32 %v771, %v773
        %v775 = vrot.slane %v767, %v774
        %v777 = vunpack.c.l.s4 1966171168
        %v778 = vunpack.c.0.s8 %v777
        %v779 = vlaneseq
        %v780 = vshrl.u32 %v779, 7
        %v781 = vsub.s32 %v778, %v780
        %v782 = vrot.slane %v768, %v781
        %v783 = vlaneseq
        %v784 = vshrl.u32 %v783, 7
        %v785 = vsub.s32 0, %v784
        %v786 = vrot.slane %v775, %v785
        %v787 = vlaneseq
        %v788 = vshrl.u32 %v787, 7
        %v789 = vsub.s32 0, %v788
        %v790 = vrot.slane %v782, %v789
        %v793 = vmul.f32 %v533, %v786
        %v794 = vmul.f32 %v534, %v786
        %v795 = vmul.f32 %v535, %v790
        %v796 = vmul.f32 %v536, %v790
        %vm797 = vcmask 130048
        %v798 = vsel %vm797, %v793, 0.0
        %799 = vadd.xlane.f32.xlu0 %v798
        %v800 = vpop.xlane.xlu0 %799
        %v801 = vsel %vm797, %v794, 0.0
        %802 = vadd.xlane.f32.xlu0 %v801
        %v803 = vpop.xlane.xlu0 %802
        %v804 = vsel %vm797, %v795, 0.0
        %805 = vadd.xlane.f32.xlu0 %v804
        %v806 = vpop.xlane.xlu0 %805
        %v807 = vsel %vm797, %v796, 0.0
        %808 = vadd.xlane.f32.xlu0 %v807
        %v809 = vpop.xlane.xlu0 %808
        %v814 = vlaneseq
        %v815 = vand.u32 %v814, 127
        %v816 = vadd.s32 %v815, 4294967280
        %v817 = vlaneseq
        %v818 = vshrl.u32 %v817, 7
        %v819 = vsub.s32 %v816, %v818
        %v820 = vrot.slane %v800, %v819
        %v821 = vadd.s32 %v815, 4294967272
        %v822 = vlaneseq
        %v823 = vshrl.u32 %v822, 7
        %v824 = vsub.s32 %v821, %v823
        %v825 = vrot.slane %v803, %v824
        %vm826 = vcmask 261312
        %v827 = vsel %vm826, %v825, %v820
        %v828 = vlaneseq
        %v829 = vshrl.u32 %v828, 7
        %v830 = vsub.s32 %v816, %v829
        %v831 = vrot.slane %v806, %v830
        %v832 = vlaneseq
        %v833 = vshrl.u32 %v832, 7
        %v834 = vsub.s32 %v821, %v833
        %v835 = vrot.slane %v809, %v834
        %v836 = vsel %vm826, %v835, %v831
        %vm837 = vcmask 1041409
        %v838 = vsel %vm837, %v836, %v827
        %v840 = vsub.f32 %v731, %v838
        %842 = vset.pattern.permute.xlu0 32
        %843 = vperm.xlu0 %842, %v744
        %v844 = vpop.permute.xlu0 %843
        %v846 = vmul.f32 %v844, %v840
        %v847 = vlaneseq
        %v848 = vshrl.u32 %v847, 7
        %v849 = vsub.s32 0, %v848
        %v850 = vrot.slane %v846, %v849
        %s852 = sor.u32 256, 16
        %853 = vbcast.lane.b32.xlu0 %v850, %s852
        %v854 = vpop.permute.xlu0 %853
        %s856 = sor.u32 256, 24
        %857 = vbcast.lane.b32.xlu0 %v850, %s856
        %v858 = vpop.permute.xlu0 %857
        %v859 = vlaneseq
        %v860 = vshrl.u32 %v859, 7
        %v861 = vsub.s32 1, %v860
        %v862 = vrot.slane %v846, %v861
        %s864 = sor.u32 256, 16
        %865 = vbcast.lane.b32.xlu0 %v862, %s864
        %v866 = vpop.permute.xlu0 %865
        %s868 = sor.u32 256, 24
        %869 = vbcast.lane.b32.xlu0 %v862, %s868
        %v870 = vpop.permute.xlu0 %869
        %v871 = vmul.f32 %v854, %v786
        %v872 = vmul.f32 %v858, %v786
        %v873 = vmul.f32 %v866, %v790
        %v874 = vmul.f32 %v870, %v790
        %v875 = vadd.f32 %v533, %v871
        %v876 = vadd.f32 %v534, %v872
        %v877 = vadd.f32 %v535, %v873
        %v878 = vadd.f32 %v536, %v874
        %879 = vset.pattern.permute.xlu0 49
        %880 = vperm.xlu0 %879, %v744
        %v881 = vpop.permute.xlu0 %880
        %v883 = vmul.f32 %v881, %v759
        %v886 = vunpack.c.l.s4 1966171168
        %v887 = vunpack.c.0.s8 %v886
        %v888 = vlaneseq
        %v889 = vshrl.u32 %v888, 7
        %v890 = vsub.s32 %v887, %v889
        %v891 = vrot.slane %v883, %v890
        %v892 = vcombine.high %v891, %v891
        %v894 = vunpack.c.l.s4 1966171168
        %v895 = vunpack.c.0.s8 %v894
        %v896 = vlaneseq
        %v897 = vshrl.u32 %v896, 7
        %v898 = vsub.s32 %v895, %v897
        %v899 = vrot.slane %v891, %v898
        %v901 = vunpack.c.l.s4 1966171168
        %v902 = vunpack.c.0.s8 %v901
        %v903 = vlaneseq
        %v904 = vshrl.u32 %v903, 7
        %v905 = vsub.s32 %v902, %v904
        %v906 = vrot.slane %v892, %v905
        %v907 = vlaneseq
        %v908 = vshrl.u32 %v907, 7
        %v909 = vsub.s32 0, %v908
        %v910 = vrot.slane %v899, %v909
        %v911 = vlaneseq
        %v912 = vshrl.u32 %v911, 7
        %v913 = vsub.s32 0, %v912
        %v914 = vrot.slane %v906, %v913
        %915 = vrot.lane.b32.xlu0 %v910, 95
        %v916 = vpop.permute.xlu0 %915
        %917 = vrot.lane.b32.xlu0 %v914, 95
        %v918 = vpop.permute.xlu0 %917
        %v921 = vmul.f32 %v875, %v916
        %v922 = vmul.f32 %v876, %v916
        %v923 = vmul.f32 %v877, %v918
        %v924 = vmul.f32 %v878, %v918
        %v925 = vsel %vm797, %v921, 0.0
        %926 = vadd.xlane.f32.xlu0 %v925
        %v927 = vpop.xlane.xlu0 %926
        %v928 = vsel %vm797, %v922, 0.0
        %929 = vadd.xlane.f32.xlu0 %v928
        %v930 = vpop.xlane.xlu0 %929
        %v931 = vsel %vm797, %v923, 0.0
        %932 = vadd.xlane.f32.xlu0 %v931
        %v933 = vpop.xlane.xlu0 %932
        %v934 = vsel %vm797, %v924, 0.0
        %935 = vadd.xlane.f32.xlu0 %v934
        %v936 = vpop.xlane.xlu0 %935
        %v938 = vlaneseq
        %v939 = vshrl.u32 %v938, 7
        %v940 = vsub.s32 0, %v939
        %v941 = vrot.slane %v530, %v940
        %v947 = vlaneseq
        %v948 = vshrl.u32 %v947, 7
        %v949 = vsub.s32 %v815, %v948
        %v950 = vrot.slane %v927, %v949
        %v951 = vadd.s32 %v815, 4294967288
        %v952 = vlaneseq
        %v953 = vshrl.u32 %v952, 7
        %v954 = vsub.s32 %v951, %v953
        %v955 = vrot.slane %v930, %v954
        %vm956 = vcmask 130112
        %v957 = vsel %vm956, %v955, %v950
        %v958 = vlaneseq
        %v959 = vshrl.u32 %v958, 7
        %v960 = vsub.s32 %v815, %v959
        %v961 = vrot.slane %v933, %v960
        %v962 = vlaneseq
        %v963 = vshrl.u32 %v962, 7
        %v964 = vsub.s32 %v951, %v963
        %v965 = vrot.slane %v936, %v964
        %v966 = vsel %vm956, %v965, %v961
        %v967 = vsel %vm837, %v966, %v957
        %v968 = vsel %vm797, %v967, 0
        %970 = vmatprep.subr.mxu0 0.0
        %971 = vmatpush1.msra.mxu0 %v528
        %972 = vmatprep.subr.mxu0 0.0
        %973 = vmatpush1.msra.mxu0 %v529
        %974 = vmatprep.subr.mxu0 0.0
        %975 = vmatpush1.msra.mxu0 0.0
        %976 = vmatprep.subr.mxu0 0.0
        %977 = vmatpush1.msra.mxu0 0.0
        %978 = vmatprep.subr.mxu0 0.0
        %979 = vmatpush1.msra.mxu0 0.0
        %980 = vmatprep.subr.mxu0 0.0
        %981 = vmatpush1.msra.mxu0 0.0
        %982 = vmatprep.subr.mxu0 0.0
        %983 = vmatpush1.msra.mxu0 0.0
        %984 = vmatprep.subr.mxu0 0.0
        %985 = vmatpush1.msra.mxu0 0.0
        %986 = vmatprep.subr.mxu0 0.0
        %987 = vmatpush1.msra.mxu0 0.0
        %988 = vmatprep.subr.mxu0 0.0
        %989 = vmatpush1.msra.mxu0 0.0
        %990 = vmatprep.subr.mxu0 0.0
        %991 = vmatpush1.msra.mxu0 0.0
        %992 = vmatprep.subr.mxu0 0.0
        %993 = vmatpush1.msra.mxu0 0.0
        %994 = vmatprep.subr.mxu0 0.0
        %995 = vmatpush1.msra.mxu0 0.0
        %996 = vmatprep.subr.mxu0 0.0
        %997 = vmatpush1.msra.mxu0 0.0
        %998 = vmatprep.subr.mxu0 0.0
        %999 = vmatpush1.msra.mxu0 0.0
        %1000 = vmatprep.subr.mxu0 0.0
        %1001 = vmatpush1.msra.mxu0 0.0
        %1002 = vmatprep.subr.mxu0 0.0
        %1003 = vmatpush1.msra.mxu0 0.0
        %1004 = vmatprep.subr.mxu0 0.0
        %1005 = vmatpush1.msra.mxu0 0.0
        %1006 = vmatprep.subr.mxu0 0.0
        %1007 = vmatpush1.msra.mxu0 0.0
        %1008 = vmatprep.subr.mxu0 0.0
        %1009 = vmatpush1.msra.mxu0 0.0
        %1010 = vmatprep.subr.mxu0 0.0
        %1011 = vmatpush1.msra.mxu0 0.0
        %1012 = vmatprep.subr.mxu0 0.0
        %1013 = vmatpush1.msra.mxu0 0.0
        %1014 = vmatprep.subr.mxu0 0.0
        %1015 = vmatpush1.msra.mxu0 0.0
        %1016 = vmatprep.subr.mxu0 0.0
        %1017 = vmatpush1.msra.mxu0 0.0
        %1018 = vmatprep.subr.mxu0 0.0
        %1019 = vmatpush1.msra.mxu0 0.0
        %1020 = vmatprep.subr.mxu0 0.0
        %1021 = vmatpush1.msra.mxu0 0.0
        %1022 = vmatprep.subr.mxu0 0.0
        %1023 = vmatpush1.msra.mxu0 0.0
        %1024 = vmatprep.subr.mxu0 0.0
        %1025 = vmatpush1.msra.mxu0 0.0
        %1026 = vmatprep.subr.mxu0 0.0
        %1027 = vmatpush1.msra.mxu0 0.0
        %1028 = vmatprep.subr.mxu0 0.0
        %1029 = vmatpush1.msra.mxu0 0.0
        %1030 = vmatprep.subr.mxu0 0.0
        %1031 = vmatpush1.msra.mxu0 0.0
        %1032 = vmatprep.subr.mxu0 0.0
        %1033 = vmatpush1.msra.mxu0 0.0
        %1034 = vmatprep.mubr.f32.mxu0 0.0
        %1035 = vmatmul.mubr.f32.gmra.mrb[0].mxu0 %v968
        %v1036 = vpop.f32.mrb[0].mxu0
        %v1037 = vadd.f32 %v941, %v1036
        %v1038 = vpop.f32.mrb[0].mxu0
        %1039 = vdwg.mxu0
        %1042 = vrot.lane.b32.xlu0 %v1037, 32
        %v1043 = vpop.permute.xlu0 %1042
        %v1045 = vsel %vm661, %v660, %v1043
        %vm1046 = vcmask 517120
        %1047 = vst.msk [vmem:[%s490] sm:$0x3] %vm1046, %v1045
        %s1048 = scalar_lea.vmem %s442, 2 [#allocation2]
        %v1049 = vld [vmem:[%s1048] sm:$0x3]
        %1050 = vrot.lane.b32.xlu0 %v651, 40
        %v1051 = vpop.permute.xlu0 %1050
        %v1053 = vsel %vm542, %v1049, %v1051
        %v1055 = vsel %vm550, %v1053, 0
        %1057 = vmatprep.subr.mxu0 0.0
        %1058 = vmatpush1.msra.mxu0 %v517
        %1059 = vmatprep.subr.mxu0 0.0
        %1060 = vmatpush1.msra.mxu0 %v518
        %1061 = vmatprep.subr.mxu0 0.0
        %1062 = vmatpush1.msra.mxu0 %v519
        %1063 = vmatprep.subr.mxu0 0.0
        %1064 = vmatpush1.msra.mxu0 %v520
        %1065 = vmatprep.subr.mxu0 0.0
        %1066 = vmatpush1.msra.mxu0 %v521
        %1067 = vmatprep.subr.mxu0 0.0
        %1068 = vmatpush1.msra.mxu0 0.0
        %1069 = vmatprep.subr.mxu0 0.0
        %1070 = vmatpush1.msra.mxu0 0.0
        %1071 = vmatprep.subr.mxu0 0.0
        %1072 = vmatpush1.msra.mxu0 0.0
        %1073 = vmatprep.subr.mxu0 0.0
        %1074 = vmatpush1.msra.mxu0 0.0
        %1075 = vmatprep.subr.mxu0 0.0
        %1076 = vmatpush1.msra.mxu0 0.0
        %1077 = vmatprep.subr.mxu0 0.0
        %1078 = vmatpush1.msra.mxu0 0.0
        %1079 = vmatprep.subr.mxu0 0.0
        %1080 = vmatpush1.msra.mxu0 0.0
        %1081 = vmatprep.subr.mxu0 0.0
        %1082 = vmatpush1.msra.mxu0 0.0
        %1083 = vmatprep.subr.mxu0 0.0
        %1084 = vmatpush1.msra.mxu0 0.0
        %1085 = vmatprep.subr.mxu0 0.0
        %1086 = vmatpush1.msra.mxu0 0.0
        %1087 = vmatprep.subr.mxu0 0.0
        %1088 = vmatpush1.msra.mxu0 0.0
        %1089 = vmatprep.subr.mxu0 0.0
        %1090 = vmatpush1.msra.mxu0 0.0
        %1091 = vmatprep.subr.mxu0 0.0
        %1092 = vmatpush1.msra.mxu0 0.0
        %1093 = vmatprep.subr.mxu0 0.0
        %1094 = vmatpush1.msra.mxu0 0.0
        %1095 = vmatprep.subr.mxu0 0.0
        %1096 = vmatpush1.msra.mxu0 0.0
        %1097 = vmatprep.subr.mxu0 0.0
        %1098 = vmatpush1.msra.mxu0 0.0
        %1099 = vmatprep.subr.mxu0 0.0
        %1100 = vmatpush1.msra.mxu0 0.0
        %1101 = vmatprep.subr.mxu0 0.0
        %1102 = vmatpush1.msra.mxu0 0.0
        %1103 = vmatprep.subr.mxu0 0.0
        %1104 = vmatpush1.msra.mxu0 0.0
        %1105 = vmatprep.subr.mxu0 0.0
        %1106 = vmatpush1.msra.mxu0 0.0
        %1107 = vmatprep.subr.mxu0 0.0
        %1108 = vmatpush1.msra.mxu0 0.0
        %1109 = vmatprep.subr.mxu0 0.0
        %1110 = vmatpush1.msra.mxu0 0.0
        %1111 = vmatprep.subr.mxu0 0.0
        %1112 = vmatpush1.msra.mxu0 0.0
        %1113 = vmatprep.subr.mxu0 0.0
        %1114 = vmatpush1.msra.mxu0 0.0
        %1115 = vmatprep.subr.mxu0 0.0
        %1116 = vmatpush1.msra.mxu0 0.0
        %1117 = vmatprep.subr.mxu0 0.0
        %1118 = vmatpush1.msra.mxu0 0.0
        %1119 = vmatprep.subr.mxu0 0.0
        %1120 = vmatpush1.msra.mxu0 0.0
        %1121 = vmatprep.mubr.f32.mxu0 0.0
        %1122 = vmatmul.mubr.f32.gmra.mrb[0].mxu0 %v1055
        %v1123 = vpop.f32.mrb[0].mxu0
        %v1124 = vadd.f32 %v548, %v1123
        %v1125 = vpop.f32.mrb[0].mxu0
        %1126 = vdwg.mxu0
        %v1127 = vxor.u32 %v1124, 2147483648
        %v1128 = vmul.f32 %v1127, 1.442695
        %v1129 = vpow.pop %v1128
        %v1130 = vadd.f32 %v1129, 1.0
        %v1131 = vrcp.pop %v1130
        %v1132 = vmul.f32 1.0, %v1131
        %v1133 = vtanh.pop %v1124
        %v1134 = vmul.f32 %v1132, %v645
        %1136 = vrot.lane.b32.xlu0 %v1133, 64
        %v1137 = vpop.permute.xlu0 %1136
        %v1139 = vmul.f32 %v1132, %v1137
        %1141 = vrot.lane.b32.xlu0 %v1139, 32
        %v1142 = vpop.permute.xlu0 %1141
        %v1144 = vadd.f32 %v1134, %v1142
        %v1145 = vtanh.pop %v1144
        %1147 = vrot.lane.b32.xlu0 %v1145, 64
        %v1148 = vpop.permute.xlu0 %1147
        %v1150 = vmul.f32 %v1132, %v1148
        %1152 = vrot.lane.b32.xlu0 %v1150, 32
        %v1153 = vpop.permute.xlu0 %1152
        %v1154 = vsel %vm661, %v1153, 0
        %1156 = vmatprep.subr.mxu0 0.0
        %1157 = vmatpush1.msra.mxu0 %v523
        %1158 = vmatprep.subr.mxu0 0.0
        %1159 = vmatpush1.msra.mxu0 %v524
        %1160 = vmatprep.subr.mxu0 0.0
        %1161 = vmatpush1.msra.mxu0 %v525
        %1162 = vmatprep.subr.mxu0 0.0
        %1163 = vmatpush1.msra.mxu0 %v526
        %1164 = vmatprep.subr.mxu0 0.0
        %1165 = vmatpush1.msra.mxu0 0.0
        %1166 = vmatprep.subr.mxu0 0.0
        %1167 = vmatpush1.msra.mxu0 0.0
        %1168 = vmatprep.subr.mxu0 0.0
        %1169 = vmatpush1.msra.mxu0 0.0
        %1170 = vmatprep.subr.mxu0 0.0
        %1171 = vmatpush1.msra.mxu0 0.0
        %1172 = vmatprep.subr.mxu0 0.0
        %1173 = vmatpush1.msra.mxu0 0.0
        %1174 = vmatprep.subr.mxu0 0.0
        %1175 = vmatpush1.msra.mxu0 0.0
        %1176 = vmatprep.subr.mxu0 0.0
        %1177 = vmatpush1.msra.mxu0 0.0
        %1178 = vmatprep.subr.mxu0 0.0
        %1179 = vmatpush1.msra.mxu0 0.0
        %1180 = vmatprep.subr.mxu0 0.0
        %1181 = vmatpush1.msra.mxu0 0.0
        %1182 = vmatprep.subr.mxu0 0.0
        %1183 = vmatpush1.msra.mxu0 0.0
        %1184 = vmatprep.subr.mxu0 0.0
        %1185 = vmatpush1.msra.mxu0 0.0
        %1186 = vmatprep.subr.mxu0 0.0
        %1187 = vmatpush1.msra.mxu0 0.0
        %1188 = vmatprep.subr.mxu0 0.0
        %1189 = vmatpush1.msra.mxu0 0.0
        %1190 = vmatprep.subr.mxu0 0.0
        %1191 = vmatpush1.msra.mxu0 0.0
        %1192 = vmatprep.subr.mxu0 0.0
        %1193 = vmatpush1.msra.mxu0 0.0
        %1194 = vmatprep.subr.mxu0 0.0
        %1195 = vmatpush1.msra.mxu0 0.0
        %1196 = vmatprep.subr.mxu0 0.0
        %1197 = vmatpush1.msra.mxu0 0.0
        %1198 = vmatprep.subr.mxu0 0.0
        %1199 = vmatpush1.msra.mxu0 0.0
        %1200 = vmatprep.subr.mxu0 0.0
        %1201 = vmatpush1.msra.mxu0 0.0
        %1202 = vmatprep.subr.mxu0 0.0
        %1203 = vmatpush1.msra.mxu0 0.0
        %1204 = vmatprep.subr.mxu0 0.0
        %1205 = vmatpush1.msra.mxu0 0.0
        %1206 = vmatprep.subr.mxu0 0.0
        %1207 = vmatpush1.msra.mxu0 0.0
        %1208 = vmatprep.subr.mxu0 0.0
        %1209 = vmatpush1.msra.mxu0 0.0
        %1210 = vmatprep.subr.mxu0 0.0
        %1211 = vmatpush1.msra.mxu0 0.0
        %1212 = vmatprep.subr.mxu0 0.0
        %1213 = vmatpush1.msra.mxu0 0.0
        %1214 = vmatprep.subr.mxu0 0.0
        %1215 = vmatpush1.msra.mxu0 0.0
        %1216 = vmatprep.subr.mxu0 0.0
        %1217 = vmatpush1.msra.mxu0 0.0
        %1218 = vmatprep.subr.mxu0 0.0
        %1219 = vmatpush1.msra.mxu0 0.0
        %1220 = vmatprep.mubr.f32.mxu0 0.0
        %1221 = vmatmul.mubr.f32.gmra.mrb[0].mxu0 %v1154
        %v1222 = vpop.f32.mrb[0].mxu0
        %v1223 = vadd.f32 %v656, %v1222
        %v1224 = vpop.f32.mrb[0].mxu0
        %1225 = vdwg.mxu0
        %vm1226 = vcmp.gt.f32.partialorder %v1223, 0.0
        %v1227 = vadd.f32 %v1223, 1.0
        %v1228 = vmul.f32 %v1223, 1.442695
        %v1229 = vpow.pop %v1228
        %v1230 = vsel %vm1226, %v1227, %v1229
        %v1231 = vxor.u32 %v1223, 2147483648
        %v1232 = vmul.f32 %v1231, 1.442695
        %v1233 = vpow.pop %v1232
        %v1234 = vadd.f32 %v1233, 1.0
        %v1235 = vrcp.pop %v1234
        %v1236 = vmul.f32 1.0, %v1235
        %v1237 = vsel %vm745, %v1230, 0.0
        %1238 = vadd.xlane.f32.xlu0 %v1237
        %v1239 = vpop.xlane.xlu0 %1238
        %v1240 = vrcp.pop %v1239
        %v1241 = vmul.f32 %v1230, %v1240
        %1243 = vrot.lane.b32.xlu0 %v1230, 95
        %v1244 = vpop.permute.xlu0 %1243
        %v1246 = vsel %vm745, %v1244, 0.0
        %1247 = vadd.xlane.f32.xlu0 %v1246
        %v1248 = vpop.xlane.xlu0 %1247
        %v1249 = vrcp.pop %v1248
        %v1250 = vmul.f32 %v1230, %v1249
        %v1253 = vunpack.c.l.s4 1966171168
        %v1254 = vunpack.c.0.s8 %v1253
        %v1255 = vlaneseq
        %v1256 = vshrl.u32 %v1255, 7
        %v1257 = vsub.s32 %v1254, %v1256
        %v1258 = vrot.slane %v1241, %v1257
        %v1259 = vcombine.high %v1258, %v1258
        %v1261 = vunpack.c.l.s4 1966171168
        %v1262 = vunpack.c.0.s8 %v1261
        %v1263 = vlaneseq
        %v1264 = vshrl.u32 %v1263, 7
        %v1265 = vsub.s32 %v1262, %v1264
        %v1266 = vrot.slane %v1258, %v1265
        %v1268 = vunpack.c.l.s4 1966171168
        %v1269 = vunpack.c.0.s8 %v1268
        %v1270 = vlaneseq
        %v1271 = vshrl.u32 %v1270, 7
        %v1272 = vsub.s32 %v1269, %v1271
        %v1273 = vrot.slane %v1259, %v1272
        %v1274 = vlaneseq
        %v1275 = vshrl.u32 %v1274, 7
        %v1276 = vsub.s32 0, %v1275
        %v1277 = vrot.slane %v1266, %v1276
        %v1278 = vlaneseq
        %v1279 = vshrl.u32 %v1278, 7
        %v1280 = vsub.s32 0, %v1279
        %v1281 = vrot.slane %v1273, %v1280
        %v1284 = vmul.f32 %v875, %v1277
        %v1285 = vmul.f32 %v876, %v1277
        %v1286 = vmul.f32 %v877, %v1281
        %v1287 = vmul.f32 %v878, %v1281
        %v1288 = vsel %vm797, %v1284, 0.0
        %1289 = vadd.xlane.f32.xlu0 %v1288
        %v1290 = vpop.xlane.xlu0 %1289
        %v1291 = vsel %vm797, %v1285, 0.0
        %1292 = vadd.xlane.f32.xlu0 %v1291
        %v1293 = vpop.xlane.xlu0 %1292
        %v1294 = vsel %vm797, %v1286, 0.0
        %1295 = vadd.xlane.f32.xlu0 %v1294
        %v1296 = vpop.xlane.xlu0 %1295
        %v1297 = vsel %vm797, %v1287, 0.0
        %1298 = vadd.xlane.f32.xlu0 %v1297
        %v1299 = vpop.xlane.xlu0 %1298
        %v1304 = vlaneseq
        %v1305 = vshrl.u32 %v1304, 7
        %v1306 = vsub.s32 %v816, %v1305
        %v1307 = vrot.slane %v1290, %v1306
        %v1308 = vlaneseq
        %v1309 = vshrl.u32 %v1308, 7
        %v1310 = vsub.s32 %v821, %v1309
        %v1311 = vrot.slane %v1293, %v1310
        %v1312 = vsel %vm826, %v1311, %v1307
        %v1313 = vlaneseq
        %v1314 = vshrl.u32 %v1313, 7
        %v1315 = vsub.s32 %v816, %v1314
        %v1316 = vrot.slane %v1296, %v1315
        %v1317 = vlaneseq
        %v1318 = vshrl.u32 %v1317, 7
        %v1319 = vsub.s32 %v821, %v1318
        %v1320 = vrot.slane %v1299, %v1319
        %v1321 = vsel %vm826, %v1320, %v1316
        %v1322 = vsel %vm837, %v1321, %v1312
        %v1324 = vsub.f32 %v1223, %v1322
        %1326 = vset.pattern.permute.xlu0 32
        %1327 = vperm.xlu0 %1326, %v1236
        %v1328 = vpop.permute.xlu0 %1327
        %v1330 = vmul.f32 %v1328, %v1324
        %v1331 = vlaneseq
        %v1332 = vshrl.u32 %v1331, 7
        %v1333 = vsub.s32 0, %v1332
        %v1334 = vrot.slane %v1330, %v1333
        %s1336 = sor.u32 256, 16
        %1337 = vbcast.lane.b32.xlu0 %v1334, %s1336
        %v1338 = vpop.permute.xlu0 %1337
        %s1340 = sor.u32 256, 24
        %1341 = vbcast.lane.b32.xlu0 %v1334, %s1340
        %v1342 = vpop.permute.xlu0 %1341
        %v1343 = vlaneseq
        %v1344 = vshrl.u32 %v1343, 7
        %v1345 = vsub.s32 1, %v1344
        %v1346 = vrot.slane %v1330, %v1345
        %s1348 = sor.u32 256, 16
        %1349 = vbcast.lane.b32.xlu0 %v1346, %s1348
        %v1350 = vpop.permute.xlu0 %1349
        %s1352 = sor.u32 256, 24
        %1353 = vbcast.lane.b32.xlu0 %v1346, %s1352
        %v1354 = vpop.permute.xlu0 %1353
        %v1355 = vmul.f32 %v1338, %v1277
        %v1356 = vmul.f32 %v1342, %v1277
        %v1357 = vmul.f32 %v1350, %v1281
        %v1358 = vmul.f32 %v1354, %v1281
        %v1359 = vadd.f32 %v875, %v1355
        %v1360 = vadd.f32 %v876, %v1356
        %v1361 = vadd.f32 %v877, %v1357
        %v1362 = vadd.f32 %v878, %v1358
        %1363 = vset.pattern.permute.xlu0 49
        %1364 = vperm.xlu0 %1363, %v1236
        %v1365 = vpop.permute.xlu0 %1364
        %v1367 = vmul.f32 %v1365, %v1250
        %v1370 = vunpack.c.l.s4 1966171168
        %v1371 = vunpack.c.0.s8 %v1370
        %v1372 = vlaneseq
        %v1373 = vshrl.u32 %v1372, 7
        %v1374 = vsub.s32 %v1371, %v1373
        %v1375 = vrot.slane %v1367, %v1374
        %v1376 = vcombine.high %v1375, %v1375
        %v1378 = vunpack.c.l.s4 1966171168
        %v1379 = vunpack.c.0.s8 %v1378
        %v1380 = vlaneseq
        %v1381 = vshrl.u32 %v1380, 7
        %v1382 = vsub.s32 %v1379, %v1381
        %v1383 = vrot.slane %v1375, %v1382
        %v1385 = vunpack.c.l.s4 1966171168
        %v1386 = vunpack.c.0.s8 %v1385
        %v1387 = vlaneseq
        %v1388 = vshrl.u32 %v1387, 7
        %v1389 = vsub.s32 %v1386, %v1388
        %v1390 = vrot.slane %v1376, %v1389
        %v1391 = vlaneseq
        %v1392 = vshrl.u32 %v1391, 7
        %v1393 = vsub.s32 0, %v1392
        %v1394 = vrot.slane %v1383, %v1393
        %v1395 = vlaneseq
        %v1396 = vshrl.u32 %v1395, 7
        %v1397 = vsub.s32 0, %v1396
        %v1398 = vrot.slane %v1390, %v1397
        %1399 = vrot.lane.b32.xlu0 %v1394, 95
        %v1400 = vpop.permute.xlu0 %1399
        %1401 = vrot.lane.b32.xlu0 %v1398, 95
        %v1402 = vpop.permute.xlu0 %1401
        %v1405 = vmul.f32 %v1359, %v1400
        %v1406 = vmul.f32 %v1360, %v1400
        %v1407 = vmul.f32 %v1361, %v1402
        %v1408 = vmul.f32 %v1362, %v1402
        %v1409 = vsel %vm797, %v1405, 0.0
        %1410 = vadd.xlane.f32.xlu0 %v1409
        %v1411 = vpop.xlane.xlu0 %1410
        %v1412 = vsel %vm797, %v1406, 0.0
        %1413 = vadd.xlane.f32.xlu0 %v1412
        %v1414 = vpop.xlane.xlu0 %1413
        %v1415 = vsel %vm797, %v1407, 0.0
        %1416 = vadd.xlane.f32.xlu0 %v1415
        %v1417 = vpop.xlane.xlu0 %1416
        %v1418 = vsel %vm797, %v1408, 0.0
        %1419 = vadd.xlane.f32.xlu0 %v1418
        %v1420 = vpop.xlane.xlu0 %1419
        %v1425 = vlaneseq
        %v1426 = vshrl.u32 %v1425, 7
        %v1427 = vsub.s32 %v815, %v1426
        %v1428 = vrot.slane %v1411, %v1427
        %v1429 = vlaneseq
        %v1430 = vshrl.u32 %v1429, 7
        %v1431 = vsub.s32 %v951, %v1430
        %v1432 = vrot.slane %v1414, %v1431
        %v1433 = vsel %vm956, %v1432, %v1428
        %v1434 = vlaneseq
        %v1435 = vshrl.u32 %v1434, 7
        %v1436 = vsub.s32 %v815, %v1435
        %v1437 = vrot.slane %v1417, %v1436
        %v1438 = vlaneseq
        %v1439 = vshrl.u32 %v1438, 7
        %v1440 = vsub.s32 %v951, %v1439
        %v1441 = vrot.slane %v1420, %v1440
        %v1442 = vsel %vm956, %v1441, %v1437
        %v1443 = vsel %vm837, %v1442, %v1433
        %v1444 = vsel %vm797, %v1443, 0
        %1446 = vmatprep.subr.mxu0 0.0
        %1447 = vmatpush1.msra.mxu0 %v528
        %1448 = vmatprep.subr.mxu0 0.0
        %1449 = vmatpush1.msra.mxu0 %v529
        %1450 = vmatprep.subr.mxu0 0.0
        %1451 = vmatpush1.msra.mxu0 0.0
        %1452 = vmatprep.subr.mxu0 0.0
        %1453 = vmatpush1.msra.mxu0 0.0
        %1454 = vmatprep.subr.mxu0 0.0
        %1455 = vmatpush1.msra.mxu0 0.0
        %1456 = vmatprep.subr.mxu0 0.0
        %1457 = vmatpush1.msra.mxu0 0.0
        %1458 = vmatprep.subr.mxu0 0.0
        %1459 = vmatpush1.msra.mxu0 0.0
        %1460 = vmatprep.subr.mxu0 0.0
        %1461 = vmatpush1.msra.mxu0 0.0
        %1462 = vmatprep.subr.mxu0 0.0
        %1463 = vmatpush1.msra.mxu0 0.0
        %1464 = vmatprep.subr.mxu0 0.0
        %1465 = vmatpush1.msra.mxu0 0.0
        %1466 = vmatprep.subr.mxu0 0.0
        %1467 = vmatpush1.msra.mxu0 0.0
        %1468 = vmatprep.subr.mxu0 0.0
        %1469 = vmatpush1.msra.mxu0 0.0
        %1470 = vmatprep.subr.mxu0 0.0
        %1471 = vmatpush1.msra.mxu0 0.0
        %1472 = vmatprep.subr.mxu0 0.0
        %1473 = vmatpush1.msra.mxu0 0.0
        %1474 = vmatprep.subr.mxu0 0.0
        %1475 = vmatpush1.msra.mxu0 0.0
        %1476 = vmatprep.subr.mxu0 0.0
        %1477 = vmatpush1.msra.mxu0 0.0
        %1478 = vmatprep.subr.mxu0 0.0
        %1479 = vmatpush1.msra.mxu0 0.0
        %1480 = vmatprep.subr.mxu0 0.0
        %1481 = vmatpush1.msra.mxu0 0.0
        %1482 = vmatprep.subr.mxu0 0.0
        %1483 = vmatpush1.msra.mxu0 0.0
        %1484 = vmatprep.subr.mxu0 0.0
        %1485 = vmatpush1.msra.mxu0 0.0
        %1486 = vmatprep.subr.mxu0 0.0
        %1487 = vmatpush1.msra.mxu0 0.0
        %1488 = vmatprep.subr.mxu0 0.0
        %1489 = vmatpush1.msra.mxu0 0.0
        %1490 = vmatprep.subr.mxu0 0.0
        %1491 = vmatpush1.msra.mxu0 0.0
        %1492 = vmatprep.subr.mxu0 0.0
        %1493 = vmatpush1.msra.mxu0 0.0
        %1494 = vmatprep.subr.mxu0 0.0
        %1495 = vmatpush1.msra.mxu0 0.0
        %1496 = vmatprep.subr.mxu0 0.0
        %1497 = vmatpush1.msra.mxu0 0.0
        %1498 = vmatprep.subr.mxu0 0.0
        %1499 = vmatpush1.msra.mxu0 0.0
        %1500 = vmatprep.subr.mxu0 0.0
        %1501 = vmatpush1.msra.mxu0 0.0
        %1502 = vmatprep.subr.mxu0 0.0
        %1503 = vmatpush1.msra.mxu0 0.0
        %1504 = vmatprep.subr.mxu0 0.0
        %1505 = vmatpush1.msra.mxu0 0.0
        %1506 = vmatprep.subr.mxu0 0.0
        %1507 = vmatpush1.msra.mxu0 0.0
        %1508 = vmatprep.subr.mxu0 0.0
        %1509 = vmatpush1.msra.mxu0 0.0
        %1510 = vmatprep.mubr.f32.mxu0 0.0
        %1511 = vmatmul.mubr.f32.gmra.mrb[0].mxu0 %v1444
        %v1512 = vpop.f32.mrb[0].mxu0
        %v1513 = vadd.f32 %v941, %v1512
        %v1514 = vpop.f32.mrb[0].mxu0
        %1515 = vdwg.mxu0
        %1518 = vrot.lane.b32.xlu0 %v1513, 32
        %v1519 = vpop.permute.xlu0 %1518
        %v1521 = vsel %vm661, %v1153, %v1519
        %s1522 = scalar_lea.vmem %s490, 2 [#allocation10]
        %1523 = vst.msk [vmem:[%s1522] sm:$0x3] %vm1046, %v1521
        %s1524 = scalar_lea.vmem %s442, 4 [#allocation2]
        %v1525 = vld [vmem:[%s1524] sm:$0x3]
        %1526 = vrot.lane.b32.xlu0 %v1150, 40
        %v1527 = vpop.permute.xlu0 %1526
        %v1529 = vsel %vm542, %v1525, %v1527
        %v1531 = vsel %vm550, %v1529, 0
        %1533 = vmatprep.subr.mxu0 0.0
        %1534 = vmatpush1.msra.mxu0 %v517
        %1535 = vmatprep.subr.mxu0 0.0
        %1536 = vmatpush1.msra.mxu0 %v518
        %1537 = vmatprep.subr.mxu0 0.0
        %1538 = vmatpush1.msra.mxu0 %v519
        %1539 = vmatprep.subr.mxu0 0.0
        %1540 = vmatpush1.msra.mxu0 %v520
        %1541 = vmatprep.subr.mxu0 0.0
        %1542 = vmatpush1.msra.mxu0 %v521
        %1543 = vmatprep.subr.mxu0 0.0
        %1544 = vmatpush1.msra.mxu0 0.0
        %1545 = vmatprep.subr.mxu0 0.0
        %1546 = vmatpush1.msra.mxu0 0.0
        %1547 = vmatprep.subr.mxu0 0.0
        %1548 = vmatpush1.msra.mxu0 0.0
        %1549 = vmatprep.subr.mxu0 0.0
        %1550 = vmatpush1.msra.mxu0 0.0
        %1551 = vmatprep.subr.mxu0 0.0
        %1552 = vmatpush1.msra.mxu0 0.0
        %1553 = vmatprep.subr.mxu0 0.0
        %1554 = vmatpush1.msra.mxu0 0.0
        %1555 = vmatprep.subr.mxu0 0.0
        %1556 = vmatpush1.msra.mxu0 0.0
        %1557 = vmatprep.subr.mxu0 0.0
        %1558 = vmatpush1.msra.mxu0 0.0
        %1559 = vmatprep.subr.mxu0 0.0
        %1560 = vmatpush1.msra.mxu0 0.0
        %1561 = vmatprep.subr.mxu0 0.0
        %1562 = vmatpush1.msra.mxu0 0.0
        %1563 = vmatprep.subr.mxu0 0.0
        %1564 = vmatpush1.msra.mxu0 0.0
        %1565 = vmatprep.subr.mxu0 0.0
        %1566 = vmatpush1.msra.mxu0 0.0
        %1567 = vmatprep.subr.mxu0 0.0
        %1568 = vmatpush1.msra.mxu0 0.0
        %1569 = vmatprep.subr.mxu0 0.0
        %1570 = vmatpush1.msra.mxu0 0.0
        %1571 = vmatprep.subr.mxu0 0.0
        %1572 = vmatpush1.msra.mxu0 0.0
        %1573 = vmatprep.subr.mxu0 0.0
        %1574 = vmatpush1.msra.mxu0 0.0
        %1575 = vmatprep.subr.mxu0 0.0
        %1576 = vmatpush1.msra.mxu0 0.0
        %1577 = vmatprep.subr.mxu0 0.0
        %1578 = vmatpush1.msra.mxu0 0.0
        %1579 = vmatprep.subr.mxu0 0.0
        %1580 = vmatpush1.msra.mxu0 0.0
        %1581 = vmatprep.subr.mxu0 0.0
        %1582 = vmatpush1.msra.mxu0 0.0
        %1583 = vmatprep.subr.mxu0 0.0
        %1584 = vmatpush1.msra.mxu0 0.0
        %1585 = vmatprep.subr.mxu0 0.0
        %1586 = vmatpush1.msra.mxu0 0.0
        %1587 = vmatprep.subr.mxu0 0.0
        %1588 = vmatpush1.msra.mxu0 0.0
        %1589 = vmatprep.subr.mxu0 0.0
        %1590 = vmatpush1.msra.mxu0 0.0
        %1591 = vmatprep.subr.mxu0 0.0
        %1592 = vmatpush1.msra.mxu0 0.0
        %1593 = vmatprep.subr.mxu0 0.0
        %1594 = vmatpush1.msra.mxu0 0.0
        %1595 = vmatprep.subr.mxu0 0.0
        %1596 = vmatpush1.msra.mxu0 0.0
        %1597 = vmatprep.mubr.f32.mxu0 0.0
        %1598 = vmatmul.mubr.f32.gmra.mrb[0].mxu0 %v1531
        %v1599 = vpop.f32.mrb[0].mxu0
        %v1600 = vadd.f32 %v548, %v1599
        %v1601 = vpop.f32.mrb[0].mxu0
        %1602 = vdwg.mxu0
        %v1603 = vxor.u32 %v1600, 2147483648
        %v1604 = vmul.f32 %v1603, 1.442695
        %v1605 = vpow.pop %v1604
        %v1606 = vadd.f32 %v1605, 1.0
        %v1607 = vrcp.pop %v1606
        %v1608 = vmul.f32 1.0, %v1607
        %v1609 = vtanh.pop %v1600
        %v1610 = vmul.f32 %v1608, %v1144
        %1612 = vrot.lane.b32.xlu0 %v1609, 64
        %v1613 = vpop.permute.xlu0 %1612
        %v1615 = vmul.f32 %v1608, %v1613
        %1617 = vrot.lane.b32.xlu0 %v1615, 32
        %v1618 = vpop.permute.xlu0 %1617
        %v1620 = vadd.f32 %v1610, %v1618
        %v1621 = vtanh.pop %v1620
        %1623 = vrot.lane.b32.xlu0 %v1621, 64
        %v1624 = vpop.permute.xlu0 %1623
        %v1626 = vmul.f32 %v1608, %v1624
        %1628 = vrot.lane.b32.xlu0 %v1626, 32
        %v1629 = vpop.permute.xlu0 %1628
        %v1630 = vsel %vm661, %v1629, 0
        %1632 = vmatprep.subr.mxu0 0.0
        %1633 = vmatpush1.msra.mxu0 %v523
        %1634 = vmatprep.subr.mxu0 0.0
        %1635 = vmatpush1.msra.mxu0 %v524
        %1636 = vmatprep.subr.mxu0 0.0
        %1637 = vmatpush1.msra.mxu0 %v525
        %1638 = vmatprep.subr.mxu0 0.0
        %1639 = vmatpush1.msra.mxu0 %v526
        %1640 = vmatprep.subr.mxu0 0.0
        %1641 = vmatpush1.msra.mxu0 0.0
        %1642 = vmatprep.subr.mxu0 0.0
        %1643 = vmatpush1.msra.mxu0 0.0
        %1644 = vmatprep.subr.mxu0 0.0
        %1645 = vmatpush1.msra.mxu0 0.0
        %1646 = vmatprep.subr.mxu0 0.0
        %1647 = vmatpush1.msra.mxu0 0.0
        %1648 = vmatprep.subr.mxu0 0.0
        %1649 = vmatpush1.msra.mxu0 0.0
        %1650 = vmatprep.subr.mxu0 0.0
        %1651 = vmatpush1.msra.mxu0 0.0
        %1652 = vmatprep.subr.mxu0 0.0
        %1653 = vmatpush1.msra.mxu0 0.0
        %1654 = vmatprep.subr.mxu0 0.0
        %1655 = vmatpush1.msra.mxu0 0.0
        %1656 = vmatprep.subr.mxu0 0.0
        %1657 = vmatpush1.msra.mxu0 0.0
        %1658 = vmatprep.subr.mxu0 0.0
        %1659 = vmatpush1.msra.mxu0 0.0
        %1660 = vmatprep.subr.mxu0 0.0
        %1661 = vmatpush1.msra.mxu0 0.0
        %1662 = vmatprep.subr.mxu0 0.0
        %1663 = vmatpush1.msra.mxu0 0.0
        %1664 = vmatprep.subr.mxu0 0.0
        %1665 = vmatpush1.msra.mxu0 0.0
        %1666 = vmatprep.subr.mxu0 0.0
        %1667 = vmatpush1.msra.mxu0 0.0
        %1668 = vmatprep.subr.mxu0 0.0
        %1669 = vmatpush1.msra.mxu0 0.0
        %1670 = vmatprep.subr.mxu0 0.0
        %1671 = vmatpush1.msra.mxu0 0.0
        %1672 = vmatprep.subr.mxu0 0.0
        %1673 = vmatpush1.msra.mxu0 0.0
        %1674 = vmatprep.subr.mxu0 0.0
        %1675 = vmatpush1.msra.mxu0 0.0
        %1676 = vmatprep.subr.mxu0 0.0
        %1677 = vmatpush1.msra.mxu0 0.0
        %1678 = vmatprep.subr.mxu0 0.0
        %1679 = vmatpush1.msra.mxu0 0.0
        %1680 = vmatprep.subr.mxu0 0.0
        %1681 = vmatpush1.msra.mxu0 0.0
        %1682 = vmatprep.subr.mxu0 0.0
        %1683 = vmatpush1.msra.mxu0 0.0
        %1684 = vmatprep.subr.mxu0 0.0
        %1685 = vmatpush1.msra.mxu0 0.0
        %1686 = vmatprep.subr.mxu0 0.0
        %1687 = vmatpush1.msra.mxu0 0.0
        %1688 = vmatprep.subr.mxu0 0.0
        %1689 = vmatpush1.msra.mxu0 0.0
        %1690 = vmatprep.subr.mxu0 0.0
        %1691 = vmatpush1.msra.mxu0 0.0
        %1692 = vmatprep.subr.mxu0 0.0
        %1693 = vmatpush1.msra.mxu0 0.0
        %1694 = vmatprep.subr.mxu0 0.0
        %1695 = vmatpush1.msra.mxu0 0.0
        %1696 = vmatprep.mubr.f32.mxu0 0.0
        %1697 = vmatmul.mubr.f32.gmra.mrb[0].mxu0 %v1630
        %v1698 = vpop.f32.mrb[0].mxu0
        %v1699 = vadd.f32 %v656, %v1698
        %v1700 = vpop.f32.mrb[0].mxu0
        %1701 = vdwg.mxu0
        %vm1702 = vcmp.gt.f32.partialorder %v1699, 0.0
        %v1703 = vadd.f32 %v1699, 1.0
        %v1704 = vmul.f32 %v1699, 1.442695
        %v1705 = vpow.pop %v1704
        %v1706 = vsel %vm1702, %v1703, %v1705
        %v1707 = vxor.u32 %v1699, 2147483648
        %v1708 = vmul.f32 %v1707, 1.442695
        %v1709 = vpow.pop %v1708
        %v1710 = vadd.f32 %v1709, 1.0
        %v1711 = vrcp.pop %v1710
        %v1712 = vmul.f32 1.0, %v1711
        %v1713 = vsel %vm745, %v1706, 0.0
        %1714 = vadd.xlane.f32.xlu0 %v1713
        %v1715 = vpop.xlane.xlu0 %1714
        %v1716 = vrcp.pop %v1715
        %v1717 = vmul.f32 %v1706, %v1716
        %1719 = vrot.lane.b32.xlu0 %v1706, 95
        %v1720 = vpop.permute.xlu0 %1719
        %v1722 = vsel %vm745, %v1720, 0.0
        %1723 = vadd.xlane.f32.xlu0 %v1722
        %v1724 = vpop.xlane.xlu0 %1723
        %v1725 = vrcp.pop %v1724
        %v1726 = vmul.f32 %v1706, %v1725
        %v1729 = vunpack.c.l.s4 1966171168
        %v1730 = vunpack.c.0.s8 %v1729
        %v1731 = vlaneseq
        %v1732 = vshrl.u32 %v1731, 7
        %v1733 = vsub.s32 %v1730, %v1732
        %v1734 = vrot.slane %v1717, %v1733
        %v1735 = vcombine.high %v1734, %v1734
        %v1737 = vunpack.c.l.s4 1966171168
        %v1738 = vunpack.c.0.s8 %v1737
        %v1739 = vlaneseq
        %v1740 = vshrl.u32 %v1739, 7
        %v1741 = vsub.s32 %v1738, %v1740
        %v1742 = vrot.slane %v1734, %v1741
        %v1744 = vunpack.c.l.s4 1966171168
        %v1745 = vunpack.c.0.s8 %v1744
        %v1746 = vlaneseq
        %v1747 = vshrl.u32 %v1746, 7
        %v1748 = vsub.s32 %v1745, %v1747
        %v1749 = vrot.slane %v1735, %v1748
        %v1750 = vlaneseq
        %v1751 = vshrl.u32 %v1750, 7
        %v1752 = vsub.s32 0, %v1751
        %v1753 = vrot.slane %v1742, %v1752
        %v1754 = vlaneseq
        %v1755 = vshrl.u32 %v1754, 7
        %v1756 = vsub.s32 0, %v1755
        %v1757 = vrot.slane %v1749, %v1756
        %v1760 = vmul.f32 %v1359, %v1753
        %v1761 = vmul.f32 %v1360, %v1753
        %v1762 = vmul.f32 %v1361, %v1757
        %v1763 = vmul.f32 %v1362, %v1757
        %v1764 = vsel %vm797, %v1760, 0.0
        %1765 = vadd.xlane.f32.xlu0 %v1764
        %v1766 = vpop.xlane.xlu0 %1765
        %v1767 = vsel %vm797, %v1761, 0.0
        %1768 = vadd.xlane.f32.xlu0 %v1767
        %v1769 = vpop.xlane.xlu0 %1768
        %v1770 = vsel %vm797, %v1762, 0.0
        %1771 = vadd.xlane.f32.xlu0 %v1770
        %v1772 = vpop.xlane.xlu0 %1771
        %v1773 = vsel %vm797, %v1763, 0.0
        %1774 = vadd.xlane.f32.xlu0 %v1773
        %v1775 = vpop.xlane.xlu0 %1774
        %v1780 = vlaneseq
        %v1781 = vshrl.u32 %v1780, 7
        %v1782 = vsub.s32 %v816, %v1781
        %v1783 = vrot.slane %v1766, %v1782
        %v1784 = vlaneseq
        %v1785 = vshrl.u32 %v1784, 7
        %v1786 = vsub.s32 %v821, %v1785
        %v1787 = vrot.slane %v1769, %v1786
        %v1788 = vsel %vm826, %v1787, %v1783
        %v1789 = vlaneseq
        %v1790 = vshrl.u32 %v1789, 7
        %v1791 = vsub.s32 %v816, %v1790
        %v1792 = vrot.slane %v1772, %v1791
        %v1793 = vlaneseq
        %v1794 = vshrl.u32 %v1793, 7
        %v1795 = vsub.s32 %v821, %v1794
        %v1796 = vrot.slane %v1775, %v1795
        %v1797 = vsel %vm826, %v1796, %v1792
        %v1798 = vsel %vm837, %v1797, %v1788
        %v1800 = vsub.f32 %v1699, %v1798
        %1802 = vset.pattern.permute.xlu0 32
        %1803 = vperm.xlu0 %1802, %v1712
        %v1804 = vpop.permute.xlu0 %1803
        %v1806 = vmul.f32 %v1804, %v1800
        %v1807 = vlaneseq
        %v1808 = vshrl.u32 %v1807, 7
        %v1809 = vsub.s32 0, %v1808
        %v1810 = vrot.slane %v1806, %v1809
        %s1812 = sor.u32 256, 16
        %1813 = vbcast.lane.b32.xlu0 %v1810, %s1812
        %v1814 = vpop.permute.xlu0 %1813
        %s1816 = sor.u32 256, 24
        %1817 = vbcast.lane.b32.xlu0 %v1810, %s1816
        %v1818 = vpop.permute.xlu0 %1817
        %v1819 = vlaneseq
        %v1820 = vshrl.u32 %v1819, 7
        %v1821 = vsub.s32 1, %v1820
        %v1822 = vrot.slane %v1806, %v1821
        %s1824 = sor.u32 256, 16
        %1825 = vbcast.lane.b32.xlu0 %v1822, %s1824
        %v1826 = vpop.permute.xlu0 %1825
        %s1828 = sor.u32 256, 24
        %1829 = vbcast.lane.b32.xlu0 %v1822, %s1828
        %v1830 = vpop.permute.xlu0 %1829
        %v1831 = vmul.f32 %v1814, %v1753
        %v1832 = vmul.f32 %v1818, %v1753
        %v1833 = vmul.f32 %v1826, %v1757
        %v1834 = vmul.f32 %v1830, %v1757
        %v1835 = vadd.f32 %v1359, %v1831
        %v1836 = vadd.f32 %v1360, %v1832
        %v1837 = vadd.f32 %v1361, %v1833
        %v1838 = vadd.f32 %v1362, %v1834
        %1839 = vset.pattern.permute.xlu0 49
        %1840 = vperm.xlu0 %1839, %v1712
        %v1841 = vpop.permute.xlu0 %1840
        %v1843 = vmul.f32 %v1841, %v1726
        %v1846 = vunpack.c.l.s4 1966171168
        %v1847 = vunpack.c.0.s8 %v1846
        %v1848 = vlaneseq
        %v1849 = vshrl.u32 %v1848, 7
        %v1850 = vsub.s32 %v1847, %v1849
        %v1851 = vrot.slane %v1843, %v1850
        %v1852 = vcombine.high %v1851, %v1851
        %v1854 = vunpack.c.l.s4 1966171168
        %v1855 = vunpack.c.0.s8 %v1854
        %v1856 = vlaneseq
        %v1857 = vshrl.u32 %v1856, 7
        %v1858 = vsub.s32 %v1855, %v1857
        %v1859 = vrot.slane %v1851, %v1858
        %v1861 = vunpack.c.l.s4 1966171168
        %v1862 = vunpack.c.0.s8 %v1861
        %v1863 = vlaneseq
        %v1864 = vshrl.u32 %v1863, 7
        %v1865 = vsub.s32 %v1862, %v1864
        %v1866 = vrot.slane %v1852, %v1865
        %v1867 = vlaneseq
        %v1868 = vshrl.u32 %v1867, 7
        %v1869 = vsub.s32 0, %v1868
        %v1870 = vrot.slane %v1859, %v1869
        %v1871 = vlaneseq
        %v1872 = vshrl.u32 %v1871, 7
        %v1873 = vsub.s32 0, %v1872
        %v1874 = vrot.slane %v1866, %v1873
        %1875 = vrot.lane.b32.xlu0 %v1870, 95
        %v1876 = vpop.permute.xlu0 %1875
        %1877 = vrot.lane.b32.xlu0 %v1874, 95
        %v1878 = vpop.permute.xlu0 %1877
        %v1881 = vmul.f32 %v1835, %v1876
        %v1882 = vmul.f32 %v1836, %v1876
        %v1883 = vmul.f32 %v1837, %v1878
        %v1884 = vmul.f32 %v1838, %v1878
        %v1885 = vsel %vm797, %v1881, 0.0
        %1886 = vadd.xlane.f32.xlu0 %v1885
        %v1887 = vpop.xlane.xlu0 %1886
        %v1888 = vsel %vm797, %v1882, 0.0
        %1889 = vadd.xlane.f32.xlu0 %v1888
        %v1890 = vpop.xlane.xlu0 %1889
        %v1891 = vsel %vm797, %v1883, 0.0
        %1892 = vadd.xlane.f32.xlu0 %v1891
        %v1893 = vpop.xlane.xlu0 %1892
        %v1894 = vsel %vm797, %v1884, 0.0
        %1895 = vadd.xlane.f32.xlu0 %v1894
        %v1896 = vpop.xlane.xlu0 %1895
        %v1901 = vlaneseq
        %v1902 = vshrl.u32 %v1901, 7
        %v1903 = vsub.s32 %v815, %v1902
        %v1904 = vrot.slane %v1887, %v1903
        %v1905 = vlaneseq
        %v1906 = vshrl.u32 %v1905, 7
        %v1907 = vsub.s32 %v951, %v1906
        %v1908 = vrot.slane %v1890, %v1907
        %v1909 = vsel %vm956, %v1908, %v1904
        %v1910 = vlaneseq
        %v1911 = vshrl.u32 %v1910, 7
        %v1912 = vsub.s32 %v815, %v1911
        %v1913 = vrot.slane %v1893, %v1912
        %v1914 = vlaneseq
        %v1915 = vshrl.u32 %v1914, 7
        %v1916 = vsub.s32 %v951, %v1915
        %v1917 = vrot.slane %v1896, %v1916
        %v1918 = vsel %vm956, %v1917, %v1913
        %v1919 = vsel %vm837, %v1918, %v1909
        %v1920 = vsel %vm797, %v1919, 0
        %1922 = vmatprep.subr.mxu0 0.0
        %1923 = vmatpush1.msra.mxu0 %v528
        %1924 = vmatprep.subr.mxu0 0.0
        %1925 = vmatpush1.msra.mxu0 %v529
        %1926 = vmatprep.subr.mxu0 0.0
        %1927 = vmatpush1.msra.mxu0 0.0
        %1928 = vmatprep.subr.mxu0 0.0
        %1929 = vmatpush1.msra.mxu0 0.0
        %1930 = vmatprep.subr.mxu0 0.0
        %1931 = vmatpush1.msra.mxu0 0.0
        %1932 = vmatprep.subr.mxu0 0.0
        %1933 = vmatpush1.msra.mxu0 0.0
        %1934 = vmatprep.subr.mxu0 0.0
        %1935 = vmatpush1.msra.mxu0 0.0
        %1936 = vmatprep.subr.mxu0 0.0
        %1937 = vmatpush1.msra.mxu0 0.0
        %1938 = vmatprep.subr.mxu0 0.0
        %1939 = vmatpush1.msra.mxu0 0.0
        %1940 = vmatprep.subr.mxu0 0.0
        %1941 = vmatpush1.msra.mxu0 0.0
        %1942 = vmatprep.subr.mxu0 0.0
        %1943 = vmatpush1.msra.mxu0 0.0
        %1944 = vmatprep.subr.mxu0 0.0
        %1945 = vmatpush1.msra.mxu0 0.0
        %1946 = vmatprep.subr.mxu0 0.0
        %1947 = vmatpush1.msra.mxu0 0.0
        %1948 = vmatprep.subr.mxu0 0.0
        %1949 = vmatpush1.msra.mxu0 0.0
        %1950 = vmatprep.subr.mxu0 0.0
        %1951 = vmatpush1.msra.mxu0 0.0
        %1952 = vmatprep.subr.mxu0 0.0
        %1953 = vmatpush1.msra.mxu0 0.0
        %1954 = vmatprep.subr.mxu0 0.0
        %1955 = vmatpush1.msra.mxu0 0.0
        %1956 = vmatprep.subr.mxu0 0.0
        %1957 = vmatpush1.msra.mxu0 0.0
        %1958 = vmatprep.subr.mxu0 0.0
        %1959 = vmatpush1.msra.mxu0 0.0
        %1960 = vmatprep.subr.mxu0 0.0
        %1961 = vmatpush1.msra.mxu0 0.0
        %1962 = vmatprep.subr.mxu0 0.0
        %1963 = vmatpush1.msra.mxu0 0.0
        %1964 = vmatprep.subr.mxu0 0.0
        %1965 = vmatpush1.msra.mxu0 0.0
        %1966 = vmatprep.subr.mxu0 0.0
        %1967 = vmatpush1.msra.mxu0 0.0
        %1968 = vmatprep.subr.mxu0 0.0
        %1969 = vmatpush1.msra.mxu0 0.0
        %1970 = vmatprep.subr.mxu0 0.0
        %1971 = vmatpush1.msra.mxu0 0.0
        %1972 = vmatprep.subr.mxu0 0.0
        %1973 = vmatpush1.msra.mxu0 0.0
        %1974 = vmatprep.subr.mxu0 0.0
        %1975 = vmatpush1.msra.mxu0 0.0
        %1976 = vmatprep.subr.mxu0 0.0
        %1977 = vmatpush1.msra.mxu0 0.0
        %1978 = vmatprep.subr.mxu0 0.0
        %1979 = vmatpush1.msra.mxu0 0.0
        %1980 = vmatprep.subr.mxu0 0.0
        %1981 = vmatpush1.msra.mxu0 0.0
        %1982 = vmatprep.subr.mxu0 0.0
        %1983 = vmatpush1.msra.mxu0 0.0
        %1984 = vmatprep.subr.mxu0 0.0
        %1985 = vmatpush1.msra.mxu0 0.0
        %1986 = vmatprep.mubr.f32.mxu0 0.0
        %1987 = vmatmul.mubr.f32.gmra.mrb[0].mxu0 %v1920
        %v1988 = vpop.f32.mrb[0].mxu0
        %v1989 = vadd.f32 %v941, %v1988
        %v1990 = vpop.f32.mrb[0].mxu0
        %1991 = vdwg.mxu0
        %1994 = vrot.lane.b32.xlu0 %v1989, 32
        %v1995 = vpop.permute.xlu0 %1994
        %v1997 = vsel %vm661, %v1629, %v1995
        %s1998 = scalar_lea.vmem %s490, 4 [#allocation10]
        %1999 = vst.msk [vmem:[%s1998] sm:$0x3] %vm1046, %v1997
        %s2000 = scalar_lea.vmem %s442, 6 [#allocation2]
        %v2001 = vld [vmem:[%s2000] sm:$0x3]
        %2002 = vrot.lane.b32.xlu0 %v1626, 40
        %v2003 = vpop.permute.xlu0 %2002
        %v2005 = vsel %vm542, %v2001, %v2003
        %v2007 = vsel %vm550, %v2005, 0
        %2009 = vmatprep.subr.mxu0 0.0
        %2010 = vmatpush1.msra.mxu0 %v517
        %2011 = vmatprep.subr.mxu0 0.0
        %2012 = vmatpush1.msra.mxu0 %v518
        %2013 = vmatprep.subr.mxu0 0.0
        %2014 = vmatpush1.msra.mxu0 %v519
        %2015 = vmatprep.subr.mxu0 0.0
        %2016 = vmatpush1.msra.mxu0 %v520
        %2017 = vmatprep.subr.mxu0 0.0
        %2018 = vmatpush1.msra.mxu0 %v521
        %2019 = vmatprep.subr.mxu0 0.0
        %2020 = vmatpush1.msra.mxu0 0.0
        %2021 = vmatprep.subr.mxu0 0.0
        %2022 = vmatpush1.msra.mxu0 0.0
        %2023 = vmatprep.subr.mxu0 0.0
        %2024 = vmatpush1.msra.mxu0 0.0
        %2025 = vmatprep.subr.mxu0 0.0
        %2026 = vmatpush1.msra.mxu0 0.0
        %2027 = vmatprep.subr.mxu0 0.0
        %2028 = vmatpush1.msra.mxu0 0.0
        %2029 = vmatprep.subr.mxu0 0.0
        %2030 = vmatpush1.msra.mxu0 0.0
        %2031 = vmatprep.subr.mxu0 0.0
        %2032 = vmatpush1.msra.mxu0 0.0
        %2033 = vmatprep.subr.mxu0 0.0
        %2034 = vmatpush1.msra.mxu0 0.0
        %2035 = vmatprep.subr.mxu0 0.0
        %2036 = vmatpush1.msra.mxu0 0.0
        %2037 = vmatprep.subr.mxu0 0.0
        %2038 = vmatpush1.msra.mxu0 0.0
        %2039 = vmatprep.subr.mxu0 0.0
        %2040 = vmatpush1.msra.mxu0 0.0
        %2041 = vmatprep.subr.mxu0 0.0
        %2042 = vmatpush1.msra.mxu0 0.0
        %2043 = vmatprep.subr.mxu0 0.0
        %2044 = vmatpush1.msra.mxu0 0.0
        %2045 = vmatprep.subr.mxu0 0.0
        %2046 = vmatpush1.msra.mxu0 0.0
        %2047 = vmatprep.subr.mxu0 0.0
        %2048 = vmatpush1.msra.mxu0 0.0
        %2049 = vmatprep.subr.mxu0 0.0
        %2050 = vmatpush1.msra.mxu0 0.0
        %2051 = vmatprep.subr.mxu0 0.0
        %2052 = vmatpush1.msra.mxu0 0.0
        %2053 = vmatprep.subr.mxu0 0.0
        %2054 = vmatpush1.msra.mxu0 0.0
        %2055 = vmatprep.subr.mxu0 0.0
        %2056 = vmatpush1.msra.mxu0 0.0
        %2057 = vmatprep.subr.mxu0 0.0
        %2058 = vmatpush1.msra.mxu0 0.0
        %2059 = vmatprep.subr.mxu0 0.0
        %2060 = vmatpush1.msra.mxu0 0.0
        %2061 = vmatprep.subr.mxu0 0.0
        %2062 = vmatpush1.msra.mxu0 0.0
        %2063 = vmatprep.subr.mxu0 0.0
        %2064 = vmatpush1.msra.mxu0 0.0
        %2065 = vmatprep.subr.mxu0 0.0
        %2066 = vmatpush1.msra.mxu0 0.0
        %2067 = vmatprep.subr.mxu0 0.0
        %2068 = vmatpush1.msra.mxu0 0.0
        %2069 = vmatprep.subr.mxu0 0.0
        %2070 = vmatpush1.msra.mxu0 0.0
        %2071 = vmatprep.subr.mxu0 0.0
        %2072 = vmatpush1.msra.mxu0 0.0
        %2073 = vmatprep.mubr.f32.mxu0 0.0
        %2074 = vmatmul.mubr.f32.gmra.mrb[0].mxu0 %v2007
        %v2075 = vpop.f32.mrb[0].mxu0
        %v2076 = vadd.f32 %v548, %v2075
        %v2077 = vpop.f32.mrb[0].mxu0
        %2078 = vdwg.mxu0
        %v2079 = vxor.u32 %v2076, 2147483648
        %v2080 = vmul.f32 %v2079, 1.442695
        %v2081 = vpow.pop %v2080
        %v2082 = vadd.f32 %v2081, 1.0
        %v2083 = vrcp.pop %v2082
        %v2084 = vmul.f32 1.0, %v2083
        %v2085 = vtanh.pop %v2076
        %v2086 = vmul.f32 %v2084, %v1620
        %2088 = vrot.lane.b32.xlu0 %v2085, 64
        %v2089 = vpop.permute.xlu0 %2088
        %v2091 = vmul.f32 %v2084, %v2089
        %2093 = vrot.lane.b32.xlu0 %v2091, 32
        %v2094 = vpop.permute.xlu0 %2093
        %v2096 = vadd.f32 %v2086, %v2094
        %v2097 = vtanh.pop %v2096
        %2099 = vrot.lane.b32.xlu0 %v2097, 64
        %v2100 = vpop.permute.xlu0 %2099
        %v2102 = vmul.f32 %v2084, %v2100
        %2104 = vrot.lane.b32.xlu0 %v2102, 32
        %v2105 = vpop.permute.xlu0 %2104
        %v2106 = vsel %vm661, %v2105, 0
        %2108 = vmatprep.subr.mxu0 0.0
        %2109 = vmatpush1.msra.mxu0 %v523
        %2110 = vmatprep.subr.mxu0 0.0
        %2111 = vmatpush1.msra.mxu0 %v524
        %2112 = vmatprep.subr.mxu0 0.0
        %2113 = vmatpush1.msra.mxu0 %v525
        %2114 = vmatprep.subr.mxu0 0.0
        %2115 = vmatpush1.msra.mxu0 %v526
        %2116 = vmatprep.subr.mxu0 0.0
        %2117 = vmatpush1.msra.mxu0 0.0
        %2118 = vmatprep.subr.mxu0 0.0
        %2119 = vmatpush1.msra.mxu0 0.0
        %2120 = vmatprep.subr.mxu0 0.0
        %2121 = vmatpush1.msra.mxu0 0.0
        %2122 = vmatprep.subr.mxu0 0.0
        %2123 = vmatpush1.msra.mxu0 0.0
        %2124 = vmatprep.subr.mxu0 0.0
        %2125 = vmatpush1.msra.mxu0 0.0
        %2126 = vmatprep.subr.mxu0 0.0
        %2127 = vmatpush1.msra.mxu0 0.0
        %2128 = vmatprep.subr.mxu0 0.0
        %2129 = vmatpush1.msra.mxu0 0.0
        %2130 = vmatprep.subr.mxu0 0.0
        %2131 = vmatpush1.msra.mxu0 0.0
        %2132 = vmatprep.subr.mxu0 0.0
        %2133 = vmatpush1.msra.mxu0 0.0
        %2134 = vmatprep.subr.mxu0 0.0
        %2135 = vmatpush1.msra.mxu0 0.0
        %2136 = vmatprep.subr.mxu0 0.0
        %2137 = vmatpush1.msra.mxu0 0.0
        %2138 = vmatprep.subr.mxu0 0.0
        %2139 = vmatpush1.msra.mxu0 0.0
        %2140 = vmatprep.subr.mxu0 0.0
        %2141 = vmatpush1.msra.mxu0 0.0
        %2142 = vmatprep.subr.mxu0 0.0
        %2143 = vmatpush1.msra.mxu0 0.0
        %2144 = vmatprep.subr.mxu0 0.0
        %2145 = vmatpush1.msra.mxu0 0.0
        %2146 = vmatprep.subr.mxu0 0.0
        %2147 = vmatpush1.msra.mxu0 0.0
        %2148 = vmatprep.subr.mxu0 0.0
        %2149 = vmatpush1.msra.mxu0 0.0
        %2150 = vmatprep.subr.mxu0 0.0
        %2151 = vmatpush1.msra.mxu0 0.0
        %2152 = vmatprep.subr.mxu0 0.0
        %2153 = vmatpush1.msra.mxu0 0.0
        %2154 = vmatprep.subr.mxu0 0.0
        %2155 = vmatpush1.msra.mxu0 0.0
        %2156 = vmatprep.subr.mxu0 0.0
        %2157 = vmatpush1.msra.mxu0 0.0
        %2158 = vmatprep.subr.mxu0 0.0
        %2159 = vmatpush1.msra.mxu0 0.0
        %2160 = vmatprep.subr.mxu0 0.0
        %2161 = vmatpush1.msra.mxu0 0.0
        %2162 = vmatprep.subr.mxu0 0.0
        %2163 = vmatpush1.msra.mxu0 0.0
        %2164 = vmatprep.subr.mxu0 0.0
        %2165 = vmatpush1.msra.mxu0 0.0
        %2166 = vmatprep.subr.mxu0 0.0
        %2167 = vmatpush1.msra.mxu0 0.0
        %2168 = vmatprep.subr.mxu0 0.0
        %2169 = vmatpush1.msra.mxu0 0.0
        %2170 = vmatprep.subr.mxu0 0.0
        %2171 = vmatpush1.msra.mxu0 0.0
        %2172 = vmatprep.mubr.f32.mxu0 0.0
        %2173 = vmatmul.mubr.f32.gmra.mrb[0].mxu0 %v2106
        %v2174 = vpop.f32.mrb[0].mxu0
        %v2175 = vadd.f32 %v656, %v2174
        %v2176 = vpop.f32.mrb[0].mxu0
        %2177 = vdwg.mxu0
        %vm2178 = vcmp.gt.f32.partialorder %v2175, 0.0
        %v2179 = vadd.f32 %v2175, 1.0
        %v2180 = vmul.f32 %v2175, 1.442695
        %v2181 = vpow.pop %v2180
        %v2182 = vsel %vm2178, %v2179, %v2181
        %v2183 = vxor.u32 %v2175, 2147483648
        %v2184 = vmul.f32 %v2183, 1.442695
        %v2185 = vpow.pop %v2184
        %v2186 = vadd.f32 %v2185, 1.0
        %v2187 = vrcp.pop %v2186
        %v2188 = vmul.f32 1.0, %v2187
        %v2189 = vsel %vm745, %v2182, 0.0
        %2190 = vadd.xlane.f32.xlu0 %v2189
        %v2191 = vpop.xlane.xlu0 %2190
        %v2192 = vrcp.pop %v2191
        %v2193 = vmul.f32 %v2182, %v2192
        %2195 = vrot.lane.b32.xlu0 %v2182, 95
        %v2196 = vpop.permute.xlu0 %2195
        %v2198 = vsel %vm745, %v2196, 0.0
        %2199 = vadd.xlane.f32.xlu0 %v2198
        %v2200 = vpop.xlane.xlu0 %2199
        %v2201 = vrcp.pop %v2200
        %v2202 = vmul.f32 %v2182, %v2201
        %v2205 = vunpack.c.l.s4 1966171168
        %v2206 = vunpack.c.0.s8 %v2205
        %v2207 = vlaneseq
        %v2208 = vshrl.u32 %v2207, 7
        %v2209 = vsub.s32 %v2206, %v2208
        %v2210 = vrot.slane %v2193, %v2209
        %v2211 = vcombine.high %v2210, %v2210
        %v2213 = vunpack.c.l.s4 1966171168
        %v2214 = vunpack.c.0.s8 %v2213
        %v2215 = vlaneseq
        %v2216 = vshrl.u32 %v2215, 7
        %v2217 = vsub.s32 %v2214, %v2216
        %v2218 = vrot.slane %v2210, %v2217
        %v2220 = vunpack.c.l.s4 1966171168
        %v2221 = vunpack.c.0.s8 %v2220
        %v2222 = vlaneseq
        %v2223 = vshrl.u32 %v2222, 7
        %v2224 = vsub.s32 %v2221, %v2223
        %v2225 = vrot.slane %v2211, %v2224
        %v2226 = vlaneseq
        %v2227 = vshrl.u32 %v2226, 7
        %v2228 = vsub.s32 0, %v2227
        %v2229 = vrot.slane %v2218, %v2228
        %v2230 = vlaneseq
        %v2231 = vshrl.u32 %v2230, 7
        %v2232 = vsub.s32 0, %v2231
        %v2233 = vrot.slane %v2225, %v2232
        %v2236 = vmul.f32 %v1835, %v2229
        %v2237 = vmul.f32 %v1836, %v2229
        %v2238 = vmul.f32 %v1837, %v2233
        %v2239 = vmul.f32 %v1838, %v2233
        %v2240 = vsel %vm797, %v2236, 0.0
        %2241 = vadd.xlane.f32.xlu0 %v2240
        %v2242 = vpop.xlane.xlu0 %2241
        %v2243 = vsel %vm797, %v2237, 0.0
        %2244 = vadd.xlane.f32.xlu0 %v2243
        %v2245 = vpop.xlane.xlu0 %2244
        %v2246 = vsel %vm797, %v2238, 0.0
        %2247 = vadd.xlane.f32.xlu0 %v2246
        %v2248 = vpop.xlane.xlu0 %2247
        %v2249 = vsel %vm797, %v2239, 0.0
        %2250 = vadd.xlane.f32.xlu0 %v2249
        %v2251 = vpop.xlane.xlu0 %2250
        %v2256 = vlaneseq
        %v2257 = vshrl.u32 %v2256, 7
        %v2258 = vsub.s32 %v816, %v2257
        %v2259 = vrot.slane %v2242, %v2258
        %v2260 = vlaneseq
        %v2261 = vshrl.u32 %v2260, 7
        %v2262 = vsub.s32 %v821, %v2261
        %v2263 = vrot.slane %v2245, %v2262
        %v2264 = vsel %vm826, %v2263, %v2259
        %v2265 = vlaneseq
        %v2266 = vshrl.u32 %v2265, 7
        %v2267 = vsub.s32 %v816, %v2266
        %v2268 = vrot.slane %v2248, %v2267
        %v2269 = vlaneseq
        %v2270 = vshrl.u32 %v2269, 7
        %v2271 = vsub.s32 %v821, %v2270
        %v2272 = vrot.slane %v2251, %v2271
        %v2273 = vsel %vm826, %v2272, %v2268
        %v2274 = vsel %vm837, %v2273, %v2264
        %v2276 = vsub.f32 %v2175, %v2274
        %2278 = vset.pattern.permute.xlu0 32
        %2279 = vperm.xlu0 %2278, %v2188
        %v2280 = vpop.permute.xlu0 %2279
        %v2282 = vmul.f32 %v2280, %v2276
        %v2283 = vlaneseq
        %v2284 = vshrl.u32 %v2283, 7
        %v2285 = vsub.s32 0, %v2284
        %v2286 = vrot.slane %v2282, %v2285
        %s2288 = sor.u32 256, 16
        %2289 = vbcast.lane.b32.xlu0 %v2286, %s2288
        %v2290 = vpop.permute.xlu0 %2289
        %s2292 = sor.u32 256, 24
        %2293 = vbcast.lane.b32.xlu0 %v2286, %s2292
        %v2294 = vpop.permute.xlu0 %2293
        %v2295 = vlaneseq
        %v2296 = vshrl.u32 %v2295, 7
        %v2297 = vsub.s32 1, %v2296
        %v2298 = vrot.slane %v2282, %v2297
        %s2300 = sor.u32 256, 16
        %2301 = vbcast.lane.b32.xlu0 %v2298, %s2300
        %v2302 = vpop.permute.xlu0 %2301
        %s2304 = sor.u32 256, 24
        %2305 = vbcast.lane.b32.xlu0 %v2298, %s2304
        %v2306 = vpop.permute.xlu0 %2305
        %v2307 = vmul.f32 %v2290, %v2229
        %v2308 = vmul.f32 %v2294, %v2229
        %v2309 = vmul.f32 %v2302, %v2233
        %v2310 = vmul.f32 %v2306, %v2233
        %v2311 = vadd.f32 %v1835, %v2307
        %v2312 = vadd.f32 %v1836, %v2308
        %v2313 = vadd.f32 %v1837, %v2309
        %v2314 = vadd.f32 %v1838, %v2310
        %2315 = vset.pattern.permute.xlu0 49
        %2316 = vperm.xlu0 %2315, %v2188
        %v2317 = vpop.permute.xlu0 %2316
        %v2319 = vmul.f32 %v2317, %v2202
        %v2322 = vunpack.c.l.s4 1966171168
        %v2323 = vunpack.c.0.s8 %v2322
        %v2324 = vlaneseq
        %v2325 = vshrl.u32 %v2324, 7
        %v2326 = vsub.s32 %v2323, %v2325
        %v2327 = vrot.slane %v2319, %v2326
        %v2328 = vcombine.high %v2327, %v2327
        %v2330 = vunpack.c.l.s4 1966171168
        %v2331 = vunpack.c.0.s8 %v2330
        %v2332 = vlaneseq
        %v2333 = vshrl.u32 %v2332, 7
        %v2334 = vsub.s32 %v2331, %v2333
        %v2335 = vrot.slane %v2327, %v2334
        %v2337 = vunpack.c.l.s4 1966171168
        %v2338 = vunpack.c.0.s8 %v2337
        %v2339 = vlaneseq
        %v2340 = vshrl.u32 %v2339, 7
        %v2341 = vsub.s32 %v2338, %v2340
        %v2342 = vrot.slane %v2328, %v2341
        %v2343 = vlaneseq
        %v2344 = vshrl.u32 %v2343, 7
        %v2345 = vsub.s32 0, %v2344
        %v2346 = vrot.slane %v2335, %v2345
        %v2347 = vlaneseq
        %v2348 = vshrl.u32 %v2347, 7
        %v2349 = vsub.s32 0, %v2348
        %v2350 = vrot.slane %v2342, %v2349
        %2351 = vrot.lane.b32.xlu0 %v2346, 95
        %v2352 = vpop.permute.xlu0 %2351
        %2353 = vrot.lane.b32.xlu0 %v2350, 95
        %v2354 = vpop.permute.xlu0 %2353
        %v2357 = vmul.f32 %v2311, %v2352
        %v2358 = vmul.f32 %v2312, %v2352
        %v2359 = vmul.f32 %v2313, %v2354
        %v2360 = vmul.f32 %v2314, %v2354
        %v2361 = vsel %vm797, %v2357, 0.0
        %2362 = vadd.xlane.f32.xlu0 %v2361
        %v2363 = vpop.xlane.xlu0 %2362
        %v2364 = vsel %vm797, %v2358, 0.0
        %2365 = vadd.xlane.f32.xlu0 %v2364
        %v2366 = vpop.xlane.xlu0 %2365
        %v2367 = vsel %vm797, %v2359, 0.0
        %2368 = vadd.xlane.f32.xlu0 %v2367
        %v2369 = vpop.xlane.xlu0 %2368
        %v2370 = vsel %vm797, %v2360, 0.0
        %2371 = vadd.xlane.f32.xlu0 %v2370
        %v2372 = vpop.xlane.xlu0 %2371
        %v2377 = vlaneseq
        %v2378 = vshrl.u32 %v2377, 7
        %v2379 = vsub.s32 %v815, %v2378
        %v2380 = vrot.slane %v2363, %v2379
        %v2381 = vlaneseq
        %v2382 = vshrl.u32 %v2381, 7
        %v2383 = vsub.s32 %v951, %v2382
        %v2384 = vrot.slane %v2366, %v2383
        %v2385 = vsel %vm956, %v2384, %v2380
        %v2386 = vlaneseq
        %v2387 = vshrl.u32 %v2386, 7
        %v2388 = vsub.s32 %v815, %v2387
        %v2389 = vrot.slane %v2369, %v2388
        %v2390 = vlaneseq
        %v2391 = vshrl.u32 %v2390, 7
        %v2392 = vsub.s32 %v951, %v2391
        %v2393 = vrot.slane %v2372, %v2392
        %v2394 = vsel %vm956, %v2393, %v2389
        %v2395 = vsel %vm837, %v2394, %v2385
        %v2396 = vsel %vm797, %v2395, 0
        %2398 = vmatprep.subr.mxu0 0.0
        %2399 = vmatpush1.msra.mxu0 %v528
        %2400 = vmatprep.subr.mxu0 0.0
        %2401 = vmatpush1.msra.mxu0 %v529
        %2402 = vmatprep.subr.mxu0 0.0
        %2403 = vmatpush1.msra.mxu0 0.0
        %2404 = vmatprep.subr.mxu0 0.0
        %2405 = vmatpush1.msra.mxu0 0.0
        %2406 = vmatprep.subr.mxu0 0.0
        %2407 = vmatpush1.msra.mxu0 0.0
        %2408 = vmatprep.subr.mxu0 0.0
        %2409 = vmatpush1.msra.mxu0 0.0
        %2410 = vmatprep.subr.mxu0 0.0
        %2411 = vmatpush1.msra.mxu0 0.0
        %2412 = vmatprep.subr.mxu0 0.0
        %2413 = vmatpush1.msra.mxu0 0.0
        %2414 = vmatprep.subr.mxu0 0.0
        %2415 = vmatpush1.msra.mxu0 0.0
        %2416 = vmatprep.subr.mxu0 0.0
        %2417 = vmatpush1.msra.mxu0 0.0
        %2418 = vmatprep.subr.mxu0 0.0
        %2419 = vmatpush1.msra.mxu0 0.0
        %2420 = vmatprep.subr.mxu0 0.0
        %2421 = vmatpush1.msra.mxu0 0.0
        %2422 = vmatprep.subr.mxu0 0.0
        %2423 = vmatpush1.msra.mxu0 0.0
        %2424 = vmatprep.subr.mxu0 0.0
        %2425 = vmatpush1.msra.mxu0 0.0
        %2426 = vmatprep.subr.mxu0 0.0
        %2427 = vmatpush1.msra.mxu0 0.0
        %2428 = vmatprep.subr.mxu0 0.0
        %2429 = vmatpush1.msra.mxu0 0.0
        %2430 = vmatprep.subr.mxu0 0.0
        %2431 = vmatpush1.msra.mxu0 0.0
        %2432 = vmatprep.subr.mxu0 0.0
        %2433 = vmatpush1.msra.mxu0 0.0
        %2434 = vmatprep.subr.mxu0 0.0
        %2435 = vmatpush1.msra.mxu0 0.0
        %2436 = vmatprep.subr.mxu0 0.0
        %2437 = vmatpush1.msra.mxu0 0.0
        %2438 = vmatprep.subr.mxu0 0.0
        %2439 = vmatpush1.msra.mxu0 0.0
        %2440 = vmatprep.subr.mxu0 0.0
        %2441 = vmatpush1.msra.mxu0 0.0
        %2442 = vmatprep.subr.mxu0 0.0
        %2443 = vmatpush1.msra.mxu0 0.0
        %2444 = vmatprep.subr.mxu0 0.0
        %2445 = vmatpush1.msra.mxu0 0.0
        %2446 = vmatprep.subr.mxu0 0.0
        %2447 = vmatpush1.msra.mxu0 0.0
        %2448 = vmatprep.subr.mxu0 0.0
        %2449 = vmatpush1.msra.mxu0 0.0
        %2450 = vmatprep.subr.mxu0 0.0
        %2451 = vmatpush1.msra.mxu0 0.0
        %2452 = vmatprep.subr.mxu0 0.0
        %2453 = vmatpush1.msra.mxu0 0.0
        %2454 = vmatprep.subr.mxu0 0.0
        %2455 = vmatpush1.msra.mxu0 0.0
        %2456 = vmatprep.subr.mxu0 0.0
        %2457 = vmatpush1.msra.mxu0 0.0
        %2458 = vmatprep.subr.mxu0 0.0
        %2459 = vmatpush1.msra.mxu0 0.0
        %2460 = vmatprep.subr.mxu0 0.0
        %2461 = vmatpush1.msra.mxu0 0.0
        %2462 = vmatprep.mubr.f32.mxu0 0.0
        %2463 = vmatmul.mubr.f32.gmra.mrb[0].mxu0 %v2396
        %v2464 = vpop.f32.mrb[0].mxu0
        %v2465 = vadd.f32 %v941, %v2464
        %v2466 = vpop.f32.mrb[0].mxu0
        %2467 = vdwg.mxu0
        %2470 = vrot.lane.b32.xlu0 %v2465, 32
        %v2471 = vpop.permute.xlu0 %2470
        %v2473 = vsel %vm661, %v2105, %v2471
        %s2474 = scalar_lea.vmem %s490, 6 [#allocation10]
        %2475 = vst.msk [vmem:[%s2474] sm:$0x3] %vm1046, %v2473
        %vm2476 = vcmask 254976
        %2477 = vst.msk [vmem:[#allocation11] sm:$0x3] %vm2476, %v2105
        %2479 = vrot.lane.b32.xlu0 %v2096, 96
        %v2480 = vpop.permute.xlu0 %2479
        %2482 = vst.msk [vmem:[#allocation13] sm:$0x3] %vm2476, %v2480
        %2483 = vst.msk [vmem:[#allocation14] sm:$0xff] %vm797, %v2311
        %2484 = vst.msk [vmem:[#allocation14 + $0x8] sm:$0xff] %vm797, %v2312
        %2485 = vst.msk [vmem:[#allocation14 + $0x10] sm:$0xff] %vm797, %v2313
        %2486 = vst.msk [vmem:[#allocation14 + $0x18] sm:$0xff] %vm797, %v2314
        %s2487 = sand.u32 %s258, 1
        %s2488 = scalar_lea.sflag [#allocation4], %s2487
        %s2489 = sand.u32 %s258, 1
        %s2490 = smul.addr %s2489, 8
        %s2491 = scalar_lea.vmem [#allocation10], %s2490
        // Predicated region
        $region81: #{fwm_rnn_forward.1} parent=59 // pred_check
          %p2492 = pneg %p268
        $region82: #{fwm_rnn_forward.1} parent=59 // pred_check_branch
          %2494 = sbr.rel (%p2492) target = $region84
        $region83: #{fwm_rnn_forward.1} parent=59 // pred_region
          %s2495 = smul.u32 4, %s35
          %s2497 = ssub.s32 128, 128
          %2498 = vsyncadd %s2488, %s2497
          %s2499 = smul.addr %s2495, 32
          %s2500 = scalar_lea.hbm %s10, %s2499
          %s2501 = sshll.u32 %s2491, 4
          %s2502 = int_to_ptr.vmem [resolvable:$true] %s2501
          %2507 = dma.vmem_to_hbm [thread:$0]  %s2502, 128, %s2500, %s2488, 32, 32, 2
        $region84: #{fwm_rnn_forward.1} parent=59 // pred_fallthru
          _
        // Predicated region
        $region85: #{fwm_rnn_forward.1} parent=59 // pred_check
          %p2508 = pneg %p289
        $region86: #{fwm_rnn_forward.1} parent=59 // pred_check_branch
          %2510 = sbr.rel (%p2508) target = $region88
        $region87: #{fwm_rnn_forward.1} parent=59 // pred_region
          %s2512 = ssub.s32 32, 32
          %2513 = vsyncadd [#allocation12], %s2512
          %s2515 = sshll.u32 [#allocation11], 4
          %s2516 = int_to_ptr.vmem [resolvable:$true] %s2515
          %2518 = dma.vmem_to_hbm [thread:$0]  %s2516, 32, %s11, [#allocation12]
        $region88: #{fwm_rnn_forward.1} parent=59 // pred_fallthru
          _
        // Predicated region
        $region89: #{fwm_rnn_forward.1} parent=59 // pred_check
          %p2519 = pneg %p310
        $region90: #{fwm_rnn_forward.1} parent=59 // pred_check_branch
          %2521 = sbr.rel (%p2519) target = $region92
        $region91: #{fwm_rnn_forward.1} parent=59 // pred_region
          %s2523 = ssub.s32 32, 32
          %2524 = vsyncadd [#allocation12], %s2523
          %s2526 = sshll.u32 [#allocation13], 4
          %s2527 = int_to_ptr.vmem [resolvable:$true] %s2526
          %2529 = dma.vmem_to_hbm [thread:$0]  %s2527, 32, %s12, [#allocation12]
        $region92: #{fwm_rnn_forward.1} parent=59 // pred_fallthru
          _
        // Predicated region
        $region93: #{fwm_rnn_forward.1} parent=59 // pred_check
          %p2530 = pneg %p331
        $region94: #{fwm_rnn_forward.1} parent=59 // pred_check_branch
          %2532 = sbr.rel (%p2530) target = $region96
        $region95: #{fwm_rnn_forward.1} parent=59 // pred_region
          %s2534 = ssub.s32 512, 512
          %2535 = vsyncadd [#allocation15], %s2534
          %s2536 = sshll.u32 [#allocation14], 4
          %s2537 = int_to_ptr.vmem [resolvable:$true] %s2536
          %2542 = dma.vmem_to_hbm [thread:$0]  %s2537, 512, %s13, [#allocation15], 128, 128, 8
        $region96: #{fwm_rnn_forward.1} parent=59 // pred_fallthru
          _
        // Predicated region
        $region97: #{fwm_rnn_forward.1} parent=59 // pred_check
          %p2543 = pneg %p289
        $region98: #{fwm_rnn_forward.1} parent=59 // pred_check_branch
          %2545 = sbr.rel (%p2543) target = $region100
        $region99: #{fwm_rnn_forward.1} parent=59 // pred_region
          %2546 = dma.done [#allocation12], 32
        $region100: #{fwm_rnn_forward.1} parent=59 // pred_fallthru
          _
        // Predicated region
        $region101: #{fwm_rnn_forward.1} parent=59 // pred_check
          %p2547 = pneg %p310
        $region102: #{fwm_rnn_forward.1} parent=59 // pred_check_branch
          %2549 = sbr.rel (%p2547) target = $region104
        $region103: #{fwm_rnn_forward.1} parent=59 // pred_region
          %2550 = dma.done [#allocation12], 32
        $region104: #{fwm_rnn_forward.1} parent=59 // pred_fallthru
          _
        // Predicated region
        $region105: #{fwm_rnn_forward.1} parent=59 // pred_check
          %p2551 = pneg %p331
        $region106: #{fwm_rnn_forward.1} parent=59 // pred_check_branch
          %2553 = sbr.rel (%p2551) target = $region108
        $region107: #{fwm_rnn_forward.1} parent=59 // pred_region
          %2554 = dma.done [#allocation15], 512
        $region108: #{fwm_rnn_forward.1} parent=59 // pred_fallthru
          _
      $region60: #{fwm_rnn_forward.1} parent=5 // pred_fallthru
        _
      %p2555 = scmp.le.s32.totalorder 2, %s30
      // Predicated region
      $region109: #{fwm_rnn_forward.1} parent=5 // pred_check
        %p2556 = pneg %p2555
      $region110: #{fwm_rnn_forward.1} parent=5 // pred_check_branch
        %2558 = sbr.rel (%p2556) target = $region112
      $region111: #{fwm_rnn_forward.1} parent=5 // pred_region
        %s2559 = ssub.s32 %s30, 2
        // Predicated region
        $region113: #{fwm_rnn_forward.1} parent=111 // pred_check
          %p2560 = pneg %p274
        $region114: #{fwm_rnn_forward.1} parent=111 // pred_check_branch
          %2562 = sbr.rel (%p2560) target = $region116
        $region115: #{fwm_rnn_forward.1} parent=111 // pred_region
          %s2563 = sand.u32 %s259, 1
          %s2564 = scalar_lea.sflag [#allocation4], %s2563
          %s2565 = sand.u32 %s259, 1
          %s2566 = smul.addr %s2565, 8
          %s2567 = scalar_lea.vmem [#allocation10], %s2566
          %2568 = dma.done %s2564, 128
        $region116: #{fwm_rnn_forward.1} parent=111 // pred_fallthru
          _
      $region112: #{fwm_rnn_forward.1} parent=5 // pred_fallthru
        _
    $region6: #{fwm_rnn_forward.1} parent=1 // loop_footer
      %s34 = sadd.s32 1, %s30
    $region7: #{fwm_rnn_forward.1} parent=1 // loop_footer_branch
      %29 = sbr.rel target = $region3
    $region8: #{fwm_rnn_forward.1} parent=1 // loop_exit
      _
    %2569 = vsyncpa [#allocation3], 1
    %s2570 = scalar_lea.sflag [#allocation3], 1
    %2571 = vsyncpa %s2570, 1
    %2572 = vsyncpa [#allocation6], 1
    %2573 = vsyncpa [#allocation9], 1
    %2574 = vsyncpa [#allocation4], 1
    %s2575 = scalar_lea.sflag [#allocation4], 1
    %2576 = vsyncpa %s2575, 1
    %2577 = vsyncpa [#allocation12], 1
    %2578 = vsyncpa [#allocation15], 1

</llo_original>
